<compile_context>
chip_gen: v7x
topology: tpu7x:2x2x1
jax: 0.10.0
libtpu: 0.0.40
codegen_flags: <defaults>
</compile_context>

<pallas_src>
import jax
import jax.numpy as jnp
import numpy as np
from jax.experimental import pallas as pl
from jax.experimental.pallas import tpu as pltpu


def _round_up(x, m):
    return (x + m - 1) // m * m


def _vmem_spec(shape):
    nd = len(shape)
    return pl.BlockSpec(shape, lambda *_: (0,) * nd)


# ------------------------------ fused kernel -------------------------------

def _make_fused_kernel(B, L, K, hidden_size, output_size, hidden_layers):
    """Builds a kernel computing the full ConvModel forward in one invocation.

    Kernel args (in order):
      xpad_ref : (B, L + K - 1, 1)       'same'-padded input, channels-last
      [w_i, b_i] for each conv layer i   w0: (K, 1, H); others: (K, Cin, Cout)
      out_ref  : (B, output_size)
      hpad_ref : VMEM scratch holding the (zero-padded) inter-layer activation
      ytmp_ref : VMEM scratch used to stride-2-compact the MaxPool1d(2)
    """
    pad = K // 2
    off = _round_up(pad, 8)              # sublane-aligned start of valid data
    H = hidden_size
    n_conv = hidden_layers + 2

    # per-conv-layer (input_length, cin, cout)
    cfg = [(L, 1, H)]
    Li = L
    for _ in range(hidden_layers):
        Li //= 2
        cfg.append((Li, H, H))
    Li //= 2
    cfg.append((Li, H, output_size))

    def kernel(*args):
        xpad_ref = args[0]
        wb = args[1:1 + 2 * n_conv]
        w_refs, b_refs = wb[0::2], wb[1::2]
        out_ref = args[1 + 2 * n_conv]
        hpad_ref = args[2 + 2 * n_conv]
        ytmp_ref = args[3 + 2 * n_conv]

        def pool_and_stage(y, n_rows, lh):
            # y: (n_rows, H) post-ReLU conv output, batch folded along rows.
            # MaxPool1d(2) via one staging store + two stride-2 reads, then
            # stage the pooled activation into the zeroed hpad scratch so the
            # next layer sees zero 'same' padding.  All VMEM-resident.
            ytmp_ref[0:n_rows, :] = y
            even = ytmp_ref[pl.ds(0, n_rows // 2, 2), :]
            odd = ytmp_ref[pl.ds(1, n_rows // 2, 2), :]
            pooled = jnp.maximum(even, odd)                 # (n_rows // 2, H)
            hpad_ref[...] = jnp.zeros(hpad_ref.shape, jnp.float32)
            for bi in range(B):
                hpad_ref[bi, off:off + lh, :] = pooled[bi * lh:(bi + 1) * lh, :]

        # ---- layer 0: Conv1d(1, H, 'same') + bias + ReLU + MaxPool(2) ----
        L0 = cfg[0][0]
        accs = []
        for bi in range(B):                 # B is tiny & static -> unrolled
            acc = jnp.zeros((L0, H), jnp.float32)
            for k in range(K):
                # (L0, 1) * (1, H) broadcast FMA on the VPU (Cin == 1)
                acc = acc + xpad_ref[bi, k:k + L0, :] * w_refs[0][k]
            accs.append(acc)
        y = jnp.concatenate(accs, axis=0)                   # (B*L0, H)
        y = jnp.maximum(y + b_refs[0][...], 0.0)
        pool_and_stage(y, B * L0, L0 // 2)

        # ---- Conv1d(H, Cout, 'same') from the staged, zero-padded scratch --
        def conv_from_hpad(layer_idx, li, cout):
            acc = jnp.zeros((B * li, cout), jnp.float32)
            for k in range(K):
                s = off - pad + k
                # fold batch into rows -> one MXU matmul per tap
                xk = jnp.concatenate(
                    [hpad_ref[bi, s:s + li, :] for bi in range(B)], axis=0)
                acc = acc + jnp.dot(xk, w_refs[layer_idx][k],
                                    preferred_element_type=jnp.float32)
            return acc + b_refs[layer_idx][...]

        # ---- hidden layers: conv + ReLU + MaxPool(2) ----------------------
        for idx in range(1, 1 + hidden_layers):
            Lh, _, cout = cfg[idx]
            y = jnp.maximum(conv_from_hpad(idx, Lh, cout), 0.0)
            pool_and_stage(y, B * Lh, Lh // 2)

        # ---- final layer: conv + AdaptiveAvgPool1d(1) + Flatten -----------
        Lf, _, cf = cfg[-1]
        y = conv_from_hpad(n_conv - 1, Lf, cf)              # (B*Lf, OUT)
        means = [jnp.mean(y[bi * Lf:(bi + 1) * Lf, :], axis=0, keepdims=True)
                 for bi in range(B)]
        out_ref[...] = jnp.concatenate(means, axis=0)       # one full store

    return kernel


# ------------------------------ JAX wrapper --------------------------------

def conv_model_forward(x, params):
    """x: (B, L) or (B, 1, L).  Returns (B, output_size) = ConvModel.forward(x)."""
    if x.ndim == 3:
        x = x[:, 0, :]                                      # NCL -> (B, L)
    B, L = x.shape
    n_conv = len(params)
    hidden_layers = n_conv - 2
    H = params[0][0].shape[0]
    OUT = params[-1][0].shape[0]
    K = params[0][0].shape[2]
    pad = K // 2
    assert L % (2 ** (hidden_layers + 1)) == 0, \
        "L must be divisible by 2**(hidden_layers+1) for exact pooling"

    xpad = jnp.pad(x, ((0, 0), (pad, pad)))[:, :, None]     # (B, L+K-1, 1)

    inputs = [xpad]
    in_specs = [_vmem_spec(xpad.shape)]
    for (W, b) in params:
        w_kio = jnp.transpose(W, (2, 1, 0))                 # (Cout,Cin,K)->(K,Cin,Cout)
        b_1o = b[None, :]
        inputs += [w_kio, b_1o]
        in_specs += [_vmem_spec(w_kio.shape), _vmem_spec(b_1o.shape)]

    off = _round_up(pad, 8)
    hp_rows = _round_up(off + L // 2 + pad, 8)              # covers largest staged layer

    kernel = _make_fused_kernel(B, L, K, H, OUT, hidden_layers)
    return pl.pallas_call(
        kernel,
        out_shape=jax.ShapeDtypeStruct((B, OUT), jnp.float32),
        in_specs=in_specs,
        out_specs=_vmem_spec((B, OUT)),
        scratch_shapes=[
            pltpu.VMEM((B, hp_rows, H), jnp.float32),       # zero-padded activations
            pltpu.VMEM((B * L, H), jnp.float32),            # pooling staging buffer
        ],
    )(*inputs)


def init_params(key, output_size, hidden_layers, hidden_size, kernel_size):
    """PyTorch-shaped conv params: list of (W: (Cout, Cin, K), b: (Cout,))."""
    params = []
    cin = 1
    couts = [hidden_size] * (hidden_layers + 1) + [output_size]
    keys = jax.random.split(key, 2 * len(couts))
    for i, cout in enumerate(couts):
        bound = 1.0 / np.sqrt(cin * kernel_size)            # PyTorch Conv1d default
        W = jax.random.uniform(keys[2 * i], (cout, cin, kernel_size),
                               minval=-bound, maxval=bound, dtype=jnp.float32)
        b = jax.random.uniform(keys[2 * i + 1], (cout,),
                               minval=-bound, maxval=bound, dtype=jnp.float32)
        params.append((W, b))
        cin = cout
    return params


# --------------------------- pure-JAX reference ----------------------------

def _ref_forward(x, params):
    h = x[:, None, :]                                       # (B, 1, L) NCL
    n = len(params)
    for i, (W, b) in enumerate(params):
        K = W.shape[2]
        h = jax.lax.conv_general_dilated(
            h, W, window_strides=(1,), padding=[(K // 2, K // 2)],
            dimension_numbers=('NCH', 'OIH', 'NCH')) + b[None, :, None]
        if i < n - 1:
            h = jnp.maximum(h, 0.0)
            B, C, L = h.shape
            h = h.reshape(B, C, L // 2, 2).max(axis=-1)     # MaxPool1d(2)
    return h.mean(axis=-1)                                  # AdaptiveAvgPool1d(1)+Flatten


# ---------------------------------- main -----------------------------------

if __name__ == "__main__":
    B, L = 2, 64
    OUTPUT_SIZE, HIDDEN_LAYERS, HIDDEN_SIZE, KERNEL_SIZE = 8, 1, 32, 11

    key = jax.random.PRNGKey(0)
    kx, kp = jax.random.split(key)
    x = jax.random.normal(kx, (B, L), dtype=jnp.float32)
    params = init_params(kp, OUTPUT_SIZE, HIDDEN_LAYERS, HIDDEN_SIZE, KERNEL_SIZE)

    fwd = jax.jit(conv_model_forward)
    out = jax.block_until_ready(fwd(x, params))
    ref = jax.block_until_ready(_ref_forward(x, params))

    assert out.shape == (B, OUTPUT_SIZE), out.shape
    np.testing.assert_allclose(np.asarray(out), np.asarray(ref), rtol=1e-4, atol=1e-4)
    print("KERNEL_OK")
</pallas_src>

<mosaic_0001>
module attributes {stable_mosaic.version = 11 : i64} {
  func.func @kernel(%arg0: memref<2x74x1xf32, #tpu.memory_space<vmem>>, %arg1: memref<11x1x32xf32, #tpu.memory_space<vmem>>, %arg2: memref<1x32xf32, #tpu.memory_space<vmem>>, %arg3: memref<11x32x32xf32, #tpu.memory_space<vmem>>, %arg4: memref<1x32xf32, #tpu.memory_space<vmem>>, %arg5: memref<11x32x8xf32, #tpu.memory_space<vmem>>, %arg6: memref<1x8xf32, #tpu.memory_space<vmem>>, %arg7: memref<2x8xf32, #tpu.memory_space<vmem>>, %arg8: memref<2x48x32xf32, #tpu.memory_space<vmem>>, %arg9: memref<128x32xf32, #tpu.memory_space<vmem>>) attributes {dimension_semantics = [], scalar_prefetch = 0 : i64, scratch_operands = 2 : i64, tpu.core_type = #tpu.core_type<tc>} {
    %cst = arith.constant 0.000000e+00 : f32
    %0 = vector.broadcast %cst : f32 to vector<64x32xf32>
    %c0 = arith.constant 0 : index
    %c0_0 = arith.constant 0 : index
    %c0_1 = arith.constant 0 : index
    %1 = vector.load %arg0[%c0, %c0_0, %c0_1] : memref<2x74x1xf32, #tpu.memory_space<vmem>>, vector<1x64x1xf32>
    %2 = vector.shape_cast %1 : vector<1x64x1xf32> to vector<64x1xf32>
    %c0_2 = arith.constant 0 : index
    %c0_3 = arith.constant 0 : index
    %c0_4 = arith.constant 0 : index
    %3 = vector.load %arg1[%c0_2, %c0_3, %c0_4] : memref<11x1x32xf32, #tpu.memory_space<vmem>>, vector<1x1x32xf32>
    %4 = vector.shape_cast %3 : vector<1x1x32xf32> to vector<1x32xf32>
    %5 = vector.broadcast %2 : vector<64x1xf32> to vector<64x32xf32>
    %6 = vector.broadcast %4 : vector<1x32xf32> to vector<64x32xf32>
    %7 = arith.mulf %5, %6 : vector<64x32xf32>
    %8 = arith.addf %0, %7 : vector<64x32xf32>
    %c0_5 = arith.constant 0 : index
    %c1 = arith.constant 1 : index
    %c0_6 = arith.constant 0 : index
    %9 = vector.load %arg0[%c0_5, %c1, %c0_6] : memref<2x74x1xf32, #tpu.memory_space<vmem>>, vector<1x64x1xf32>
    %10 = vector.shape_cast %9 : vector<1x64x1xf32> to vector<64x1xf32>
    %c1_7 = arith.constant 1 : index
    %c0_8 = arith.constant 0 : index
    %c0_9 = arith.constant 0 : index
    %11 = vector.load %arg1[%c1_7, %c0_8, %c0_9] : memref<11x1x32xf32, #tpu.memory_space<vmem>>, vector<1x1x32xf32>
    %12 = vector.shape_cast %11 : vector<1x1x32xf32> to vector<1x32xf32>
    %13 = vector.broadcast %10 : vector<64x1xf32> to vector<64x32xf32>
    %14 = vector.broadcast %12 : vector<1x32xf32> to vector<64x32xf32>
    %15 = arith.mulf %13, %14 : vector<64x32xf32>
    %16 = arith.addf %8, %15 : vector<64x32xf32>
    %c0_10 = arith.constant 0 : index
    %c2 = arith.constant 2 : index
    %c0_11 = arith.constant 0 : index
    %17 = vector.load %arg0[%c0_10, %c2, %c0_11] : memref<2x74x1xf32, #tpu.memory_space<vmem>>, vector<1x64x1xf32>
    %18 = vector.shape_cast %17 : vector<1x64x1xf32> to vector<64x1xf32>
    %c2_12 = arith.constant 2 : index
    %c0_13 = arith.constant 0 : index
    %c0_14 = arith.constant 0 : index
    %19 = vector.load %arg1[%c2_12, %c0_13, %c0_14] : memref<11x1x32xf32, #tpu.memory_space<vmem>>, vector<1x1x32xf32>
    %20 = vector.shape_cast %19 : vector<1x1x32xf32> to vector<1x32xf32>
    %21 = vector.broadcast %18 : vector<64x1xf32> to vector<64x32xf32>
    %22 = vector.broadcast %20 : vector<1x32xf32> to vector<64x32xf32>
    %23 = arith.mulf %21, %22 : vector<64x32xf32>
    %24 = arith.addf %16, %23 : vector<64x32xf32>
    %c0_15 = arith.constant 0 : index
    %c3 = arith.constant 3 : index
    %c0_16 = arith.constant 0 : index
    %25 = vector.load %arg0[%c0_15, %c3, %c0_16] : memref<2x74x1xf32, #tpu.memory_space<vmem>>, vector<1x64x1xf32>
    %26 = vector.shape_cast %25 : vector<1x64x1xf32> to vector<64x1xf32>
    %c3_17 = arith.constant 3 : index
    %c0_18 = arith.constant 0 : index
    %c0_19 = arith.constant 0 : index
    %27 = vector.load %arg1[%c3_17, %c0_18, %c0_19] : memref<11x1x32xf32, #tpu.memory_space<vmem>>, vector<1x1x32xf32>
    %28 = vector.shape_cast %27 : vector<1x1x32xf32> to vector<1x32xf32>
    %29 = vector.broadcast %26 : vector<64x1xf32> to vector<64x32xf32>
    %30 = vector.broadcast %28 : vector<1x32xf32> to vector<64x32xf32>
    %31 = arith.mulf %29, %30 : vector<64x32xf32>
    %32 = arith.addf %24, %31 : vector<64x32xf32>
    %c0_20 = arith.constant 0 : index
    %c4 = arith.constant 4 : index
    %c0_21 = arith.constant 0 : index
    %33 = vector.load %arg0[%c0_20, %c4, %c0_21] : memref<2x74x1xf32, #tpu.memory_space<vmem>>, vector<1x64x1xf32>
    %34 = vector.shape_cast %33 : vector<1x64x1xf32> to vector<64x1xf32>
    %c4_22 = arith.constant 4 : index
    %c0_23 = arith.constant 0 : index
    %c0_24 = arith.constant 0 : index
    %35 = vector.load %arg1[%c4_22, %c0_23, %c0_24] : memref<11x1x32xf32, #tpu.memory_space<vmem>>, vector<1x1x32xf32>
    %36 = vector.shape_cast %35 : vector<1x1x32xf32> to vector<1x32xf32>
    %37 = vector.broadcast %34 : vector<64x1xf32> to vector<64x32xf32>
    %38 = vector.broadcast %36 : vector<1x32xf32> to vector<64x32xf32>
    %39 = arith.mulf %37, %38 : vector<64x32xf32>
    %40 = arith.addf %32, %39 : vector<64x32xf32>
    %c0_25 = arith.constant 0 : index
    %c5 = arith.constant 5 : index
    %c0_26 = arith.constant 0 : index
    %41 = vector.load %arg0[%c0_25, %c5, %c0_26] : memref<2x74x1xf32, #tpu.memory_space<vmem>>, vector<1x64x1xf32>
    %42 = vector.shape_cast %41 : vector<1x64x1xf32> to vector<64x1xf32>
    %c5_27 = arith.constant 5 : index
    %c0_28 = arith.constant 0 : index
    %c0_29 = arith.constant 0 : index
    %43 = vector.load %arg1[%c5_27, %c0_28, %c0_29] : memref<11x1x32xf32, #tpu.memory_space<vmem>>, vector<1x1x32xf32>
    %44 = vector.shape_cast %43 : vector<1x1x32xf32> to vector<1x32xf32>
    %45 = vector.broadcast %42 : vector<64x1xf32> to vector<64x32xf32>
    %46 = vector.broadcast %44 : vector<1x32xf32> to vector<64x32xf32>
    %47 = arith.mulf %45, %46 : vector<64x32xf32>
    %48 = arith.addf %40, %47 : vector<64x32xf32>
    %c0_30 = arith.constant 0 : index
    %c6 = arith.constant 6 : index
    %c0_31 = arith.constant 0 : index
    %49 = vector.load %arg0[%c0_30, %c6, %c0_31] : memref<2x74x1xf32, #tpu.memory_space<vmem>>, vector<1x64x1xf32>
    %50 = vector.shape_cast %49 : vector<1x64x1xf32> to vector<64x1xf32>
    %c6_32 = arith.constant 6 : index
    %c0_33 = arith.constant 0 : index
    %c0_34 = arith.constant 0 : index
    %51 = vector.load %arg1[%c6_32, %c0_33, %c0_34] : memref<11x1x32xf32, #tpu.memory_space<vmem>>, vector<1x1x32xf32>
    %52 = vector.shape_cast %51 : vector<1x1x32xf32> to vector<1x32xf32>
    %53 = vector.broadcast %50 : vector<64x1xf32> to vector<64x32xf32>
    %54 = vector.broadcast %52 : vector<1x32xf32> to vector<64x32xf32>
    %55 = arith.mulf %53, %54 : vector<64x32xf32>
    %56 = arith.addf %48, %55 : vector<64x32xf32>
    %c0_35 = arith.constant 0 : index
    %c7 = arith.constant 7 : index
    %c0_36 = arith.constant 0 : index
    %57 = vector.load %arg0[%c0_35, %c7, %c0_36] : memref<2x74x1xf32, #tpu.memory_space<vmem>>, vector<1x64x1xf32>
    %58 = vector.shape_cast %57 : vector<1x64x1xf32> to vector<64x1xf32>
    %c7_37 = arith.constant 7 : index
    %c0_38 = arith.constant 0 : index
    %c0_39 = arith.constant 0 : index
    %59 = vector.load %arg1[%c7_37, %c0_38, %c0_39] : memref<11x1x32xf32, #tpu.memory_space<vmem>>, vector<1x1x32xf32>
    %60 = vector.shape_cast %59 : vector<1x1x32xf32> to vector<1x32xf32>
    %61 = vector.broadcast %58 : vector<64x1xf32> to vector<64x32xf32>
    %62 = vector.broadcast %60 : vector<1x32xf32> to vector<64x32xf32>
    %63 = arith.mulf %61, %62 : vector<64x32xf32>
    %64 = arith.addf %56, %63 : vector<64x32xf32>
    %c0_40 = arith.constant 0 : index
    %c8 = arith.constant 8 : index
    %c0_41 = arith.constant 0 : index
    %65 = vector.load %arg0[%c0_40, %c8, %c0_41] : memref<2x74x1xf32, #tpu.memory_space<vmem>>, vector<1x64x1xf32>
    %66 = vector.shape_cast %65 : vector<1x64x1xf32> to vector<64x1xf32>
    %c8_42 = arith.constant 8 : index
    %c0_43 = arith.constant 0 : index
    %c0_44 = arith.constant 0 : index
    %67 = vector.load %arg1[%c8_42, %c0_43, %c0_44] : memref<11x1x32xf32, #tpu.memory_space<vmem>>, vector<1x1x32xf32>
    %68 = vector.shape_cast %67 : vector<1x1x32xf32> to vector<1x32xf32>
    %69 = vector.broadcast %66 : vector<64x1xf32> to vector<64x32xf32>
    %70 = vector.broadcast %68 : vector<1x32xf32> to vector<64x32xf32>
    %71 = arith.mulf %69, %70 : vector<64x32xf32>
    %72 = arith.addf %64, %71 : vector<64x32xf32>
    %c0_45 = arith.constant 0 : index
    %c9 = arith.constant 9 : index
    %c0_46 = arith.constant 0 : index
    %73 = vector.load %arg0[%c0_45, %c9, %c0_46] : memref<2x74x1xf32, #tpu.memory_space<vmem>>, vector<1x64x1xf32>
    %74 = vector.shape_cast %73 : vector<1x64x1xf32> to vector<64x1xf32>
    %c9_47 = arith.constant 9 : index
    %c0_48 = arith.constant 0 : index
    %c0_49 = arith.constant 0 : index
    %75 = vector.load %arg1[%c9_47, %c0_48, %c0_49] : memref<11x1x32xf32, #tpu.memory_space<vmem>>, vector<1x1x32xf32>
    %76 = vector.shape_cast %75 : vector<1x1x32xf32> to vector<1x32xf32>
    %77 = vector.broadcast %74 : vector<64x1xf32> to vector<64x32xf32>
    %78 = vector.broadcast %76 : vector<1x32xf32> to vector<64x32xf32>
    %79 = arith.mulf %77, %78 : vector<64x32xf32>
    %80 = arith.addf %72, %79 : vector<64x32xf32>
    %c0_50 = arith.constant 0 : index
    %c10 = arith.constant 10 : index
    %c0_51 = arith.constant 0 : index
    %81 = vector.load %arg0[%c0_50, %c10, %c0_51] : memref<2x74x1xf32, #tpu.memory_space<vmem>>, vector<1x64x1xf32>
    %82 = vector.shape_cast %81 : vector<1x64x1xf32> to vector<64x1xf32>
    %c10_52 = arith.constant 10 : index
    %c0_53 = arith.constant 0 : index
    %c0_54 = arith.constant 0 : index
    %83 = vector.load %arg1[%c10_52, %c0_53, %c0_54] : memref<11x1x32xf32, #tpu.memory_space<vmem>>, vector<1x1x32xf32>
    %84 = vector.shape_cast %83 : vector<1x1x32xf32> to vector<1x32xf32>
    %85 = vector.broadcast %82 : vector<64x1xf32> to vector<64x32xf32>
    %86 = vector.broadcast %84 : vector<1x32xf32> to vector<64x32xf32>
    %87 = arith.mulf %85, %86 : vector<64x32xf32>
    %88 = arith.addf %80, %87 : vector<64x32xf32>
    %cst_55 = arith.constant 0.000000e+00 : f32
    %89 = vector.broadcast %cst_55 : f32 to vector<64x32xf32>
    %c1_56 = arith.constant 1 : index
    %c0_57 = arith.constant 0 : index
    %c0_58 = arith.constant 0 : index
    %90 = vector.load %arg0[%c1_56, %c0_57, %c0_58] : memref<2x74x1xf32, #tpu.memory_space<vmem>>, vector<1x64x1xf32>
    %91 = vector.shape_cast %90 : vector<1x64x1xf32> to vector<64x1xf32>
    %c0_59 = arith.constant 0 : index
    %c0_60 = arith.constant 0 : index
    %c0_61 = arith.constant 0 : index
    %92 = vector.load %arg1[%c0_59, %c0_60, %c0_61] : memref<11x1x32xf32, #tpu.memory_space<vmem>>, vector<1x1x32xf32>
    %93 = vector.shape_cast %92 : vector<1x1x32xf32> to vector<1x32xf32>
    %94 = vector.broadcast %91 : vector<64x1xf32> to vector<64x32xf32>
    %95 = vector.broadcast %93 : vector<1x32xf32> to vector<64x32xf32>
    %96 = arith.mulf %94, %95 : vector<64x32xf32>
    %97 = arith.addf %89, %96 : vector<64x32xf32>
    %c1_62 = arith.constant 1 : index
    %c1_63 = arith.constant 1 : index
    %c0_64 = arith.constant 0 : index
    %98 = vector.load %arg0[%c1_62, %c1_63, %c0_64] : memref<2x74x1xf32, #tpu.memory_space<vmem>>, vector<1x64x1xf32>
    %99 = vector.shape_cast %98 : vector<1x64x1xf32> to vector<64x1xf32>
    %c1_65 = arith.constant 1 : index
    %c0_66 = arith.constant 0 : index
    %c0_67 = arith.constant 0 : index
    %100 = vector.load %arg1[%c1_65, %c0_66, %c0_67] : memref<11x1x32xf32, #tpu.memory_space<vmem>>, vector<1x1x32xf32>
    %101 = vector.shape_cast %100 : vector<1x1x32xf32> to vector<1x32xf32>
    %102 = vector.broadcast %99 : vector<64x1xf32> to vector<64x32xf32>
    %103 = vector.broadcast %101 : vector<1x32xf32> to vector<64x32xf32>
    %104 = arith.mulf %102, %103 : vector<64x32xf32>
    %105 = arith.addf %97, %104 : vector<64x32xf32>
    %c1_68 = arith.constant 1 : index
    %c2_69 = arith.constant 2 : index
    %c0_70 = arith.constant 0 : index
    %106 = vector.load %arg0[%c1_68, %c2_69, %c0_70] : memref<2x74x1xf32, #tpu.memory_space<vmem>>, vector<1x64x1xf32>
    %107 = vector.shape_cast %106 : vector<1x64x1xf32> to vector<64x1xf32>
    %c2_71 = arith.constant 2 : index
    %c0_72 = arith.constant 0 : index
    %c0_73 = arith.constant 0 : index
    %108 = vector.load %arg1[%c2_71, %c0_72, %c0_73] : memref<11x1x32xf32, #tpu.memory_space<vmem>>, vector<1x1x32xf32>
    %109 = vector.shape_cast %108 : vector<1x1x32xf32> to vector<1x32xf32>
    %110 = vector.broadcast %107 : vector<64x1xf32> to vector<64x32xf32>
    %111 = vector.broadcast %109 : vector<1x32xf32> to vector<64x32xf32>
    %112 = arith.mulf %110, %111 : vector<64x32xf32>
    %113 = arith.addf %105, %112 : vector<64x32xf32>
    %c1_74 = arith.constant 1 : index
    %c3_75 = arith.constant 3 : index
    %c0_76 = arith.constant 0 : index
    %114 = vector.load %arg0[%c1_74, %c3_75, %c0_76] : memref<2x74x1xf32, #tpu.memory_space<vmem>>, vector<1x64x1xf32>
    %115 = vector.shape_cast %114 : vector<1x64x1xf32> to vector<64x1xf32>
    %c3_77 = arith.constant 3 : index
    %c0_78 = arith.constant 0 : index
    %c0_79 = arith.constant 0 : index
    %116 = vector.load %arg1[%c3_77, %c0_78, %c0_79] : memref<11x1x32xf32, #tpu.memory_space<vmem>>, vector<1x1x32xf32>
    %117 = vector.shape_cast %116 : vector<1x1x32xf32> to vector<1x32xf32>
    %118 = vector.broadcast %115 : vector<64x1xf32> to vector<64x32xf32>
    %119 = vector.broadcast %117 : vector<1x32xf32> to vector<64x32xf32>
    %120 = arith.mulf %118, %119 : vector<64x32xf32>
    %121 = arith.addf %113, %120 : vector<64x32xf32>
    %c1_80 = arith.constant 1 : index
    %c4_81 = arith.constant 4 : index
    %c0_82 = arith.constant 0 : index
    %122 = vector.load %arg0[%c1_80, %c4_81, %c0_82] : memref<2x74x1xf32, #tpu.memory_space<vmem>>, vector<1x64x1xf32>
    %123 = vector.shape_cast %122 : vector<1x64x1xf32> to vector<64x1xf32>
    %c4_83 = arith.constant 4 : index
    %c0_84 = arith.constant 0 : index
    %c0_85 = arith.constant 0 : index
    %124 = vector.load %arg1[%c4_83, %c0_84, %c0_85] : memref<11x1x32xf32, #tpu.memory_space<vmem>>, vector<1x1x32xf32>
    %125 = vector.shape_cast %124 : vector<1x1x32xf32> to vector<1x32xf32>
    %126 = vector.broadcast %123 : vector<64x1xf32> to vector<64x32xf32>
    %127 = vector.broadcast %125 : vector<1x32xf32> to vector<64x32xf32>
    %128 = arith.mulf %126, %127 : vector<64x32xf32>
    %129 = arith.addf %121, %128 : vector<64x32xf32>
    %c1_86 = arith.constant 1 : index
    %c5_87 = arith.constant 5 : index
    %c0_88 = arith.constant 0 : index
    %130 = vector.load %arg0[%c1_86, %c5_87, %c0_88] : memref<2x74x1xf32, #tpu.memory_space<vmem>>, vector<1x64x1xf32>
    %131 = vector.shape_cast %130 : vector<1x64x1xf32> to vector<64x1xf32>
    %c5_89 = arith.constant 5 : index
    %c0_90 = arith.constant 0 : index
    %c0_91 = arith.constant 0 : index
    %132 = vector.load %arg1[%c5_89, %c0_90, %c0_91] : memref<11x1x32xf32, #tpu.memory_space<vmem>>, vector<1x1x32xf32>
    %133 = vector.shape_cast %132 : vector<1x1x32xf32> to vector<1x32xf32>
    %134 = vector.broadcast %131 : vector<64x1xf32> to vector<64x32xf32>
    %135 = vector.broadcast %133 : vector<1x32xf32> to vector<64x32xf32>
    %136 = arith.mulf %134, %135 : vector<64x32xf32>
    %137 = arith.addf %129, %136 : vector<64x32xf32>
    %c1_92 = arith.constant 1 : index
    %c6_93 = arith.constant 6 : index
    %c0_94 = arith.constant 0 : index
    %138 = vector.load %arg0[%c1_92, %c6_93, %c0_94] : memref<2x74x1xf32, #tpu.memory_space<vmem>>, vector<1x64x1xf32>
    %139 = vector.shape_cast %138 : vector<1x64x1xf32> to vector<64x1xf32>
    %c6_95 = arith.constant 6 : index
    %c0_96 = arith.constant 0 : index
    %c0_97 = arith.constant 0 : index
    %140 = vector.load %arg1[%c6_95, %c0_96, %c0_97] : memref<11x1x32xf32, #tpu.memory_space<vmem>>, vector<1x1x32xf32>
    %141 = vector.shape_cast %140 : vector<1x1x32xf32> to vector<1x32xf32>
    %142 = vector.broadcast %139 : vector<64x1xf32> to vector<64x32xf32>
    %143 = vector.broadcast %141 : vector<1x32xf32> to vector<64x32xf32>
    %144 = arith.mulf %142, %143 : vector<64x32xf32>
    %145 = arith.addf %137, %144 : vector<64x32xf32>
    %c1_98 = arith.constant 1 : index
    %c7_99 = arith.constant 7 : index
    %c0_100 = arith.constant 0 : index
    %146 = vector.load %arg0[%c1_98, %c7_99, %c0_100] : memref<2x74x1xf32, #tpu.memory_space<vmem>>, vector<1x64x1xf32>
    %147 = vector.shape_cast %146 : vector<1x64x1xf32> to vector<64x1xf32>
    %c7_101 = arith.constant 7 : index
    %c0_102 = arith.constant 0 : index
    %c0_103 = arith.constant 0 : index
    %148 = vector.load %arg1[%c7_101, %c0_102, %c0_103] : memref<11x1x32xf32, #tpu.memory_space<vmem>>, vector<1x1x32xf32>
    %149 = vector.shape_cast %148 : vector<1x1x32xf32> to vector<1x32xf32>
    %150 = vector.broadcast %147 : vector<64x1xf32> to vector<64x32xf32>
    %151 = vector.broadcast %149 : vector<1x32xf32> to vector<64x32xf32>
    %152 = arith.mulf %150, %151 : vector<64x32xf32>
    %153 = arith.addf %145, %152 : vector<64x32xf32>
    %c1_104 = arith.constant 1 : index
    %c8_105 = arith.constant 8 : index
    %c0_106 = arith.constant 0 : index
    %154 = vector.load %arg0[%c1_104, %c8_105, %c0_106] : memref<2x74x1xf32, #tpu.memory_space<vmem>>, vector<1x64x1xf32>
    %155 = vector.shape_cast %154 : vector<1x64x1xf32> to vector<64x1xf32>
    %c8_107 = arith.constant 8 : index
    %c0_108 = arith.constant 0 : index
    %c0_109 = arith.constant 0 : index
    %156 = vector.load %arg1[%c8_107, %c0_108, %c0_109] : memref<11x1x32xf32, #tpu.memory_space<vmem>>, vector<1x1x32xf32>
    %157 = vector.shape_cast %156 : vector<1x1x32xf32> to vector<1x32xf32>
    %158 = vector.broadcast %155 : vector<64x1xf32> to vector<64x32xf32>
    %159 = vector.broadcast %157 : vector<1x32xf32> to vector<64x32xf32>
    %160 = arith.mulf %158, %159 : vector<64x32xf32>
    %161 = arith.addf %153, %160 : vector<64x32xf32>
    %c1_110 = arith.constant 1 : index
    %c9_111 = arith.constant 9 : index
    %c0_112 = arith.constant 0 : index
    %162 = vector.load %arg0[%c1_110, %c9_111, %c0_112] : memref<2x74x1xf32, #tpu.memory_space<vmem>>, vector<1x64x1xf32>
    %163 = vector.shape_cast %162 : vector<1x64x1xf32> to vector<64x1xf32>
    %c9_113 = arith.constant 9 : index
    %c0_114 = arith.constant 0 : index
    %c0_115 = arith.constant 0 : index
    %164 = vector.load %arg1[%c9_113, %c0_114, %c0_115] : memref<11x1x32xf32, #tpu.memory_space<vmem>>, vector<1x1x32xf32>
    %165 = vector.shape_cast %164 : vector<1x1x32xf32> to vector<1x32xf32>
    %166 = vector.broadcast %163 : vector<64x1xf32> to vector<64x32xf32>
    %167 = vector.broadcast %165 : vector<1x32xf32> to vector<64x32xf32>
    %168 = arith.mulf %166, %167 : vector<64x32xf32>
    %169 = arith.addf %161, %168 : vector<64x32xf32>
    %c1_116 = arith.constant 1 : index
    %c10_117 = arith.constant 10 : index
    %c0_118 = arith.constant 0 : index
    %170 = vector.load %arg0[%c1_116, %c10_117, %c0_118] : memref<2x74x1xf32, #tpu.memory_space<vmem>>, vector<1x64x1xf32>
    %171 = vector.shape_cast %170 : vector<1x64x1xf32> to vector<64x1xf32>
    %c10_119 = arith.constant 10 : index
    %c0_120 = arith.constant 0 : index
    %c0_121 = arith.constant 0 : index
    %172 = vector.load %arg1[%c10_119, %c0_120, %c0_121] : memref<11x1x32xf32, #tpu.memory_space<vmem>>, vector<1x1x32xf32>
    %173 = vector.shape_cast %172 : vector<1x1x32xf32> to vector<1x32xf32>
    %174 = vector.broadcast %171 : vector<64x1xf32> to vector<64x32xf32>
    %175 = vector.broadcast %173 : vector<1x32xf32> to vector<64x32xf32>
    %176 = arith.mulf %174, %175 : vector<64x32xf32>
    %177 = arith.addf %169, %176 : vector<64x32xf32>
    %178 = tpu.concatenate %88, %177 in 0 : vector<64x32xf32>, vector<64x32xf32> -> vector<128x32xf32>
    %c0_122 = arith.constant 0 : index
    %c0_123 = arith.constant 0 : index
    %179 = vector.load %arg2[%c0_122, %c0_123] : memref<1x32xf32, #tpu.memory_space<vmem>>, vector<1x32xf32>
    %180 = vector.broadcast %179 : vector<1x32xf32> to vector<128x32xf32>
    %181 = arith.addf %178, %180 : vector<128x32xf32>
    %cst_124 = arith.constant 0.000000e+00 : f32
    %182 = vector.broadcast %cst_124 : f32 to vector<128x32xf32>
    %183 = arith.maximumf %181, %182 : vector<128x32xf32>
    %c0_125 = arith.constant 0 : index
    %c0_126 = arith.constant 0 : index
    %184 = vector.load %arg9[%c0_125, %c0_126] : memref<128x32xf32, #tpu.memory_space<vmem>>, vector<128x32xf32>
    tpu.vector_store %arg9[%c0_125, %c0_126], %183 {strides = array<i32>} : memref<128x32xf32, #tpu.memory_space<vmem>>, vector<128x32xf32>,
    %c0_127 = arith.constant 0 : index
    %c0_128 = arith.constant 0 : index
    %185 = tpu.strided_load %arg9[%c0_127, %c0_128] {strides = array<i32: 2, 1>} : memref<128x32xf32, #tpu.memory_space<vmem>>, vector<64x32xf32>
    %c1_129 = arith.constant 1 : index
    %c0_130 = arith.constant 0 : index
    %186 = tpu.strided_load %arg9[%c1_129, %c0_130] {strides = array<i32: 2, 1>} : memref<128x32xf32, #tpu.memory_space<vmem>>, vector<64x32xf32>
    %187 = arith.maximumf %185, %186 : vector<64x32xf32>
    %cst_131 = arith.constant 0.000000e+00 : f32
    %188 = vector.broadcast %cst_131 : f32 to vector<2x48x32xf32>
    %c0_132 = arith.constant 0 : index
    %c0_133 = arith.constant 0 : index
    %c0_134 = arith.constant 0 : index
    %189 = vector.load %arg8[%c0_132, %c0_133, %c0_134] : memref<2x48x32xf32, #tpu.memory_space<vmem>>, vector<2x48x32xf32>
    tpu.vector_store %arg8[%c0_132, %c0_133, %c0_134], %188 {strides = array<i32>} : memref<2x48x32xf32, #tpu.memory_space<vmem>>, vector<2x48x32xf32>,
    %190 = vector.extract_strided_slice %187 {offsets = [0, 0], sizes = [32, 32], strides = [1, 1]} : vector<64x32xf32> to vector<32x32xf32>
    %c0_135 = arith.constant 0 : index
    %c8_136 = arith.constant 8 : index
    %c0_137 = arith.constant 0 : index
    %191 = vector.load %arg8[%c0_135, %c8_136, %c0_137] : memref<2x48x32xf32, #tpu.memory_space<vmem>>, vector<1x32x32xf32>
    %192 = vector.shape_cast %191 : vector<1x32x32xf32> to vector<32x32xf32>
    %193 = vector.shape_cast %190 : vector<32x32xf32> to vector<1x32x32xf32>
    tpu.vector_store %arg8[%c0_135, %c8_136, %c0_137], %193 {strides = array<i32>} : memref<2x48x32xf32, #tpu.memory_space<vmem>>, vector<1x32x32xf32>,
    %194 = vector.extract_strided_slice %187 {offsets = [32, 0], sizes = [32, 32], strides = [1, 1]} : vector<64x32xf32> to vector<32x32xf32>
    %c1_138 = arith.constant 1 : index
    %c8_139 = arith.constant 8 : index
    %c0_140 = arith.constant 0 : index
    %195 = vector.load %arg8[%c1_138, %c8_139, %c0_140] : memref<2x48x32xf32, #tpu.memory_space<vmem>>, vector<1x32x32xf32>
    %196 = vector.shape_cast %195 : vector<1x32x32xf32> to vector<32x32xf32>
    %197 = vector.shape_cast %194 : vector<32x32xf32> to vector<1x32x32xf32>
    tpu.vector_store %arg8[%c1_138, %c8_139, %c0_140], %197 {strides = array<i32>} : memref<2x48x32xf32, #tpu.memory_space<vmem>>, vector<1x32x32xf32>,
    %cst_141 = arith.constant 0.000000e+00 : f32
    %198 = vector.broadcast %cst_141 : f32 to vector<64x32xf32>
    %c0_142 = arith.constant 0 : index
    %c3_143 = arith.constant 3 : index
    %c0_144 = arith.constant 0 : index
    %199 = vector.load %arg8[%c0_142, %c3_143, %c0_144] : memref<2x48x32xf32, #tpu.memory_space<vmem>>, vector<1x32x32xf32>
    %200 = vector.shape_cast %199 : vector<1x32x32xf32> to vector<32x32xf32>
    %c1_145 = arith.constant 1 : index
    %c3_146 = arith.constant 3 : index
    %c0_147 = arith.constant 0 : index
    %201 = vector.load %arg8[%c1_145, %c3_146, %c0_147] : memref<2x48x32xf32, #tpu.memory_space<vmem>>, vector<1x32x32xf32>
    %202 = vector.shape_cast %201 : vector<1x32x32xf32> to vector<32x32xf32>
    %203 = tpu.concatenate %200, %202 in 0 : vector<32x32xf32>, vector<32x32xf32> -> vector<64x32xf32>
    %c0_148 = arith.constant 0 : index
    %c0_149 = arith.constant 0 : index
    %c0_150 = arith.constant 0 : index
    %204 = vector.load %arg3[%c0_148, %c0_149, %c0_150] : memref<11x32x32xf32, #tpu.memory_space<vmem>>, vector<1x32x32xf32>
    %205 = vector.shape_cast %204 : vector<1x32x32xf32> to vector<32x32xf32>
    %cst_151 = arith.constant dense<0.000000e+00> : vector<64x32xf32>
    %206 = tpu.matmul %203, %205, %cst_151 {dimension_numbers = #tpu.dot_dimension_numbers<[1], [0], [0], [1], [0, 0, 1, 1], [], []>} : vector<64x32xf32>, vector<32x32xf32>, vector<64x32xf32> -> vector<64x32xf32>
    %207 = arith.addf %198, %206 : vector<64x32xf32>
    %c0_152 = arith.constant 0 : index
    %c4_153 = arith.constant 4 : index
    %c0_154 = arith.constant 0 : index
    %208 = vector.load %arg8[%c0_152, %c4_153, %c0_154] : memref<2x48x32xf32, #tpu.memory_space<vmem>>, vector<1x32x32xf32>
    %209 = vector.shape_cast %208 : vector<1x32x32xf32> to vector<32x32xf32>
    %c1_155 = arith.constant 1 : index
    %c4_156 = arith.constant 4 : index
    %c0_157 = arith.constant 0 : index
    %210 = vector.load %arg8[%c1_155, %c4_156, %c0_157] : memref<2x48x32xf32, #tpu.memory_space<vmem>>, vector<1x32x32xf32>
    %211 = vector.shape_cast %210 : vector<1x32x32xf32> to vector<32x32xf32>
    %212 = tpu.concatenate %209, %211 in 0 : vector<32x32xf32>, vector<32x32xf32> -> vector<64x32xf32>
    %c1_158 = arith.constant 1 : index
    %c0_159 = arith.constant 0 : index
    %c0_160 = arith.constant 0 : index
    %213 = vector.load %arg3[%c1_158, %c0_159, %c0_160] : memref<11x32x32xf32, #tpu.memory_space<vmem>>, vector<1x32x32xf32>
    %214 = vector.shape_cast %213 : vector<1x32x32xf32> to vector<32x32xf32>
    %cst_161 = arith.constant dense<0.000000e+00> : vector<64x32xf32>
    %215 = tpu.matmul %212, %214, %cst_161 {dimension_numbers = #tpu.dot_dimension_numbers<[1], [0], [0], [1], [0, 0, 1, 1], [], []>} : vector<64x32xf32>, vector<32x32xf32>, vector<64x32xf32> -> vector<64x32xf32>
    %216 = arith.addf %207, %215 : vector<64x32xf32>
    %c0_162 = arith.constant 0 : index
    %c5_163 = arith.constant 5 : index
    %c0_164 = arith.constant 0 : index
    %217 = vector.load %arg8[%c0_162, %c5_163, %c0_164] : memref<2x48x32xf32, #tpu.memory_space<vmem>>, vector<1x32x32xf32>
    %218 = vector.shape_cast %217 : vector<1x32x32xf32> to vector<32x32xf32>
    %c1_165 = arith.constant 1 : index
    %c5_166 = arith.constant 5 : index
    %c0_167 = arith.constant 0 : index
    %219 = vector.load %arg8[%c1_165, %c5_166, %c0_167] : memref<2x48x32xf32, #tpu.memory_space<vmem>>, vector<1x32x32xf32>
    %220 = vector.shape_cast %219 : vector<1x32x32xf32> to vector<32x32xf32>
    %221 = tpu.concatenate %218, %220 in 0 : vector<32x32xf32>, vector<32x32xf32> -> vector<64x32xf32>
    %c2_168 = arith.constant 2 : index
    %c0_169 = arith.constant 0 : index
    %c0_170 = arith.constant 0 : index
    %222 = vector.load %arg3[%c2_168, %c0_169, %c0_170] : memref<11x32x32xf32, #tpu.memory_space<vmem>>, vector<1x32x32xf32>
    %223 = vector.shape_cast %222 : vector<1x32x32xf32> to vector<32x32xf32>
    %cst_171 = arith.constant dense<0.000000e+00> : vector<64x32xf32>
    %224 = tpu.matmul %221, %223, %cst_171 {dimension_numbers = #tpu.dot_dimension_numbers<[1], [0], [0], [1], [0, 0, 1, 1], [], []>} : vector<64x32xf32>, vector<32x32xf32>, vector<64x32xf32> -> vector<64x32xf32>
    %225 = arith.addf %216, %224 : vector<64x32xf32>
    %c0_172 = arith.constant 0 : index
    %c6_173 = arith.constant 6 : index
    %c0_174 = arith.constant 0 : index
    %226 = vector.load %arg8[%c0_172, %c6_173, %c0_174] : memref<2x48x32xf32, #tpu.memory_space<vmem>>, vector<1x32x32xf32>
    %227 = vector.shape_cast %226 : vector<1x32x32xf32> to vector<32x32xf32>
    %c1_175 = arith.constant 1 : index
    %c6_176 = arith.constant 6 : index
    %c0_177 = arith.constant 0 : index
    %228 = vector.load %arg8[%c1_175, %c6_176, %c0_177] : memref<2x48x32xf32, #tpu.memory_space<vmem>>, vector<1x32x32xf32>
    %229 = vector.shape_cast %228 : vector<1x32x32xf32> to vector<32x32xf32>
    %230 = tpu.concatenate %227, %229 in 0 : vector<32x32xf32>, vector<32x32xf32> -> vector<64x32xf32>
    %c3_178 = arith.constant 3 : index
    %c0_179 = arith.constant 0 : index
    %c0_180 = arith.constant 0 : index
    %231 = vector.load %arg3[%c3_178, %c0_179, %c0_180] : memref<11x32x32xf32, #tpu.memory_space<vmem>>, vector<1x32x32xf32>
    %232 = vector.shape_cast %231 : vector<1x32x32xf32> to vector<32x32xf32>
    %cst_181 = arith.constant dense<0.000000e+00> : vector<64x32xf32>
    %233 = tpu.matmul %230, %232, %cst_181 {dimension_numbers = #tpu.dot_dimension_numbers<[1], [0], [0], [1], [0, 0, 1, 1], [], []>} : vector<64x32xf32>, vector<32x32xf32>, vector<64x32xf32> -> vector<64x32xf32>
    %234 = arith.addf %225, %233 : vector<64x32xf32>
    %c0_182 = arith.constant 0 : index
    %c7_183 = arith.constant 7 : index
    %c0_184 = arith.constant 0 : index
    %235 = vector.load %arg8[%c0_182, %c7_183, %c0_184] : memref<2x48x32xf32, #tpu.memory_space<vmem>>, vector<1x32x32xf32>
    %236 = vector.shape_cast %235 : vector<1x32x32xf32> to vector<32x32xf32>
    %c1_185 = arith.constant 1 : index
    %c7_186 = arith.constant 7 : index
    %c0_187 = arith.constant 0 : index
    %237 = vector.load %arg8[%c1_185, %c7_186, %c0_187] : memref<2x48x32xf32, #tpu.memory_space<vmem>>, vector<1x32x32xf32>
    %238 = vector.shape_cast %237 : vector<1x32x32xf32> to vector<32x32xf32>
    %239 = tpu.concatenate %236, %238 in 0 : vector<32x32xf32>, vector<32x32xf32> -> vector<64x32xf32>
    %c4_188 = arith.constant 4 : index
    %c0_189 = arith.constant 0 : index
    %c0_190 = arith.constant 0 : index
    %240 = vector.load %arg3[%c4_188, %c0_189, %c0_190] : memref<11x32x32xf32, #tpu.memory_space<vmem>>, vector<1x32x32xf32>
    %241 = vector.shape_cast %240 : vector<1x32x32xf32> to vector<32x32xf32>
    %cst_191 = arith.constant dense<0.000000e+00> : vector<64x32xf32>
    %242 = tpu.matmul %239, %241, %cst_191 {dimension_numbers = #tpu.dot_dimension_numbers<[1], [0], [0], [1], [0, 0, 1, 1], [], []>} : vector<64x32xf32>, vector<32x32xf32>, vector<64x32xf32> -> vector<64x32xf32>
    %243 = arith.addf %234, %242 : vector<64x32xf32>
    %c0_192 = arith.constant 0 : index
    %c8_193 = arith.constant 8 : index
    %c0_194 = arith.constant 0 : index
    %244 = vector.load %arg8[%c0_192, %c8_193, %c0_194] : memref<2x48x32xf32, #tpu.memory_space<vmem>>, vector<1x32x32xf32>
    %245 = vector.shape_cast %244 : vector<1x32x32xf32> to vector<32x32xf32>
    %c1_195 = arith.constant 1 : index
    %c8_196 = arith.constant 8 : index
    %c0_197 = arith.constant 0 : index
    %246 = vector.load %arg8[%c1_195, %c8_196, %c0_197] : memref<2x48x32xf32, #tpu.memory_space<vmem>>, vector<1x32x32xf32>
    %247 = vector.shape_cast %246 : vector<1x32x32xf32> to vector<32x32xf32>
    %248 = tpu.concatenate %245, %247 in 0 : vector<32x32xf32>, vector<32x32xf32> -> vector<64x32xf32>
    %c5_198 = arith.constant 5 : index
    %c0_199 = arith.constant 0 : index
    %c0_200 = arith.constant 0 : index
    %249 = vector.load %arg3[%c5_198, %c0_199, %c0_200] : memref<11x32x32xf32, #tpu.memory_space<vmem>>, vector<1x32x32xf32>
    %250 = vector.shape_cast %249 : vector<1x32x32xf32> to vector<32x32xf32>
    %cst_201 = arith.constant dense<0.000000e+00> : vector<64x32xf32>
    %251 = tpu.matmul %248, %250, %cst_201 {dimension_numbers = #tpu.dot_dimension_numbers<[1], [0], [0], [1], [0, 0, 1, 1], [], []>} : vector<64x32xf32>, vector<32x32xf32>, vector<64x32xf32> -> vector<64x32xf32>
    %252 = arith.addf %243, %251 : vector<64x32xf32>
    %c0_202 = arith.constant 0 : index
    %c9_203 = arith.constant 9 : index
    %c0_204 = arith.constant 0 : index
    %253 = vector.load %arg8[%c0_202, %c9_203, %c0_204] : memref<2x48x32xf32, #tpu.memory_space<vmem>>, vector<1x32x32xf32>
    %254 = vector.shape_cast %253 : vector<1x32x32xf32> to vector<32x32xf32>
    %c1_205 = arith.constant 1 : index
    %c9_206 = arith.constant 9 : index
    %c0_207 = arith.constant 0 : index
    %255 = vector.load %arg8[%c1_205, %c9_206, %c0_207] : memref<2x48x32xf32, #tpu.memory_space<vmem>>, vector<1x32x32xf32>
    %256 = vector.shape_cast %255 : vector<1x32x32xf32> to vector<32x32xf32>
    %257 = tpu.concatenate %254, %256 in 0 : vector<32x32xf32>, vector<32x32xf32> -> vector<64x32xf32>
    %c6_208 = arith.constant 6 : index
    %c0_209 = arith.constant 0 : index
    %c0_210 = arith.constant 0 : index
    %258 = vector.load %arg3[%c6_208, %c0_209, %c0_210] : memref<11x32x32xf32, #tpu.memory_space<vmem>>, vector<1x32x32xf32>
    %259 = vector.shape_cast %258 : vector<1x32x32xf32> to vector<32x32xf32>
    %cst_211 = arith.constant dense<0.000000e+00> : vector<64x32xf32>
    %260 = tpu.matmul %257, %259, %cst_211 {dimension_numbers = #tpu.dot_dimension_numbers<[1], [0], [0], [1], [0, 0, 1, 1], [], []>} : vector<64x32xf32>, vector<32x32xf32>, vector<64x32xf32> -> vector<64x32xf32>
    %261 = arith.addf %252, %260 : vector<64x32xf32>
    %c0_212 = arith.constant 0 : index
    %c10_213 = arith.constant 10 : index
    %c0_214 = arith.constant 0 : index
    %262 = vector.load %arg8[%c0_212, %c10_213, %c0_214] : memref<2x48x32xf32, #tpu.memory_space<vmem>>, vector<1x32x32xf32>
    %263 = vector.shape_cast %262 : vector<1x32x32xf32> to vector<32x32xf32>
    %c1_215 = arith.constant 1 : index
    %c10_216 = arith.constant 10 : index
    %c0_217 = arith.constant 0 : index
    %264 = vector.load %arg8[%c1_215, %c10_216, %c0_217] : memref<2x48x32xf32, #tpu.memory_space<vmem>>, vector<1x32x32xf32>
    %265 = vector.shape_cast %264 : vector<1x32x32xf32> to vector<32x32xf32>
    %266 = tpu.concatenate %263, %265 in 0 : vector<32x32xf32>, vector<32x32xf32> -> vector<64x32xf32>
    %c7_218 = arith.constant 7 : index
    %c0_219 = arith.constant 0 : index
    %c0_220 = arith.constant 0 : index
    %267 = vector.load %arg3[%c7_218, %c0_219, %c0_220] : memref<11x32x32xf32, #tpu.memory_space<vmem>>, vector<1x32x32xf32>
    %268 = vector.shape_cast %267 : vector<1x32x32xf32> to vector<32x32xf32>
    %cst_221 = arith.constant dense<0.000000e+00> : vector<64x32xf32>
    %269 = tpu.matmul %266, %268, %cst_221 {dimension_numbers = #tpu.dot_dimension_numbers<[1], [0], [0], [1], [0, 0, 1, 1], [], []>} : vector<64x32xf32>, vector<32x32xf32>, vector<64x32xf32> -> vector<64x32xf32>
    %270 = arith.addf %261, %269 : vector<64x32xf32>
    %c0_222 = arith.constant 0 : index
    %c11 = arith.constant 11 : index
    %c0_223 = arith.constant 0 : index
    %271 = vector.load %arg8[%c0_222, %c11, %c0_223] : memref<2x48x32xf32, #tpu.memory_space<vmem>>, vector<1x32x32xf32>
    %272 = vector.shape_cast %271 : vector<1x32x32xf32> to vector<32x32xf32>
    %c1_224 = arith.constant 1 : index
    %c11_225 = arith.constant 11 : index
    %c0_226 = arith.constant 0 : index
    %273 = vector.load %arg8[%c1_224, %c11_225, %c0_226] : memref<2x48x32xf32, #tpu.memory_space<vmem>>, vector<1x32x32xf32>
    %274 = vector.shape_cast %273 : vector<1x32x32xf32> to vector<32x32xf32>
    %275 = tpu.concatenate %272, %274 in 0 : vector<32x32xf32>, vector<32x32xf32> -> vector<64x32xf32>
    %c8_227 = arith.constant 8 : index
    %c0_228 = arith.constant 0 : index
    %c0_229 = arith.constant 0 : index
    %276 = vector.load %arg3[%c8_227, %c0_228, %c0_229] : memref<11x32x32xf32, #tpu.memory_space<vmem>>, vector<1x32x32xf32>
    %277 = vector.shape_cast %276 : vector<1x32x32xf32> to vector<32x32xf32>
    %cst_230 = arith.constant dense<0.000000e+00> : vector<64x32xf32>
    %278 = tpu.matmul %275, %277, %cst_230 {dimension_numbers = #tpu.dot_dimension_numbers<[1], [0], [0], [1], [0, 0, 1, 1], [], []>} : vector<64x32xf32>, vector<32x32xf32>, vector<64x32xf32> -> vector<64x32xf32>
    %279 = arith.addf %270, %278 : vector<64x32xf32>
    %c0_231 = arith.constant 0 : index
    %c12 = arith.constant 12 : index
    %c0_232 = arith.constant 0 : index
    %280 = vector.load %arg8[%c0_231, %c12, %c0_232] : memref<2x48x32xf32, #tpu.memory_space<vmem>>, vector<1x32x32xf32>
    %281 = vector.shape_cast %280 : vector<1x32x32xf32> to vector<32x32xf32>
    %c1_233 = arith.constant 1 : index
    %c12_234 = arith.constant 12 : index
    %c0_235 = arith.constant 0 : index
    %282 = vector.load %arg8[%c1_233, %c12_234, %c0_235] : memref<2x48x32xf32, #tpu.memory_space<vmem>>, vector<1x32x32xf32>
    %283 = vector.shape_cast %282 : vector<1x32x32xf32> to vector<32x32xf32>
    %284 = tpu.concatenate %281, %283 in 0 : vector<32x32xf32>, vector<32x32xf32> -> vector<64x32xf32>
    %c9_236 = arith.constant 9 : index
    %c0_237 = arith.constant 0 : index
    %c0_238 = arith.constant 0 : index
    %285 = vector.load %arg3[%c9_236, %c0_237, %c0_238] : memref<11x32x32xf32, #tpu.memory_space<vmem>>, vector<1x32x32xf32>
    %286 = vector.shape_cast %285 : vector<1x32x32xf32> to vector<32x32xf32>
    %cst_239 = arith.constant dense<0.000000e+00> : vector<64x32xf32>
    %287 = tpu.matmul %284, %286, %cst_239 {dimension_numbers = #tpu.dot_dimension_numbers<[1], [0], [0], [1], [0, 0, 1, 1], [], []>} : vector<64x32xf32>, vector<32x32xf32>, vector<64x32xf32> -> vector<64x32xf32>
    %288 = arith.addf %279, %287 : vector<64x32xf32>
    %c0_240 = arith.constant 0 : index
    %c13 = arith.constant 13 : index
    %c0_241 = arith.constant 0 : index
    %289 = vector.load %arg8[%c0_240, %c13, %c0_241] : memref<2x48x32xf32, #tpu.memory_space<vmem>>, vector<1x32x32xf32>
    %290 = vector.shape_cast %289 : vector<1x32x32xf32> to vector<32x32xf32>
    %c1_242 = arith.constant 1 : index
    %c13_243 = arith.constant 13 : index
    %c0_244 = arith.constant 0 : index
    %291 = vector.load %arg8[%c1_242, %c13_243, %c0_244] : memref<2x48x32xf32, #tpu.memory_space<vmem>>, vector<1x32x32xf32>
    %292 = vector.shape_cast %291 : vector<1x32x32xf32> to vector<32x32xf32>
    %293 = tpu.concatenate %290, %292 in 0 : vector<32x32xf32>, vector<32x32xf32> -> vector<64x32xf32>
    %c10_245 = arith.constant 10 : index
    %c0_246 = arith.constant 0 : index
    %c0_247 = arith.constant 0 : index
    %294 = vector.load %arg3[%c10_245, %c0_246, %c0_247] : memref<11x32x32xf32, #tpu.memory_space<vmem>>, vector<1x32x32xf32>
    %295 = vector.shape_cast %294 : vector<1x32x32xf32> to vector<32x32xf32>
    %cst_248 = arith.constant dense<0.000000e+00> : vector<64x32xf32>
    %296 = tpu.matmul %293, %295, %cst_248 {dimension_numbers = #tpu.dot_dimension_numbers<[1], [0], [0], [1], [0, 0, 1, 1], [], []>} : vector<64x32xf32>, vector<32x32xf32>, vector<64x32xf32> -> vector<64x32xf32>
    %297 = arith.addf %288, %296 : vector<64x32xf32>
    %c0_249 = arith.constant 0 : index
    %c0_250 = arith.constant 0 : index
    %298 = vector.load %arg4[%c0_249, %c0_250] : memref<1x32xf32, #tpu.memory_space<vmem>>, vector<1x32xf32>
    %299 = vector.broadcast %298 : vector<1x32xf32> to vector<64x32xf32>
    %300 = arith.addf %297, %299 : vector<64x32xf32>
    %cst_251 = arith.constant 0.000000e+00 : f32
    %301 = vector.broadcast %cst_251 : f32 to vector<64x32xf32>
    %302 = arith.maximumf %300, %301 : vector<64x32xf32>
    %c0_252 = arith.constant 0 : index
    %c0_253 = arith.constant 0 : index
    %303 = vector.load %arg9[%c0_252, %c0_253] : memref<128x32xf32, #tpu.memory_space<vmem>>, vector<64x32xf32>
    tpu.vector_store %arg9[%c0_252, %c0_253], %302 {strides = array<i32>} : memref<128x32xf32, #tpu.memory_space<vmem>>, vector<64x32xf32>,
    %c0_254 = arith.constant 0 : index
    %c0_255 = arith.constant 0 : index
    %304 = tpu.strided_load %arg9[%c0_254, %c0_255] {strides = array<i32: 2, 1>} : memref<128x32xf32, #tpu.memory_space<vmem>>, vector<32x32xf32>
    %c1_256 = arith.constant 1 : index
    %c0_257 = arith.constant 0 : index
    %305 = tpu.strided_load %arg9[%c1_256, %c0_257] {strides = array<i32: 2, 1>} : memref<128x32xf32, #tpu.memory_space<vmem>>, vector<32x32xf32>
    %306 = arith.maximumf %304, %305 : vector<32x32xf32>
    %cst_258 = arith.constant 0.000000e+00 : f32
    %307 = vector.broadcast %cst_258 : f32 to vector<2x48x32xf32>
    %c0_259 = arith.constant 0 : index
    %c0_260 = arith.constant 0 : index
    %c0_261 = arith.constant 0 : index
    %308 = vector.load %arg8[%c0_259, %c0_260, %c0_261] : memref<2x48x32xf32, #tpu.memory_space<vmem>>, vector<2x48x32xf32>
    tpu.vector_store %arg8[%c0_259, %c0_260, %c0_261], %307 {strides = array<i32>} : memref<2x48x32xf32, #tpu.memory_space<vmem>>, vector<2x48x32xf32>,
    %309 = vector.extract_strided_slice %306 {offsets = [0, 0], sizes = [16, 32], strides = [1, 1]} : vector<32x32xf32> to vector<16x32xf32>
    %c0_262 = arith.constant 0 : index
    %c8_263 = arith.constant 8 : index
    %c0_264 = arith.constant 0 : index
    %310 = vector.load %arg8[%c0_262, %c8_263, %c0_264] : memref<2x48x32xf32, #tpu.memory_space<vmem>>, vector<1x16x32xf32>
    %311 = vector.shape_cast %310 : vector<1x16x32xf32> to vector<16x32xf32>
    %312 = vector.shape_cast %309 : vector<16x32xf32> to vector<1x16x32xf32>
    tpu.vector_store %arg8[%c0_262, %c8_263, %c0_264], %312 {strides = array<i32>} : memref<2x48x32xf32, #tpu.memory_space<vmem>>, vector<1x16x32xf32>,
    %313 = vector.extract_strided_slice %306 {offsets = [16, 0], sizes = [16, 32], strides = [1, 1]} : vector<32x32xf32> to vector<16x32xf32>
    %c1_265 = arith.constant 1 : index
    %c8_266 = arith.constant 8 : index
    %c0_267 = arith.constant 0 : index
    %314 = vector.load %arg8[%c1_265, %c8_266, %c0_267] : memref<2x48x32xf32, #tpu.memory_space<vmem>>, vector<1x16x32xf32>
    %315 = vector.shape_cast %314 : vector<1x16x32xf32> to vector<16x32xf32>
    %316 = vector.shape_cast %313 : vector<16x32xf32> to vector<1x16x32xf32>
    tpu.vector_store %arg8[%c1_265, %c8_266, %c0_267], %316 {strides = array<i32>} : memref<2x48x32xf32, #tpu.memory_space<vmem>>, vector<1x16x32xf32>,
    %cst_268 = arith.constant 0.000000e+00 : f32
    %317 = vector.broadcast %cst_268 : f32 to vector<32x8xf32>
    %c0_269 = arith.constant 0 : index
    %c3_270 = arith.constant 3 : index
    %c0_271 = arith.constant 0 : index
    %318 = vector.load %arg8[%c0_269, %c3_270, %c0_271] : memref<2x48x32xf32, #tpu.memory_space<vmem>>, vector<1x16x32xf32>
    %319 = vector.shape_cast %318 : vector<1x16x32xf32> to vector<16x32xf32>
    %c1_272 = arith.constant 1 : index
    %c3_273 = arith.constant 3 : index
    %c0_274 = arith.constant 0 : index
    %320 = vector.load %arg8[%c1_272, %c3_273, %c0_274] : memref<2x48x32xf32, #tpu.memory_space<vmem>>, vector<1x16x32xf32>
    %321 = vector.shape_cast %320 : vector<1x16x32xf32> to vector<16x32xf32>
    %322 = tpu.concatenate %319, %321 in 0 : vector<16x32xf32>, vector<16x32xf32> -> vector<32x32xf32>
    %c0_275 = arith.constant 0 : index
    %c0_276 = arith.constant 0 : index
    %c0_277 = arith.constant 0 : index
    %323 = vector.load %arg5[%c0_275, %c0_276, %c0_277] : memref<11x32x8xf32, #tpu.memory_space<vmem>>, vector<1x32x8xf32>
    %324 = vector.shape_cast %323 : vector<1x32x8xf32> to vector<32x8xf32>
    %cst_278 = arith.constant dense<0.000000e+00> : vector<32x8xf32>
    %325 = tpu.matmul %322, %324, %cst_278 {dimension_numbers = #tpu.dot_dimension_numbers<[1], [0], [0], [1], [0, 0, 1, 1], [], []>} : vector<32x32xf32>, vector<32x8xf32>, vector<32x8xf32> -> vector<32x8xf32>
    %326 = arith.addf %317, %325 : vector<32x8xf32>
    %c0_279 = arith.constant 0 : index
    %c4_280 = arith.constant 4 : index
    %c0_281 = arith.constant 0 : index
    %327 = vector.load %arg8[%c0_279, %c4_280, %c0_281] : memref<2x48x32xf32, #tpu.memory_space<vmem>>, vector<1x16x32xf32>
    %328 = vector.shape_cast %327 : vector<1x16x32xf32> to vector<16x32xf32>
    %c1_282 = arith.constant 1 : index
    %c4_283 = arith.constant 4 : index
    %c0_284 = arith.constant 0 : index
    %329 = vector.load %arg8[%c1_282, %c4_283, %c0_284] : memref<2x48x32xf32, #tpu.memory_space<vmem>>, vector<1x16x32xf32>
    %330 = vector.shape_cast %329 : vector<1x16x32xf32> to vector<16x32xf32>
    %331 = tpu.concatenate %328, %330 in 0 : vector<16x32xf32>, vector<16x32xf32> -> vector<32x32xf32>
    %c1_285 = arith.constant 1 : index
    %c0_286 = arith.constant 0 : index
    %c0_287 = arith.constant 0 : index
    %332 = vector.load %arg5[%c1_285, %c0_286, %c0_287] : memref<11x32x8xf32, #tpu.memory_space<vmem>>, vector<1x32x8xf32>
    %333 = vector.shape_cast %332 : vector<1x32x8xf32> to vector<32x8xf32>
    %cst_288 = arith.constant dense<0.000000e+00> : vector<32x8xf32>
    %334 = tpu.matmul %331, %333, %cst_288 {dimension_numbers = #tpu.dot_dimension_numbers<[1], [0], [0], [1], [0, 0, 1, 1], [], []>} : vector<32x32xf32>, vector<32x8xf32>, vector<32x8xf32> -> vector<32x8xf32>
    %335 = arith.addf %326, %334 : vector<32x8xf32>
    %c0_289 = arith.constant 0 : index
    %c5_290 = arith.constant 5 : index
    %c0_291 = arith.constant 0 : index
    %336 = vector.load %arg8[%c0_289, %c5_290, %c0_291] : memref<2x48x32xf32, #tpu.memory_space<vmem>>, vector<1x16x32xf32>
    %337 = vector.shape_cast %336 : vector<1x16x32xf32> to vector<16x32xf32>
    %c1_292 = arith.constant 1 : index
    %c5_293 = arith.constant 5 : index
    %c0_294 = arith.constant 0 : index
    %338 = vector.load %arg8[%c1_292, %c5_293, %c0_294] : memref<2x48x32xf32, #tpu.memory_space<vmem>>, vector<1x16x32xf32>
    %339 = vector.shape_cast %338 : vector<1x16x32xf32> to vector<16x32xf32>
    %340 = tpu.concatenate %337, %339 in 0 : vector<16x32xf32>, vector<16x32xf32> -> vector<32x32xf32>
    %c2_295 = arith.constant 2 : index
    %c0_296 = arith.constant 0 : index
    %c0_297 = arith.constant 0 : index
    %341 = vector.load %arg5[%c2_295, %c0_296, %c0_297] : memref<11x32x8xf32, #tpu.memory_space<vmem>>, vector<1x32x8xf32>
    %342 = vector.shape_cast %341 : vector<1x32x8xf32> to vector<32x8xf32>
    %cst_298 = arith.constant dense<0.000000e+00> : vector<32x8xf32>
    %343 = tpu.matmul %340, %342, %cst_298 {dimension_numbers = #tpu.dot_dimension_numbers<[1], [0], [0], [1], [0, 0, 1, 1], [], []>} : vector<32x32xf32>, vector<32x8xf32>, vector<32x8xf32> -> vector<32x8xf32>
    %344 = arith.addf %335, %343 : vector<32x8xf32>
    %c0_299 = arith.constant 0 : index
    %c6_300 = arith.constant 6 : index
    %c0_301 = arith.constant 0 : index
    %345 = vector.load %arg8[%c0_299, %c6_300, %c0_301] : memref<2x48x32xf32, #tpu.memory_space<vmem>>, vector<1x16x32xf32>
    %346 = vector.shape_cast %345 : vector<1x16x32xf32> to vector<16x32xf32>
    %c1_302 = arith.constant 1 : index
    %c6_303 = arith.constant 6 : index
    %c0_304 = arith.constant 0 : index
    %347 = vector.load %arg8[%c1_302, %c6_303, %c0_304] : memref<2x48x32xf32, #tpu.memory_space<vmem>>, vector<1x16x32xf32>
    %348 = vector.shape_cast %347 : vector<1x16x32xf32> to vector<16x32xf32>
    %349 = tpu.concatenate %346, %348 in 0 : vector<16x32xf32>, vector<16x32xf32> -> vector<32x32xf32>
    %c3_305 = arith.constant 3 : index
    %c0_306 = arith.constant 0 : index
    %c0_307 = arith.constant 0 : index
    %350 = vector.load %arg5[%c3_305, %c0_306, %c0_307] : memref<11x32x8xf32, #tpu.memory_space<vmem>>, vector<1x32x8xf32>
    %351 = vector.shape_cast %350 : vector<1x32x8xf32> to vector<32x8xf32>
    %cst_308 = arith.constant dense<0.000000e+00> : vector<32x8xf32>
    %352 = tpu.matmul %349, %351, %cst_308 {dimension_numbers = #tpu.dot_dimension_numbers<[1], [0], [0], [1], [0, 0, 1, 1], [], []>} : vector<32x32xf32>, vector<32x8xf32>, vector<32x8xf32> -> vector<32x8xf32>
    %353 = arith.addf %344, %352 : vector<32x8xf32>
    %c0_309 = arith.constant 0 : index
    %c7_310 = arith.constant 7 : index
    %c0_311 = arith.constant 0 : index
    %354 = vector.load %arg8[%c0_309, %c7_310, %c0_311] : memref<2x48x32xf32, #tpu.memory_space<vmem>>, vector<1x16x32xf32>
    %355 = vector.shape_cast %354 : vector<1x16x32xf32> to vector<16x32xf32>
    %c1_312 = arith.constant 1 : index
    %c7_313 = arith.constant 7 : index
    %c0_314 = arith.constant 0 : index
    %356 = vector.load %arg8[%c1_312, %c7_313, %c0_314] : memref<2x48x32xf32, #tpu.memory_space<vmem>>, vector<1x16x32xf32>
    %357 = vector.shape_cast %356 : vector<1x16x32xf32> to vector<16x32xf32>
    %358 = tpu.concatenate %355, %357 in 0 : vector<16x32xf32>, vector<16x32xf32> -> vector<32x32xf32>
    %c4_315 = arith.constant 4 : index
    %c0_316 = arith.constant 0 : index
    %c0_317 = arith.constant 0 : index
    %359 = vector.load %arg5[%c4_315, %c0_316, %c0_317] : memref<11x32x8xf32, #tpu.memory_space<vmem>>, vector<1x32x8xf32>
    %360 = vector.shape_cast %359 : vector<1x32x8xf32> to vector<32x8xf32>
    %cst_318 = arith.constant dense<0.000000e+00> : vector<32x8xf32>
    %361 = tpu.matmul %358, %360, %cst_318 {dimension_numbers = #tpu.dot_dimension_numbers<[1], [0], [0], [1], [0, 0, 1, 1], [], []>} : vector<32x32xf32>, vector<32x8xf32>, vector<32x8xf32> -> vector<32x8xf32>
    %362 = arith.addf %353, %361 : vector<32x8xf32>
    %c0_319 = arith.constant 0 : index
    %c8_320 = arith.constant 8 : index
    %c0_321 = arith.constant 0 : index
    %363 = vector.load %arg8[%c0_319, %c8_320, %c0_321] : memref<2x48x32xf32, #tpu.memory_space<vmem>>, vector<1x16x32xf32>
    %364 = vector.shape_cast %363 : vector<1x16x32xf32> to vector<16x32xf32>
    %c1_322 = arith.constant 1 : index
    %c8_323 = arith.constant 8 : index
    %c0_324 = arith.constant 0 : index
    %365 = vector.load %arg8[%c1_322, %c8_323, %c0_324] : memref<2x48x32xf32, #tpu.memory_space<vmem>>, vector<1x16x32xf32>
    %366 = vector.shape_cast %365 : vector<1x16x32xf32> to vector<16x32xf32>
    %367 = tpu.concatenate %364, %366 in 0 : vector<16x32xf32>, vector<16x32xf32> -> vector<32x32xf32>
    %c5_325 = arith.constant 5 : index
    %c0_326 = arith.constant 0 : index
    %c0_327 = arith.constant 0 : index
    %368 = vector.load %arg5[%c5_325, %c0_326, %c0_327] : memref<11x32x8xf32, #tpu.memory_space<vmem>>, vector<1x32x8xf32>
    %369 = vector.shape_cast %368 : vector<1x32x8xf32> to vector<32x8xf32>
    %cst_328 = arith.constant dense<0.000000e+00> : vector<32x8xf32>
    %370 = tpu.matmul %367, %369, %cst_328 {dimension_numbers = #tpu.dot_dimension_numbers<[1], [0], [0], [1], [0, 0, 1, 1], [], []>} : vector<32x32xf32>, vector<32x8xf32>, vector<32x8xf32> -> vector<32x8xf32>
    %371 = arith.addf %362, %370 : vector<32x8xf32>
    %c0_329 = arith.constant 0 : index
    %c9_330 = arith.constant 9 : index
    %c0_331 = arith.constant 0 : index
    %372 = vector.load %arg8[%c0_329, %c9_330, %c0_331] : memref<2x48x32xf32, #tpu.memory_space<vmem>>, vector<1x16x32xf32>
    %373 = vector.shape_cast %372 : vector<1x16x32xf32> to vector<16x32xf32>
    %c1_332 = arith.constant 1 : index
    %c9_333 = arith.constant 9 : index
    %c0_334 = arith.constant 0 : index
    %374 = vector.load %arg8[%c1_332, %c9_333, %c0_334] : memref<2x48x32xf32, #tpu.memory_space<vmem>>, vector<1x16x32xf32>
    %375 = vector.shape_cast %374 : vector<1x16x32xf32> to vector<16x32xf32>
    %376 = tpu.concatenate %373, %375 in 0 : vector<16x32xf32>, vector<16x32xf32> -> vector<32x32xf32>
    %c6_335 = arith.constant 6 : index
    %c0_336 = arith.constant 0 : index
    %c0_337 = arith.constant 0 : index
    %377 = vector.load %arg5[%c6_335, %c0_336, %c0_337] : memref<11x32x8xf32, #tpu.memory_space<vmem>>, vector<1x32x8xf32>
    %378 = vector.shape_cast %377 : vector<1x32x8xf32> to vector<32x8xf32>
    %cst_338 = arith.constant dense<0.000000e+00> : vector<32x8xf32>
    %379 = tpu.matmul %376, %378, %cst_338 {dimension_numbers = #tpu.dot_dimension_numbers<[1], [0], [0], [1], [0, 0, 1, 1], [], []>} : vector<32x32xf32>, vector<32x8xf32>, vector<32x8xf32> -> vector<32x8xf32>
    %380 = arith.addf %371, %379 : vector<32x8xf32>
    %c0_339 = arith.constant 0 : index
    %c10_340 = arith.constant 10 : index
    %c0_341 = arith.constant 0 : index
    %381 = vector.load %arg8[%c0_339, %c10_340, %c0_341] : memref<2x48x32xf32, #tpu.memory_space<vmem>>, vector<1x16x32xf32>
    %382 = vector.shape_cast %381 : vector<1x16x32xf32> to vector<16x32xf32>
    %c1_342 = arith.constant 1 : index
    %c10_343 = arith.constant 10 : index
    %c0_344 = arith.constant 0 : index
    %383 = vector.load %arg8[%c1_342, %c10_343, %c0_344] : memref<2x48x32xf32, #tpu.memory_space<vmem>>, vector<1x16x32xf32>
    %384 = vector.shape_cast %383 : vector<1x16x32xf32> to vector<16x32xf32>
    %385 = tpu.concatenate %382, %384 in 0 : vector<16x32xf32>, vector<16x32xf32> -> vector<32x32xf32>
    %c7_345 = arith.constant 7 : index
    %c0_346 = arith.constant 0 : index
    %c0_347 = arith.constant 0 : index
    %386 = vector.load %arg5[%c7_345, %c0_346, %c0_347] : memref<11x32x8xf32, #tpu.memory_space<vmem>>, vector<1x32x8xf32>
    %387 = vector.shape_cast %386 : vector<1x32x8xf32> to vector<32x8xf32>
    %cst_348 = arith.constant dense<0.000000e+00> : vector<32x8xf32>
    %388 = tpu.matmul %385, %387, %cst_348 {dimension_numbers = #tpu.dot_dimension_numbers<[1], [0], [0], [1], [0, 0, 1, 1], [], []>} : vector<32x32xf32>, vector<32x8xf32>, vector<32x8xf32> -> vector<32x8xf32>
    %389 = arith.addf %380, %388 : vector<32x8xf32>
    %c0_349 = arith.constant 0 : index
    %c11_350 = arith.constant 11 : index
    %c0_351 = arith.constant 0 : index
    %390 = vector.load %arg8[%c0_349, %c11_350, %c0_351] : memref<2x48x32xf32, #tpu.memory_space<vmem>>, vector<1x16x32xf32>
    %391 = vector.shape_cast %390 : vector<1x16x32xf32> to vector<16x32xf32>
    %c1_352 = arith.constant 1 : index
    %c11_353 = arith.constant 11 : index
    %c0_354 = arith.constant 0 : index
    %392 = vector.load %arg8[%c1_352, %c11_353, %c0_354] : memref<2x48x32xf32, #tpu.memory_space<vmem>>, vector<1x16x32xf32>
    %393 = vector.shape_cast %392 : vector<1x16x32xf32> to vector<16x32xf32>
    %394 = tpu.concatenate %391, %393 in 0 : vector<16x32xf32>, vector<16x32xf32> -> vector<32x32xf32>
    %c8_355 = arith.constant 8 : index
    %c0_356 = arith.constant 0 : index
    %c0_357 = arith.constant 0 : index
    %395 = vector.load %arg5[%c8_355, %c0_356, %c0_357] : memref<11x32x8xf32, #tpu.memory_space<vmem>>, vector<1x32x8xf32>
    %396 = vector.shape_cast %395 : vector<1x32x8xf32> to vector<32x8xf32>
    %cst_358 = arith.constant dense<0.000000e+00> : vector<32x8xf32>
    %397 = tpu.matmul %394, %396, %cst_358 {dimension_numbers = #tpu.dot_dimension_numbers<[1], [0], [0], [1], [0, 0, 1, 1], [], []>} : vector<32x32xf32>, vector<32x8xf32>, vector<32x8xf32> -> vector<32x8xf32>
    %398 = arith.addf %389, %397 : vector<32x8xf32>
    %c0_359 = arith.constant 0 : index
    %c12_360 = arith.constant 12 : index
    %c0_361 = arith.constant 0 : index
    %399 = vector.load %arg8[%c0_359, %c12_360, %c0_361] : memref<2x48x32xf32, #tpu.memory_space<vmem>>, vector<1x16x32xf32>
    %400 = vector.shape_cast %399 : vector<1x16x32xf32> to vector<16x32xf32>
    %c1_362 = arith.constant 1 : index
    %c12_363 = arith.constant 12 : index
    %c0_364 = arith.constant 0 : index
    %401 = vector.load %arg8[%c1_362, %c12_363, %c0_364] : memref<2x48x32xf32, #tpu.memory_space<vmem>>, vector<1x16x32xf32>
    %402 = vector.shape_cast %401 : vector<1x16x32xf32> to vector<16x32xf32>
    %403 = tpu.concatenate %400, %402 in 0 : vector<16x32xf32>, vector<16x32xf32> -> vector<32x32xf32>
    %c9_365 = arith.constant 9 : index
    %c0_366 = arith.constant 0 : index
    %c0_367 = arith.constant 0 : index
    %404 = vector.load %arg5[%c9_365, %c0_366, %c0_367] : memref<11x32x8xf32, #tpu.memory_space<vmem>>, vector<1x32x8xf32>
    %405 = vector.shape_cast %404 : vector<1x32x8xf32> to vector<32x8xf32>
    %cst_368 = arith.constant dense<0.000000e+00> : vector<32x8xf32>
    %406 = tpu.matmul %403, %405, %cst_368 {dimension_numbers = #tpu.dot_dimension_numbers<[1], [0], [0], [1], [0, 0, 1, 1], [], []>} : vector<32x32xf32>, vector<32x8xf32>, vector<32x8xf32> -> vector<32x8xf32>
    %407 = arith.addf %398, %406 : vector<32x8xf32>
    %c0_369 = arith.constant 0 : index
    %c13_370 = arith.constant 13 : index
    %c0_371 = arith.constant 0 : index
    %408 = vector.load %arg8[%c0_369, %c13_370, %c0_371] : memref<2x48x32xf32, #tpu.memory_space<vmem>>, vector<1x16x32xf32>
    %409 = vector.shape_cast %408 : vector<1x16x32xf32> to vector<16x32xf32>
    %c1_372 = arith.constant 1 : index
    %c13_373 = arith.constant 13 : index
    %c0_374 = arith.constant 0 : index
    %410 = vector.load %arg8[%c1_372, %c13_373, %c0_374] : memref<2x48x32xf32, #tpu.memory_space<vmem>>, vector<1x16x32xf32>
    %411 = vector.shape_cast %410 : vector<1x16x32xf32> to vector<16x32xf32>
    %412 = tpu.concatenate %409, %411 in 0 : vector<16x32xf32>, vector<16x32xf32> -> vector<32x32xf32>
    %c10_375 = arith.constant 10 : index
    %c0_376 = arith.constant 0 : index
    %c0_377 = arith.constant 0 : index
    %413 = vector.load %arg5[%c10_375, %c0_376, %c0_377] : memref<11x32x8xf32, #tpu.memory_space<vmem>>, vector<1x32x8xf32>
    %414 = vector.shape_cast %413 : vector<1x32x8xf32> to vector<32x8xf32>
    %cst_378 = arith.constant dense<0.000000e+00> : vector<32x8xf32>
    %415 = tpu.matmul %412, %414, %cst_378 {dimension_numbers = #tpu.dot_dimension_numbers<[1], [0], [0], [1], [0, 0, 1, 1], [], []>} : vector<32x32xf32>, vector<32x8xf32>, vector<32x8xf32> -> vector<32x8xf32>
    %416 = arith.addf %407, %415 : vector<32x8xf32>
    %c0_379 = arith.constant 0 : index
    %c0_380 = arith.constant 0 : index
    %417 = vector.load %arg6[%c0_379, %c0_380] : memref<1x8xf32, #tpu.memory_space<vmem>>, vector<1x8xf32>
    %418 = vector.broadcast %417 : vector<1x8xf32> to vector<32x8xf32>
    %419 = arith.addf %416, %418 : vector<32x8xf32>
    %420 = vector.extract_strided_slice %419 {offsets = [0, 0], sizes = [16, 8], strides = [1, 1]} : vector<32x8xf32> to vector<16x8xf32>
    %cst_381 = arith.constant dense<0.000000e+00> : vector<8xf32>
    %421 = vector.multi_reduction <add>, %420, %cst_381 [0] : vector<16x8xf32> to vector<8xf32>
    %422 = vector.shape_cast %421 : vector<8xf32> to vector<1x8xf32>
    %cst_382 = arith.constant 1.600000e+01 : f32
    %423 = vector.broadcast %cst_382 : f32 to vector<1x8xf32>
    %424 = arith.divf %422, %423 : vector<1x8xf32>
    %425 = vector.extract_strided_slice %419 {offsets = [16, 0], sizes = [16, 8], strides = [1, 1]} : vector<32x8xf32> to vector<16x8xf32>
    %cst_383 = arith.constant dense<0.000000e+00> : vector<8xf32>
    %426 = vector.multi_reduction <add>, %425, %cst_383 [0] : vector<16x8xf32> to vector<8xf32>
    %427 = vector.shape_cast %426 : vector<8xf32> to vector<1x8xf32>
    %cst_384 = arith.constant 1.600000e+01 : f32
    %428 = vector.broadcast %cst_384 : f32 to vector<1x8xf32>
    %429 = arith.divf %427, %428 : vector<1x8xf32>
    %430 = tpu.concatenate %424, %429 in 0 : vector<1x8xf32>, vector<1x8xf32> -> vector<2x8xf32>
    %c0_385 = arith.constant 0 : index
    %c0_386 = arith.constant 0 : index
    %431 = vector.load %arg7[%c0_385, %c0_386] : memref<2x8xf32, #tpu.memory_space<vmem>>, vector<2x8xf32>
    tpu.vector_store %arg7[%c0_385, %c0_386], %430 {strides = array<i32>} : memref<2x8xf32, #tpu.memory_space<vmem>>, vector<2x8xf32>,
    return
  }
}

</mosaic_0001>

<llo_original>
// kernel: conv_model_forward.1
$region0: #{conv_model_forward.1}
  #allocation0 [shape = 'u32[]', space=smem, size = 0x4, offset = 0x4, fixed_abs, tag = 'smem constant byte address 0x4 - core index']
  #allocation1 [shape = 'u32[144,128]{1,0:T(1,128)}', space=vmem, size = 0x12000, scoped, tag = 'internal scratch']
  #allocation2 [shape = 'f32[2,48,32]{2,1,0:T(8,128)}', space=vmem, size = 0xc000, scoped, tag = 'scratch operand']
  #allocation3 [shape = 'f32[128,32]{1,0:T(8,128)}', space=vmem, size = 0x10000, scoped, tag = 'scratch operand']
  %s0 = inlined_call_operand.vmem [shape: f32[2,74,1], index: 0, kind: input, shape index: {}]
  %s1 = inlined_call_operand.vmem [shape: f32[11,1,32], index: 1, kind: input, shape index: {}]
  %s2 = inlined_call_operand.vmem [shape: f32[1,32], index: 2, kind: input, shape index: {}]
  %s3 = inlined_call_operand.vmem [shape: f32[11,32,32], index: 3, kind: input, shape index: {}]
  %s4 = inlined_call_operand.vmem [shape: f32[1,32], index: 4, kind: input, shape index: {}]
  %s5 = inlined_call_operand.vmem [shape: f32[11,32,8], index: 5, kind: input, shape index: {}]
  %s6 = inlined_call_operand.vmem [shape: f32[1,8], index: 6, kind: input, shape index: {}]
  %s7 = inlined_call_operand.hbm [shape: f32[2,8], index: 7, kind: output, shape index: {}]
  %s8 = sld [smem:[#allocation0]]
  $region38: #{conv_model_forward.1} parent=0
    _
  %s10 = ssub.s32 1, %s8
  %s11 = scalar_select 0, %s10, %s8
  $region1: #{conv_model_forward.1} parent=0
    #allocation4 [shape = 'u8[1024]{0}', space=vmem, size = 0x400, scoped, tag = 'output window, operand 0, single buffered']
    #allocation5 [shape = 's32[1]{0}', space=sflag, size = 0x4, scoped, tag = 'scoped memory for conv_model_forward.1']
    %12 = vsyncpa [#allocation5], 0
    // Predicated region
    $region2: #{conv_model_forward.1} parent=1 // pred_check
      _
    $region3: #{conv_model_forward.1} parent=1 // pred_check_branch
      %14 = sbr.rel (0) target = $region5
    $region4: #{conv_model_forward.1} parent=1 // pred_region
      _
    $region5: #{conv_model_forward.1} parent=1 // pred_fallthru
      _
    // Predicated region
    $region6: #{conv_model_forward.1} parent=1 // pred_check
      _
    $region7: #{conv_model_forward.1} parent=1 // pred_check_branch
      %16 = sbr.rel (0) target = $region9
    $region8: #{conv_model_forward.1} parent=1 // pred_region
      _
    $region9: #{conv_model_forward.1} parent=1 // pred_fallthru
      _
    // Predicated region
    $region10: #{conv_model_forward.1} parent=1 // pred_check
      _
    $region11: #{conv_model_forward.1} parent=1 // pred_check_branch
      %18 = sbr.rel (0) target = $region13
    $region12: #{conv_model_forward.1} parent=1 // pred_region
      _
    $region13: #{conv_model_forward.1} parent=1 // pred_fallthru
      _
    // Predicated region
    $region14: #{conv_model_forward.1} parent=1 // pred_check
      _
    $region15: #{conv_model_forward.1} parent=1 // pred_check_branch
      %20 = sbr.rel (0) target = $region17
    $region16: #{conv_model_forward.1} parent=1 // pred_region
      _
    $region17: #{conv_model_forward.1} parent=1 // pred_fallthru
      _
    // Predicated region
    $region18: #{conv_model_forward.1} parent=1 // pred_check
      _
    $region19: #{conv_model_forward.1} parent=1 // pred_check_branch
      %22 = sbr.rel (0) target = $region21
    $region20: #{conv_model_forward.1} parent=1 // pred_region
      _
    $region21: #{conv_model_forward.1} parent=1 // pred_fallthru
      _
    // Predicated region
    $region22: #{conv_model_forward.1} parent=1 // pred_check
      _
    $region23: #{conv_model_forward.1} parent=1 // pred_check_branch
      %24 = sbr.rel (0) target = $region25
    $region24: #{conv_model_forward.1} parent=1 // pred_region
      _
    $region25: #{conv_model_forward.1} parent=1 // pred_fallthru
      _
    // Predicated region
    $region26: #{conv_model_forward.1} parent=1 // pred_check
      _
    $region27: #{conv_model_forward.1} parent=1 // pred_check_branch
      %26 = sbr.rel (0) target = $region29
    $region28: #{conv_model_forward.1} parent=1 // pred_region
      _
    $region29: #{conv_model_forward.1} parent=1 // pred_fallthru
      _
    %v27 = vld [vmem:[%s0] sm:$0xff]
    %v28 = vld [vmem:[%s0 + $0x8] sm:$0xff]
    %v29 = vld [vmem:[%s0 + $0x10] sm:$0xff]
    %v30 = vld [vmem:[%s0 + $0x18] sm:$0xff]
    %v31 = vld [vmem:[%s0 + $0x20] sm:$0xff]
    %v32 = vld [vmem:[%s0 + $0x28] sm:$0xff]
    %v33 = vld [vmem:[%s0 + $0x30] sm:$0xff]
    %v34 = vld [vmem:[%s0 + $0x38] sm:$0xff]
    %v35 = vld [vmem:[%s1] sm:$0x1]
    %37 = vset.pattern.permute.xlu0 0
    %38 = vperm.xlu0 %37, %v27
    %v39 = vpop.permute.xlu0 %38
    %42 = vset.pattern.permute.xlu0 0
    %43 = vperm.xlu0 %42, %v28
    %v44 = vpop.permute.xlu0 %43
    %47 = vset.pattern.permute.xlu0 0
    %48 = vperm.xlu0 %47, %v29
    %v49 = vpop.permute.xlu0 %48
    %52 = vset.pattern.permute.xlu0 0
    %53 = vperm.xlu0 %52, %v30
    %v54 = vpop.permute.xlu0 %53
    %57 = vset.pattern.permute.xlu0 0
    %58 = vperm.xlu0 %57, %v31
    %v59 = vpop.permute.xlu0 %58
    %62 = vset.pattern.permute.xlu0 0
    %63 = vperm.xlu0 %62, %v32
    %v64 = vpop.permute.xlu0 %63
    %67 = vset.pattern.permute.xlu0 0
    %68 = vperm.xlu0 %67, %v33
    %v69 = vpop.permute.xlu0 %68
    %72 = vset.pattern.permute.xlu0 0
    %73 = vperm.xlu0 %72, %v34
    %v74 = vpop.permute.xlu0 %73
    %v77 = vlaneseq
    %v78 = vshrl.u32 %v77, 7
    %v79 = vsub.s32 0, %v78
    %v80 = vrot.slane %v35, %v79
    %v82 = vmul.f32 %v39, %v80
    %v83 = vmul.f32 %v44, %v80
    %v84 = vmul.f32 %v49, %v80
    %v85 = vmul.f32 %v54, %v80
    %v86 = vmul.f32 %v59, %v80
    %v87 = vmul.f32 %v64, %v80
    %v88 = vmul.f32 %v69, %v80
    %v89 = vmul.f32 %v74, %v80
    %v90 = vadd.f32 %v82, 0.0
    %v91 = vadd.f32 %v83, 0.0
    %v92 = vadd.f32 %v84, 0.0
    %v93 = vadd.f32 %v85, 0.0
    %v94 = vadd.f32 %v86, 0.0
    %v95 = vadd.f32 %v87, 0.0
    %v96 = vadd.f32 %v88, 0.0
    %v97 = vadd.f32 %v89, 0.0
    %v98 = vld [vmem:[%s0 + $0x1] sm:$0xff]
    %v99 = vld [vmem:[%s0 + $0x9] sm:$0xff]
    %v100 = vld [vmem:[%s0 + $0x11] sm:$0xff]
    %v101 = vld [vmem:[%s0 + $0x19] sm:$0xff]
    %v102 = vld [vmem:[%s0 + $0x21] sm:$0xff]
    %v103 = vld [vmem:[%s0 + $0x29] sm:$0xff]
    %v104 = vld [vmem:[%s0 + $0x31] sm:$0xff]
    %v105 = vld [vmem:[%s0 + $0x39] sm:$0xff]
    %s106 = scalar_lea.vmem %s1, 1
    %v107 = vld [vmem:[%s106] sm:$0x1]
    %109 = vset.pattern.permute.xlu0 0
    %110 = vperm.xlu0 %109, %v98
    %v111 = vpop.permute.xlu0 %110
    %114 = vset.pattern.permute.xlu0 0
    %115 = vperm.xlu0 %114, %v99
    %v116 = vpop.permute.xlu0 %115
    %119 = vset.pattern.permute.xlu0 0
    %120 = vperm.xlu0 %119, %v100
    %v121 = vpop.permute.xlu0 %120
    %124 = vset.pattern.permute.xlu0 0
    %125 = vperm.xlu0 %124, %v101
    %v126 = vpop.permute.xlu0 %125
    %129 = vset.pattern.permute.xlu0 0
    %130 = vperm.xlu0 %129, %v102
    %v131 = vpop.permute.xlu0 %130
    %134 = vset.pattern.permute.xlu0 0
    %135 = vperm.xlu0 %134, %v103
    %v136 = vpop.permute.xlu0 %135
    %139 = vset.pattern.permute.xlu0 0
    %140 = vperm.xlu0 %139, %v104
    %v141 = vpop.permute.xlu0 %140
    %144 = vset.pattern.permute.xlu0 0
    %145 = vperm.xlu0 %144, %v105
    %v146 = vpop.permute.xlu0 %145
    %v149 = vlaneseq
    %v150 = vshrl.u32 %v149, 7
    %v151 = vsub.s32 0, %v150
    %v152 = vrot.slane %v107, %v151
    %v154 = vmul.f32 %v111, %v152
    %v155 = vmul.f32 %v116, %v152
    %v156 = vmul.f32 %v121, %v152
    %v157 = vmul.f32 %v126, %v152
    %v158 = vmul.f32 %v131, %v152
    %v159 = vmul.f32 %v136, %v152
    %v160 = vmul.f32 %v141, %v152
    %v161 = vmul.f32 %v146, %v152
    %v162 = vadd.f32 %v90, %v154
    %v163 = vadd.f32 %v91, %v155
    %v164 = vadd.f32 %v92, %v156
    %v165 = vadd.f32 %v93, %v157
    %v166 = vadd.f32 %v94, %v158
    %v167 = vadd.f32 %v95, %v159
    %v168 = vadd.f32 %v96, %v160
    %v169 = vadd.f32 %v97, %v161
    %v170 = vld [vmem:[%s0 + $0x2] sm:$0xff]
    %v171 = vld [vmem:[%s0 + $0xa] sm:$0xff]
    %v172 = vld [vmem:[%s0 + $0x12] sm:$0xff]
    %v173 = vld [vmem:[%s0 + $0x1a] sm:$0xff]
    %v174 = vld [vmem:[%s0 + $0x22] sm:$0xff]
    %v175 = vld [vmem:[%s0 + $0x2a] sm:$0xff]
    %v176 = vld [vmem:[%s0 + $0x32] sm:$0xff]
    %v177 = vld [vmem:[%s0 + $0x3a] sm:$0xff]
    %s178 = scalar_lea.vmem %s1, 2
    %v179 = vld [vmem:[%s178] sm:$0x1]
    %181 = vset.pattern.permute.xlu0 0
    %182 = vperm.xlu0 %181, %v170
    %v183 = vpop.permute.xlu0 %182
    %186 = vset.pattern.permute.xlu0 0
    %187 = vperm.xlu0 %186, %v171
    %v188 = vpop.permute.xlu0 %187
    %191 = vset.pattern.permute.xlu0 0
    %192 = vperm.xlu0 %191, %v172
    %v193 = vpop.permute.xlu0 %192
    %196 = vset.pattern.permute.xlu0 0
    %197 = vperm.xlu0 %196, %v173
    %v198 = vpop.permute.xlu0 %197
    %201 = vset.pattern.permute.xlu0 0
    %202 = vperm.xlu0 %201, %v174
    %v203 = vpop.permute.xlu0 %202
    %206 = vset.pattern.permute.xlu0 0
    %207 = vperm.xlu0 %206, %v175
    %v208 = vpop.permute.xlu0 %207
    %211 = vset.pattern.permute.xlu0 0
    %212 = vperm.xlu0 %211, %v176
    %v213 = vpop.permute.xlu0 %212
    %216 = vset.pattern.permute.xlu0 0
    %217 = vperm.xlu0 %216, %v177
    %v218 = vpop.permute.xlu0 %217
    %v221 = vlaneseq
    %v222 = vshrl.u32 %v221, 7
    %v223 = vsub.s32 0, %v222
    %v224 = vrot.slane %v179, %v223
    %v226 = vmul.f32 %v183, %v224
    %v227 = vmul.f32 %v188, %v224
    %v228 = vmul.f32 %v193, %v224
    %v229 = vmul.f32 %v198, %v224
    %v230 = vmul.f32 %v203, %v224
    %v231 = vmul.f32 %v208, %v224
    %v232 = vmul.f32 %v213, %v224
    %v233 = vmul.f32 %v218, %v224
    %v234 = vadd.f32 %v162, %v226
    %v235 = vadd.f32 %v163, %v227
    %v236 = vadd.f32 %v164, %v228
    %v237 = vadd.f32 %v165, %v229
    %v238 = vadd.f32 %v166, %v230
    %v239 = vadd.f32 %v167, %v231
    %v240 = vadd.f32 %v168, %v232
    %v241 = vadd.f32 %v169, %v233
    %v242 = vld [vmem:[%s0 + $0x3] sm:$0xff]
    %v243 = vld [vmem:[%s0 + $0xb] sm:$0xff]
    %v244 = vld [vmem:[%s0 + $0x13] sm:$0xff]
    %v245 = vld [vmem:[%s0 + $0x1b] sm:$0xff]
    %v246 = vld [vmem:[%s0 + $0x23] sm:$0xff]
    %v247 = vld [vmem:[%s0 + $0x2b] sm:$0xff]
    %v248 = vld [vmem:[%s0 + $0x33] sm:$0xff]
    %v249 = vld [vmem:[%s0 + $0x3b] sm:$0xff]
    %s250 = scalar_lea.vmem %s1, 3
    %v251 = vld [vmem:[%s250] sm:$0x1]
    %253 = vset.pattern.permute.xlu0 0
    %254 = vperm.xlu0 %253, %v242
    %v255 = vpop.permute.xlu0 %254
    %258 = vset.pattern.permute.xlu0 0
    %259 = vperm.xlu0 %258, %v243
    %v260 = vpop.permute.xlu0 %259
    %263 = vset.pattern.permute.xlu0 0
    %264 = vperm.xlu0 %263, %v244
    %v265 = vpop.permute.xlu0 %264
    %268 = vset.pattern.permute.xlu0 0
    %269 = vperm.xlu0 %268, %v245
    %v270 = vpop.permute.xlu0 %269
    %273 = vset.pattern.permute.xlu0 0
    %274 = vperm.xlu0 %273, %v246
    %v275 = vpop.permute.xlu0 %274
    %278 = vset.pattern.permute.xlu0 0
    %279 = vperm.xlu0 %278, %v247
    %v280 = vpop.permute.xlu0 %279
    %283 = vset.pattern.permute.xlu0 0
    %284 = vperm.xlu0 %283, %v248
    %v285 = vpop.permute.xlu0 %284
    %288 = vset.pattern.permute.xlu0 0
    %289 = vperm.xlu0 %288, %v249
    %v290 = vpop.permute.xlu0 %289
    %v293 = vlaneseq
    %v294 = vshrl.u32 %v293, 7
    %v295 = vsub.s32 0, %v294
    %v296 = vrot.slane %v251, %v295
    %v298 = vmul.f32 %v255, %v296
    %v299 = vmul.f32 %v260, %v296
    %v300 = vmul.f32 %v265, %v296
    %v301 = vmul.f32 %v270, %v296
    %v302 = vmul.f32 %v275, %v296
    %v303 = vmul.f32 %v280, %v296
    %v304 = vmul.f32 %v285, %v296
    %v305 = vmul.f32 %v290, %v296
    %v306 = vadd.f32 %v234, %v298
    %v307 = vadd.f32 %v235, %v299
    %v308 = vadd.f32 %v236, %v300
    %v309 = vadd.f32 %v237, %v301
    %v310 = vadd.f32 %v238, %v302
    %v311 = vadd.f32 %v239, %v303
    %v312 = vadd.f32 %v240, %v304
    %v313 = vadd.f32 %v241, %v305
    %v314 = vld [vmem:[%s0 + $0x4] sm:$0xff]
    %v315 = vld [vmem:[%s0 + $0xc] sm:$0xff]
    %v316 = vld [vmem:[%s0 + $0x14] sm:$0xff]
    %v317 = vld [vmem:[%s0 + $0x1c] sm:$0xff]
    %v318 = vld [vmem:[%s0 + $0x24] sm:$0xff]
    %v319 = vld [vmem:[%s0 + $0x2c] sm:$0xff]
    %v320 = vld [vmem:[%s0 + $0x34] sm:$0xff]
    %v321 = vld [vmem:[%s0 + $0x3c] sm:$0xff]
    %s322 = scalar_lea.vmem %s1, 4
    %v323 = vld [vmem:[%s322] sm:$0x1]
    %325 = vset.pattern.permute.xlu0 0
    %326 = vperm.xlu0 %325, %v314
    %v327 = vpop.permute.xlu0 %326
    %330 = vset.pattern.permute.xlu0 0
    %331 = vperm.xlu0 %330, %v315
    %v332 = vpop.permute.xlu0 %331
    %335 = vset.pattern.permute.xlu0 0
    %336 = vperm.xlu0 %335, %v316
    %v337 = vpop.permute.xlu0 %336
    %340 = vset.pattern.permute.xlu0 0
    %341 = vperm.xlu0 %340, %v317
    %v342 = vpop.permute.xlu0 %341
    %345 = vset.pattern.permute.xlu0 0
    %346 = vperm.xlu0 %345, %v318
    %v347 = vpop.permute.xlu0 %346
    %350 = vset.pattern.permute.xlu0 0
    %351 = vperm.xlu0 %350, %v319
    %v352 = vpop.permute.xlu0 %351
    %355 = vset.pattern.permute.xlu0 0
    %356 = vperm.xlu0 %355, %v320
    %v357 = vpop.permute.xlu0 %356
    %360 = vset.pattern.permute.xlu0 0
    %361 = vperm.xlu0 %360, %v321
    %v362 = vpop.permute.xlu0 %361
    %v365 = vlaneseq
    %v366 = vshrl.u32 %v365, 7
    %v367 = vsub.s32 0, %v366
    %v368 = vrot.slane %v323, %v367
    %v370 = vmul.f32 %v327, %v368
    %v371 = vmul.f32 %v332, %v368
    %v372 = vmul.f32 %v337, %v368
    %v373 = vmul.f32 %v342, %v368
    %v374 = vmul.f32 %v347, %v368
    %v375 = vmul.f32 %v352, %v368
    %v376 = vmul.f32 %v357, %v368
    %v377 = vmul.f32 %v362, %v368
    %v378 = vadd.f32 %v306, %v370
    %v379 = vadd.f32 %v307, %v371
    %v380 = vadd.f32 %v308, %v372
    %v381 = vadd.f32 %v309, %v373
    %v382 = vadd.f32 %v310, %v374
    %v383 = vadd.f32 %v311, %v375
    %v384 = vadd.f32 %v312, %v376
    %v385 = vadd.f32 %v313, %v377
    %v386 = vld [vmem:[%s0 + $0x5] sm:$0xff]
    %v387 = vld [vmem:[%s0 + $0xd] sm:$0xff]
    %v388 = vld [vmem:[%s0 + $0x15] sm:$0xff]
    %v389 = vld [vmem:[%s0 + $0x1d] sm:$0xff]
    %v390 = vld [vmem:[%s0 + $0x25] sm:$0xff]
    %v391 = vld [vmem:[%s0 + $0x2d] sm:$0xff]
    %v392 = vld [vmem:[%s0 + $0x35] sm:$0xff]
    %v393 = vld [vmem:[%s0 + $0x3d] sm:$0xff]
    %s394 = scalar_lea.vmem %s1, 5
    %v395 = vld [vmem:[%s394] sm:$0x1]
    %397 = vset.pattern.permute.xlu0 0
    %398 = vperm.xlu0 %397, %v386
    %v399 = vpop.permute.xlu0 %398
    %402 = vset.pattern.permute.xlu0 0
    %403 = vperm.xlu0 %402, %v387
    %v404 = vpop.permute.xlu0 %403
    %407 = vset.pattern.permute.xlu0 0
    %408 = vperm.xlu0 %407, %v388
    %v409 = vpop.permute.xlu0 %408
    %412 = vset.pattern.permute.xlu0 0
    %413 = vperm.xlu0 %412, %v389
    %v414 = vpop.permute.xlu0 %413
    %417 = vset.pattern.permute.xlu0 0
    %418 = vperm.xlu0 %417, %v390
    %v419 = vpop.permute.xlu0 %418
    %422 = vset.pattern.permute.xlu0 0
    %423 = vperm.xlu0 %422, %v391
    %v424 = vpop.permute.xlu0 %423
    %427 = vset.pattern.permute.xlu0 0
    %428 = vperm.xlu0 %427, %v392
    %v429 = vpop.permute.xlu0 %428
    %432 = vset.pattern.permute.xlu0 0
    %433 = vperm.xlu0 %432, %v393
    %v434 = vpop.permute.xlu0 %433
    %v437 = vlaneseq
    %v438 = vshrl.u32 %v437, 7
    %v439 = vsub.s32 0, %v438
    %v440 = vrot.slane %v395, %v439
    %v442 = vmul.f32 %v399, %v440
    %v443 = vmul.f32 %v404, %v440
    %v444 = vmul.f32 %v409, %v440
    %v445 = vmul.f32 %v414, %v440
    %v446 = vmul.f32 %v419, %v440
    %v447 = vmul.f32 %v424, %v440
    %v448 = vmul.f32 %v429, %v440
    %v449 = vmul.f32 %v434, %v440
    %v450 = vadd.f32 %v378, %v442
    %v451 = vadd.f32 %v379, %v443
    %v452 = vadd.f32 %v380, %v444
    %v453 = vadd.f32 %v381, %v445
    %v454 = vadd.f32 %v382, %v446
    %v455 = vadd.f32 %v383, %v447
    %v456 = vadd.f32 %v384, %v448
    %v457 = vadd.f32 %v385, %v449
    %v458 = vld [vmem:[%s0 + $0x6] sm:$0xff]
    %v459 = vld [vmem:[%s0 + $0xe] sm:$0xff]
    %v460 = vld [vmem:[%s0 + $0x16] sm:$0xff]
    %v461 = vld [vmem:[%s0 + $0x1e] sm:$0xff]
    %v462 = vld [vmem:[%s0 + $0x26] sm:$0xff]
    %v463 = vld [vmem:[%s0 + $0x2e] sm:$0xff]
    %v464 = vld [vmem:[%s0 + $0x36] sm:$0xff]
    %v465 = vld [vmem:[%s0 + $0x3e] sm:$0xff]
    %s466 = scalar_lea.vmem %s1, 6
    %v467 = vld [vmem:[%s466] sm:$0x1]
    %469 = vset.pattern.permute.xlu0 0
    %470 = vperm.xlu0 %469, %v458
    %v471 = vpop.permute.xlu0 %470
    %474 = vset.pattern.permute.xlu0 0
    %475 = vperm.xlu0 %474, %v459
    %v476 = vpop.permute.xlu0 %475
    %479 = vset.pattern.permute.xlu0 0
    %480 = vperm.xlu0 %479, %v460
    %v481 = vpop.permute.xlu0 %480
    %484 = vset.pattern.permute.xlu0 0
    %485 = vperm.xlu0 %484, %v461
    %v486 = vpop.permute.xlu0 %485
    %489 = vset.pattern.permute.xlu0 0
    %490 = vperm.xlu0 %489, %v462
    %v491 = vpop.permute.xlu0 %490
    %494 = vset.pattern.permute.xlu0 0
    %495 = vperm.xlu0 %494, %v463
    %v496 = vpop.permute.xlu0 %495
    %499 = vset.pattern.permute.xlu0 0
    %500 = vperm.xlu0 %499, %v464
    %v501 = vpop.permute.xlu0 %500
    %504 = vset.pattern.permute.xlu0 0
    %505 = vperm.xlu0 %504, %v465
    %v506 = vpop.permute.xlu0 %505
    %v509 = vlaneseq
    %v510 = vshrl.u32 %v509, 7
    %v511 = vsub.s32 0, %v510
    %v512 = vrot.slane %v467, %v511
    %v514 = vmul.f32 %v471, %v512
    %v515 = vmul.f32 %v476, %v512
    %v516 = vmul.f32 %v481, %v512
    %v517 = vmul.f32 %v486, %v512
    %v518 = vmul.f32 %v491, %v512
    %v519 = vmul.f32 %v496, %v512
    %v520 = vmul.f32 %v501, %v512
    %v521 = vmul.f32 %v506, %v512
    %v522 = vadd.f32 %v450, %v514
    %v523 = vadd.f32 %v451, %v515
    %v524 = vadd.f32 %v452, %v516
    %v525 = vadd.f32 %v453, %v517
    %v526 = vadd.f32 %v454, %v518
    %v527 = vadd.f32 %v455, %v519
    %v528 = vadd.f32 %v456, %v520
    %v529 = vadd.f32 %v457, %v521
    %v530 = vld [vmem:[%s0 + $0x7] sm:$0xff]
    %v531 = vld [vmem:[%s0 + $0xf] sm:$0xff]
    %v532 = vld [vmem:[%s0 + $0x17] sm:$0xff]
    %v533 = vld [vmem:[%s0 + $0x1f] sm:$0xff]
    %v534 = vld [vmem:[%s0 + $0x27] sm:$0xff]
    %v535 = vld [vmem:[%s0 + $0x2f] sm:$0xff]
    %v536 = vld [vmem:[%s0 + $0x37] sm:$0xff]
    %v537 = vld [vmem:[%s0 + $0x3f] sm:$0xff]
    %s538 = scalar_lea.vmem %s1, 7
    %v539 = vld [vmem:[%s538] sm:$0x1]
    %541 = vset.pattern.permute.xlu0 0
    %542 = vperm.xlu0 %541, %v530
    %v543 = vpop.permute.xlu0 %542
    %546 = vset.pattern.permute.xlu0 0
    %547 = vperm.xlu0 %546, %v531
    %v548 = vpop.permute.xlu0 %547
    %551 = vset.pattern.permute.xlu0 0
    %552 = vperm.xlu0 %551, %v532
    %v553 = vpop.permute.xlu0 %552
    %556 = vset.pattern.permute.xlu0 0
    %557 = vperm.xlu0 %556, %v533
    %v558 = vpop.permute.xlu0 %557
    %561 = vset.pattern.permute.xlu0 0
    %562 = vperm.xlu0 %561, %v534
    %v563 = vpop.permute.xlu0 %562
    %566 = vset.pattern.permute.xlu0 0
    %567 = vperm.xlu0 %566, %v535
    %v568 = vpop.permute.xlu0 %567
    %571 = vset.pattern.permute.xlu0 0
    %572 = vperm.xlu0 %571, %v536
    %v573 = vpop.permute.xlu0 %572
    %576 = vset.pattern.permute.xlu0 0
    %577 = vperm.xlu0 %576, %v537
    %v578 = vpop.permute.xlu0 %577
    %v581 = vlaneseq
    %v582 = vshrl.u32 %v581, 7
    %v583 = vsub.s32 0, %v582
    %v584 = vrot.slane %v539, %v583
    %v586 = vmul.f32 %v543, %v584
    %v587 = vmul.f32 %v548, %v584
    %v588 = vmul.f32 %v553, %v584
    %v589 = vmul.f32 %v558, %v584
    %v590 = vmul.f32 %v563, %v584
    %v591 = vmul.f32 %v568, %v584
    %v592 = vmul.f32 %v573, %v584
    %v593 = vmul.f32 %v578, %v584
    %v594 = vadd.f32 %v522, %v586
    %v595 = vadd.f32 %v523, %v587
    %v596 = vadd.f32 %v524, %v588
    %v597 = vadd.f32 %v525, %v589
    %v598 = vadd.f32 %v526, %v590
    %v599 = vadd.f32 %v527, %v591
    %v600 = vadd.f32 %v528, %v592
    %v601 = vadd.f32 %v529, %v593
    %v602 = vld [vmem:[%s0 + $0x8] sm:$0xff]
    %v603 = vld [vmem:[%s0 + $0x10] sm:$0xff]
    %v604 = vld [vmem:[%s0 + $0x18] sm:$0xff]
    %v605 = vld [vmem:[%s0 + $0x20] sm:$0xff]
    %v606 = vld [vmem:[%s0 + $0x28] sm:$0xff]
    %v607 = vld [vmem:[%s0 + $0x30] sm:$0xff]
    %v608 = vld [vmem:[%s0 + $0x38] sm:$0xff]
    %v609 = vld [vmem:[%s0 + $0x40] sm:$0xff]
    %s610 = scalar_lea.vmem %s1, 8
    %v611 = vld [vmem:[%s610] sm:$0x1]
    %613 = vset.pattern.permute.xlu0 0
    %614 = vperm.xlu0 %613, %v602
    %v615 = vpop.permute.xlu0 %614
    %618 = vset.pattern.permute.xlu0 0
    %619 = vperm.xlu0 %618, %v603
    %v620 = vpop.permute.xlu0 %619
    %623 = vset.pattern.permute.xlu0 0
    %624 = vperm.xlu0 %623, %v604
    %v625 = vpop.permute.xlu0 %624
    %628 = vset.pattern.permute.xlu0 0
    %629 = vperm.xlu0 %628, %v605
    %v630 = vpop.permute.xlu0 %629
    %633 = vset.pattern.permute.xlu0 0
    %634 = vperm.xlu0 %633, %v606
    %v635 = vpop.permute.xlu0 %634
    %638 = vset.pattern.permute.xlu0 0
    %639 = vperm.xlu0 %638, %v607
    %v640 = vpop.permute.xlu0 %639
    %643 = vset.pattern.permute.xlu0 0
    %644 = vperm.xlu0 %643, %v608
    %v645 = vpop.permute.xlu0 %644
    %648 = vset.pattern.permute.xlu0 0
    %649 = vperm.xlu0 %648, %v609
    %v650 = vpop.permute.xlu0 %649
    %v653 = vlaneseq
    %v654 = vshrl.u32 %v653, 7
    %v655 = vsub.s32 0, %v654
    %v656 = vrot.slane %v611, %v655
    %v658 = vmul.f32 %v615, %v656
    %v659 = vmul.f32 %v620, %v656
    %v660 = vmul.f32 %v625, %v656
    %v661 = vmul.f32 %v630, %v656
    %v662 = vmul.f32 %v635, %v656
    %v663 = vmul.f32 %v640, %v656
    %v664 = vmul.f32 %v645, %v656
    %v665 = vmul.f32 %v650, %v656
    %v666 = vadd.f32 %v594, %v658
    %v667 = vadd.f32 %v595, %v659
    %v668 = vadd.f32 %v596, %v660
    %v669 = vadd.f32 %v597, %v661
    %v670 = vadd.f32 %v598, %v662
    %v671 = vadd.f32 %v599, %v663
    %v672 = vadd.f32 %v600, %v664
    %v673 = vadd.f32 %v601, %v665
    %v674 = vld [vmem:[%s0 + $0x9] sm:$0xff]
    %v675 = vld [vmem:[%s0 + $0x11] sm:$0xff]
    %v676 = vld [vmem:[%s0 + $0x19] sm:$0xff]
    %v677 = vld [vmem:[%s0 + $0x21] sm:$0xff]
    %v678 = vld [vmem:[%s0 + $0x29] sm:$0xff]
    %v679 = vld [vmem:[%s0 + $0x31] sm:$0xff]
    %v680 = vld [vmem:[%s0 + $0x39] sm:$0xff]
    %v681 = vld [vmem:[%s0 + $0x41] sm:$0xff]
    %s682 = scalar_lea.vmem %s1, 9
    %v683 = vld [vmem:[%s682] sm:$0x1]
    %685 = vset.pattern.permute.xlu0 0
    %686 = vperm.xlu0 %685, %v674
    %v687 = vpop.permute.xlu0 %686
    %690 = vset.pattern.permute.xlu0 0
    %691 = vperm.xlu0 %690, %v675
    %v692 = vpop.permute.xlu0 %691
    %695 = vset.pattern.permute.xlu0 0
    %696 = vperm.xlu0 %695, %v676
    %v697 = vpop.permute.xlu0 %696
    %700 = vset.pattern.permute.xlu0 0
    %701 = vperm.xlu0 %700, %v677
    %v702 = vpop.permute.xlu0 %701
    %705 = vset.pattern.permute.xlu0 0
    %706 = vperm.xlu0 %705, %v678
    %v707 = vpop.permute.xlu0 %706
    %710 = vset.pattern.permute.xlu0 0
    %711 = vperm.xlu0 %710, %v679
    %v712 = vpop.permute.xlu0 %711
    %715 = vset.pattern.permute.xlu0 0
    %716 = vperm.xlu0 %715, %v680
    %v717 = vpop.permute.xlu0 %716
    %720 = vset.pattern.permute.xlu0 0
    %721 = vperm.xlu0 %720, %v681
    %v722 = vpop.permute.xlu0 %721
    %v725 = vlaneseq
    %v726 = vshrl.u32 %v725, 7
    %v727 = vsub.s32 0, %v726
    %v728 = vrot.slane %v683, %v727
    %v730 = vmul.f32 %v687, %v728
    %v731 = vmul.f32 %v692, %v728
    %v732 = vmul.f32 %v697, %v728
    %v733 = vmul.f32 %v702, %v728
    %v734 = vmul.f32 %v707, %v728
    %v735 = vmul.f32 %v712, %v728
    %v736 = vmul.f32 %v717, %v728
    %v737 = vmul.f32 %v722, %v728
    %v738 = vadd.f32 %v666, %v730
    %v739 = vadd.f32 %v667, %v731
    %v740 = vadd.f32 %v668, %v732
    %v741 = vadd.f32 %v669, %v733
    %v742 = vadd.f32 %v670, %v734
    %v743 = vadd.f32 %v671, %v735
    %v744 = vadd.f32 %v672, %v736
    %v745 = vadd.f32 %v673, %v737
    %v746 = vld [vmem:[%s0 + $0xa] sm:$0xff]
    %v747 = vld [vmem:[%s0 + $0x12] sm:$0xff]
    %v748 = vld [vmem:[%s0 + $0x1a] sm:$0xff]
    %v749 = vld [vmem:[%s0 + $0x22] sm:$0xff]
    %v750 = vld [vmem:[%s0 + $0x2a] sm:$0xff]
    %v751 = vld [vmem:[%s0 + $0x32] sm:$0xff]
    %v752 = vld [vmem:[%s0 + $0x3a] sm:$0xff]
    %v753 = vld [vmem:[%s0 + $0x42] sm:$0xff]
    %s754 = scalar_lea.vmem %s1, 10
    %v755 = vld [vmem:[%s754] sm:$0x1]
    %757 = vset.pattern.permute.xlu0 0
    %758 = vperm.xlu0 %757, %v746
    %v759 = vpop.permute.xlu0 %758
    %762 = vset.pattern.permute.xlu0 0
    %763 = vperm.xlu0 %762, %v747
    %v764 = vpop.permute.xlu0 %763
    %767 = vset.pattern.permute.xlu0 0
    %768 = vperm.xlu0 %767, %v748
    %v769 = vpop.permute.xlu0 %768
    %772 = vset.pattern.permute.xlu0 0
    %773 = vperm.xlu0 %772, %v749
    %v774 = vpop.permute.xlu0 %773
    %777 = vset.pattern.permute.xlu0 0
    %778 = vperm.xlu0 %777, %v750
    %v779 = vpop.permute.xlu0 %778
    %782 = vset.pattern.permute.xlu0 0
    %783 = vperm.xlu0 %782, %v751
    %v784 = vpop.permute.xlu0 %783
    %787 = vset.pattern.permute.xlu0 0
    %788 = vperm.xlu0 %787, %v752
    %v789 = vpop.permute.xlu0 %788
    %792 = vset.pattern.permute.xlu0 0
    %793 = vperm.xlu0 %792, %v753
    %v794 = vpop.permute.xlu0 %793
    %v797 = vlaneseq
    %v798 = vshrl.u32 %v797, 7
    %v799 = vsub.s32 0, %v798
    %v800 = vrot.slane %v755, %v799
    %v802 = vmul.f32 %v759, %v800
    %v803 = vmul.f32 %v764, %v800
    %v804 = vmul.f32 %v769, %v800
    %v805 = vmul.f32 %v774, %v800
    %v806 = vmul.f32 %v779, %v800
    %v807 = vmul.f32 %v784, %v800
    %v808 = vmul.f32 %v789, %v800
    %v809 = vmul.f32 %v794, %v800
    %v810 = vadd.f32 %v738, %v802
    %v811 = vadd.f32 %v739, %v803
    %v812 = vadd.f32 %v740, %v804
    %v813 = vadd.f32 %v741, %v805
    %v814 = vadd.f32 %v742, %v806
    %v815 = vadd.f32 %v743, %v807
    %v816 = vadd.f32 %v744, %v808
    %v817 = vadd.f32 %v745, %v809
    %s818 = scalar_lea.vmem %s0, 80
    %v819 = vld [vmem:[%s818] sm:$0xff]
    %v820 = vld [vmem:[%s818 + $0x8] sm:$0xff]
    %v821 = vld [vmem:[%s818 + $0x10] sm:$0xff]
    %v822 = vld [vmem:[%s818 + $0x18] sm:$0xff]
    %v823 = vld [vmem:[%s818 + $0x20] sm:$0xff]
    %v824 = vld [vmem:[%s818 + $0x28] sm:$0xff]
    %v825 = vld [vmem:[%s818 + $0x30] sm:$0xff]
    %v826 = vld [vmem:[%s818 + $0x38] sm:$0xff]
    %828 = vset.pattern.permute.xlu0 0
    %829 = vperm.xlu0 %828, %v819
    %v830 = vpop.permute.xlu0 %829
    %833 = vset.pattern.permute.xlu0 0
    %834 = vperm.xlu0 %833, %v820
    %v835 = vpop.permute.xlu0 %834
    %838 = vset.pattern.permute.xlu0 0
    %839 = vperm.xlu0 %838, %v821
    %v840 = vpop.permute.xlu0 %839
    %843 = vset.pattern.permute.xlu0 0
    %844 = vperm.xlu0 %843, %v822
    %v845 = vpop.permute.xlu0 %844
    %848 = vset.pattern.permute.xlu0 0
    %849 = vperm.xlu0 %848, %v823
    %v850 = vpop.permute.xlu0 %849
    %853 = vset.pattern.permute.xlu0 0
    %854 = vperm.xlu0 %853, %v824
    %v855 = vpop.permute.xlu0 %854
    %858 = vset.pattern.permute.xlu0 0
    %859 = vperm.xlu0 %858, %v825
    %v860 = vpop.permute.xlu0 %859
    %863 = vset.pattern.permute.xlu0 0
    %864 = vperm.xlu0 %863, %v826
    %v865 = vpop.permute.xlu0 %864
    %v867 = vmul.f32 %v830, %v80
    %v868 = vmul.f32 %v835, %v80
    %v869 = vmul.f32 %v840, %v80
    %v870 = vmul.f32 %v845, %v80
    %v871 = vmul.f32 %v850, %v80
    %v872 = vmul.f32 %v855, %v80
    %v873 = vmul.f32 %v860, %v80
    %v874 = vmul.f32 %v865, %v80
    %v875 = vadd.f32 %v867, 0.0
    %v876 = vadd.f32 %v868, 0.0
    %v877 = vadd.f32 %v869, 0.0
    %v878 = vadd.f32 %v870, 0.0
    %v879 = vadd.f32 %v871, 0.0
    %v880 = vadd.f32 %v872, 0.0
    %v881 = vadd.f32 %v873, 0.0
    %v882 = vadd.f32 %v874, 0.0
    %v883 = vld [vmem:[%s818 + $0x1] sm:$0xff]
    %v884 = vld [vmem:[%s818 + $0x9] sm:$0xff]
    %v885 = vld [vmem:[%s818 + $0x11] sm:$0xff]
    %v886 = vld [vmem:[%s818 + $0x19] sm:$0xff]
    %v887 = vld [vmem:[%s818 + $0x21] sm:$0xff]
    %v888 = vld [vmem:[%s818 + $0x29] sm:$0xff]
    %v889 = vld [vmem:[%s818 + $0x31] sm:$0xff]
    %v890 = vld [vmem:[%s818 + $0x39] sm:$0xff]
    %892 = vset.pattern.permute.xlu0 0
    %893 = vperm.xlu0 %892, %v883
    %v894 = vpop.permute.xlu0 %893
    %897 = vset.pattern.permute.xlu0 0
    %898 = vperm.xlu0 %897, %v884
    %v899 = vpop.permute.xlu0 %898
    %902 = vset.pattern.permute.xlu0 0
    %903 = vperm.xlu0 %902, %v885
    %v904 = vpop.permute.xlu0 %903
    %907 = vset.pattern.permute.xlu0 0
    %908 = vperm.xlu0 %907, %v886
    %v909 = vpop.permute.xlu0 %908
    %912 = vset.pattern.permute.xlu0 0
    %913 = vperm.xlu0 %912, %v887
    %v914 = vpop.permute.xlu0 %913
    %917 = vset.pattern.permute.xlu0 0
    %918 = vperm.xlu0 %917, %v888
    %v919 = vpop.permute.xlu0 %918
    %922 = vset.pattern.permute.xlu0 0
    %923 = vperm.xlu0 %922, %v889
    %v924 = vpop.permute.xlu0 %923
    %927 = vset.pattern.permute.xlu0 0
    %928 = vperm.xlu0 %927, %v890
    %v929 = vpop.permute.xlu0 %928
    %v931 = vmul.f32 %v894, %v152
    %v932 = vmul.f32 %v899, %v152
    %v933 = vmul.f32 %v904, %v152
    %v934 = vmul.f32 %v909, %v152
    %v935 = vmul.f32 %v914, %v152
    %v936 = vmul.f32 %v919, %v152
    %v937 = vmul.f32 %v924, %v152
    %v938 = vmul.f32 %v929, %v152
    %v939 = vadd.f32 %v875, %v931
    %v940 = vadd.f32 %v876, %v932
    %v941 = vadd.f32 %v877, %v933
    %v942 = vadd.f32 %v878, %v934
    %v943 = vadd.f32 %v879, %v935
    %v944 = vadd.f32 %v880, %v936
    %v945 = vadd.f32 %v881, %v937
    %v946 = vadd.f32 %v882, %v938
    %v947 = vld [vmem:[%s818 + $0x2] sm:$0xff]
    %v948 = vld [vmem:[%s818 + $0xa] sm:$0xff]
    %v949 = vld [vmem:[%s818 + $0x12] sm:$0xff]
    %v950 = vld [vmem:[%s818 + $0x1a] sm:$0xff]
    %v951 = vld [vmem:[%s818 + $0x22] sm:$0xff]
    %v952 = vld [vmem:[%s818 + $0x2a] sm:$0xff]
    %v953 = vld [vmem:[%s818 + $0x32] sm:$0xff]
    %v954 = vld [vmem:[%s818 + $0x3a] sm:$0xff]
    %956 = vset.pattern.permute.xlu0 0
    %957 = vperm.xlu0 %956, %v947
    %v958 = vpop.permute.xlu0 %957
    %961 = vset.pattern.permute.xlu0 0
    %962 = vperm.xlu0 %961, %v948
    %v963 = vpop.permute.xlu0 %962
    %966 = vset.pattern.permute.xlu0 0
    %967 = vperm.xlu0 %966, %v949
    %v968 = vpop.permute.xlu0 %967
    %971 = vset.pattern.permute.xlu0 0
    %972 = vperm.xlu0 %971, %v950
    %v973 = vpop.permute.xlu0 %972
    %976 = vset.pattern.permute.xlu0 0
    %977 = vperm.xlu0 %976, %v951
    %v978 = vpop.permute.xlu0 %977
    %981 = vset.pattern.permute.xlu0 0
    %982 = vperm.xlu0 %981, %v952
    %v983 = vpop.permute.xlu0 %982
    %986 = vset.pattern.permute.xlu0 0
    %987 = vperm.xlu0 %986, %v953
    %v988 = vpop.permute.xlu0 %987
    %991 = vset.pattern.permute.xlu0 0
    %992 = vperm.xlu0 %991, %v954
    %v993 = vpop.permute.xlu0 %992
    %v995 = vmul.f32 %v958, %v224
    %v996 = vmul.f32 %v963, %v224
    %v997 = vmul.f32 %v968, %v224
    %v998 = vmul.f32 %v973, %v224
    %v999 = vmul.f32 %v978, %v224
    %v1000 = vmul.f32 %v983, %v224
    %v1001 = vmul.f32 %v988, %v224
    %v1002 = vmul.f32 %v993, %v224
    %v1003 = vadd.f32 %v939, %v995
    %v1004 = vadd.f32 %v940, %v996
    %v1005 = vadd.f32 %v941, %v997
    %v1006 = vadd.f32 %v942, %v998
    %v1007 = vadd.f32 %v943, %v999
    %v1008 = vadd.f32 %v944, %v1000
    %v1009 = vadd.f32 %v945, %v1001
    %v1010 = vadd.f32 %v946, %v1002
    %v1011 = vld [vmem:[%s818 + $0x3] sm:$0xff]
    %v1012 = vld [vmem:[%s818 + $0xb] sm:$0xff]
    %v1013 = vld [vmem:[%s818 + $0x13] sm:$0xff]
    %v1014 = vld [vmem:[%s818 + $0x1b] sm:$0xff]
    %v1015 = vld [vmem:[%s818 + $0x23] sm:$0xff]
    %v1016 = vld [vmem:[%s818 + $0x2b] sm:$0xff]
    %v1017 = vld [vmem:[%s818 + $0x33] sm:$0xff]
    %v1018 = vld [vmem:[%s818 + $0x3b] sm:$0xff]
    %1020 = vset.pattern.permute.xlu0 0
    %1021 = vperm.xlu0 %1020, %v1011
    %v1022 = vpop.permute.xlu0 %1021
    %1025 = vset.pattern.permute.xlu0 0
    %1026 = vperm.xlu0 %1025, %v1012
    %v1027 = vpop.permute.xlu0 %1026
    %1030 = vset.pattern.permute.xlu0 0
    %1031 = vperm.xlu0 %1030, %v1013
    %v1032 = vpop.permute.xlu0 %1031
    %1035 = vset.pattern.permute.xlu0 0
    %1036 = vperm.xlu0 %1035, %v1014
    %v1037 = vpop.permute.xlu0 %1036
    %1040 = vset.pattern.permute.xlu0 0
    %1041 = vperm.xlu0 %1040, %v1015
    %v1042 = vpop.permute.xlu0 %1041
    %1045 = vset.pattern.permute.xlu0 0
    %1046 = vperm.xlu0 %1045, %v1016
    %v1047 = vpop.permute.xlu0 %1046
    %1050 = vset.pattern.permute.xlu0 0
    %1051 = vperm.xlu0 %1050, %v1017
    %v1052 = vpop.permute.xlu0 %1051
    %1055 = vset.pattern.permute.xlu0 0
    %1056 = vperm.xlu0 %1055, %v1018
    %v1057 = vpop.permute.xlu0 %1056
    %v1059 = vmul.f32 %v1022, %v296
    %v1060 = vmul.f32 %v1027, %v296
    %v1061 = vmul.f32 %v1032, %v296
    %v1062 = vmul.f32 %v1037, %v296
    %v1063 = vmul.f32 %v1042, %v296
    %v1064 = vmul.f32 %v1047, %v296
    %v1065 = vmul.f32 %v1052, %v296
    %v1066 = vmul.f32 %v1057, %v296
    %v1067 = vadd.f32 %v1003, %v1059
    %v1068 = vadd.f32 %v1004, %v1060
    %v1069 = vadd.f32 %v1005, %v1061
    %v1070 = vadd.f32 %v1006, %v1062
    %v1071 = vadd.f32 %v1007, %v1063
    %v1072 = vadd.f32 %v1008, %v1064
    %v1073 = vadd.f32 %v1009, %v1065
    %v1074 = vadd.f32 %v1010, %v1066
    %v1075 = vld [vmem:[%s818 + $0x4] sm:$0xff]
    %v1076 = vld [vmem:[%s818 + $0xc] sm:$0xff]
    %v1077 = vld [vmem:[%s818 + $0x14] sm:$0xff]
    %v1078 = vld [vmem:[%s818 + $0x1c] sm:$0xff]
    %v1079 = vld [vmem:[%s818 + $0x24] sm:$0xff]
    %v1080 = vld [vmem:[%s818 + $0x2c] sm:$0xff]
    %v1081 = vld [vmem:[%s818 + $0x34] sm:$0xff]
    %v1082 = vld [vmem:[%s818 + $0x3c] sm:$0xff]
    %1084 = vset.pattern.permute.xlu0 0
    %1085 = vperm.xlu0 %1084, %v1075
    %v1086 = vpop.permute.xlu0 %1085
    %1089 = vset.pattern.permute.xlu0 0
    %1090 = vperm.xlu0 %1089, %v1076
    %v1091 = vpop.permute.xlu0 %1090
    %1094 = vset.pattern.permute.xlu0 0
    %1095 = vperm.xlu0 %1094, %v1077
    %v1096 = vpop.permute.xlu0 %1095
    %1099 = vset.pattern.permute.xlu0 0
    %1100 = vperm.xlu0 %1099, %v1078
    %v1101 = vpop.permute.xlu0 %1100
    %1104 = vset.pattern.permute.xlu0 0
    %1105 = vperm.xlu0 %1104, %v1079
    %v1106 = vpop.permute.xlu0 %1105
    %1109 = vset.pattern.permute.xlu0 0
    %1110 = vperm.xlu0 %1109, %v1080
    %v1111 = vpop.permute.xlu0 %1110
    %1114 = vset.pattern.permute.xlu0 0
    %1115 = vperm.xlu0 %1114, %v1081
    %v1116 = vpop.permute.xlu0 %1115
    %1119 = vset.pattern.permute.xlu0 0
    %1120 = vperm.xlu0 %1119, %v1082
    %v1121 = vpop.permute.xlu0 %1120
    %v1123 = vmul.f32 %v1086, %v368
    %v1124 = vmul.f32 %v1091, %v368
    %v1125 = vmul.f32 %v1096, %v368
    %v1126 = vmul.f32 %v1101, %v368
    %v1127 = vmul.f32 %v1106, %v368
    %v1128 = vmul.f32 %v1111, %v368
    %v1129 = vmul.f32 %v1116, %v368
    %v1130 = vmul.f32 %v1121, %v368
    %v1131 = vadd.f32 %v1067, %v1123
    %v1132 = vadd.f32 %v1068, %v1124
    %v1133 = vadd.f32 %v1069, %v1125
    %v1134 = vadd.f32 %v1070, %v1126
    %v1135 = vadd.f32 %v1071, %v1127
    %v1136 = vadd.f32 %v1072, %v1128
    %v1137 = vadd.f32 %v1073, %v1129
    %v1138 = vadd.f32 %v1074, %v1130
    %v1139 = vld [vmem:[%s818 + $0x5] sm:$0xff]
    %v1140 = vld [vmem:[%s818 + $0xd] sm:$0xff]
    %v1141 = vld [vmem:[%s818 + $0x15] sm:$0xff]
    %v1142 = vld [vmem:[%s818 + $0x1d] sm:$0xff]
    %v1143 = vld [vmem:[%s818 + $0x25] sm:$0xff]
    %v1144 = vld [vmem:[%s818 + $0x2d] sm:$0xff]
    %v1145 = vld [vmem:[%s818 + $0x35] sm:$0xff]
    %v1146 = vld [vmem:[%s818 + $0x3d] sm:$0xff]
    %1148 = vset.pattern.permute.xlu0 0
    %1149 = vperm.xlu0 %1148, %v1139
    %v1150 = vpop.permute.xlu0 %1149
    %1153 = vset.pattern.permute.xlu0 0
    %1154 = vperm.xlu0 %1153, %v1140
    %v1155 = vpop.permute.xlu0 %1154
    %1158 = vset.pattern.permute.xlu0 0
    %1159 = vperm.xlu0 %1158, %v1141
    %v1160 = vpop.permute.xlu0 %1159
    %1163 = vset.pattern.permute.xlu0 0
    %1164 = vperm.xlu0 %1163, %v1142
    %v1165 = vpop.permute.xlu0 %1164
    %1168 = vset.pattern.permute.xlu0 0
    %1169 = vperm.xlu0 %1168, %v1143
    %v1170 = vpop.permute.xlu0 %1169
    %1173 = vset.pattern.permute.xlu0 0
    %1174 = vperm.xlu0 %1173, %v1144
    %v1175 = vpop.permute.xlu0 %1174
    %1178 = vset.pattern.permute.xlu0 0
    %1179 = vperm.xlu0 %1178, %v1145
    %v1180 = vpop.permute.xlu0 %1179
    %1183 = vset.pattern.permute.xlu0 0
    %1184 = vperm.xlu0 %1183, %v1146
    %v1185 = vpop.permute.xlu0 %1184
    %v1187 = vmul.f32 %v1150, %v440
    %v1188 = vmul.f32 %v1155, %v440
    %v1189 = vmul.f32 %v1160, %v440
    %v1190 = vmul.f32 %v1165, %v440
    %v1191 = vmul.f32 %v1170, %v440
    %v1192 = vmul.f32 %v1175, %v440
    %v1193 = vmul.f32 %v1180, %v440
    %v1194 = vmul.f32 %v1185, %v440
    %v1195 = vadd.f32 %v1131, %v1187
    %v1196 = vadd.f32 %v1132, %v1188
    %v1197 = vadd.f32 %v1133, %v1189
    %v1198 = vadd.f32 %v1134, %v1190
    %v1199 = vadd.f32 %v1135, %v1191
    %v1200 = vadd.f32 %v1136, %v1192
    %v1201 = vadd.f32 %v1137, %v1193
    %v1202 = vadd.f32 %v1138, %v1194
    %v1203 = vld [vmem:[%s818 + $0x6] sm:$0xff]
    %v1204 = vld [vmem:[%s818 + $0xe] sm:$0xff]
    %v1205 = vld [vmem:[%s818 + $0x16] sm:$0xff]
    %v1206 = vld [vmem:[%s818 + $0x1e] sm:$0xff]
    %v1207 = vld [vmem:[%s818 + $0x26] sm:$0xff]
    %v1208 = vld [vmem:[%s818 + $0x2e] sm:$0xff]
    %v1209 = vld [vmem:[%s818 + $0x36] sm:$0xff]
    %v1210 = vld [vmem:[%s818 + $0x3e] sm:$0xff]
    %1212 = vset.pattern.permute.xlu0 0
    %1213 = vperm.xlu0 %1212, %v1203
    %v1214 = vpop.permute.xlu0 %1213
    %1217 = vset.pattern.permute.xlu0 0
    %1218 = vperm.xlu0 %1217, %v1204
    %v1219 = vpop.permute.xlu0 %1218
    %1222 = vset.pattern.permute.xlu0 0
    %1223 = vperm.xlu0 %1222, %v1205
    %v1224 = vpop.permute.xlu0 %1223
    %1227 = vset.pattern.permute.xlu0 0
    %1228 = vperm.xlu0 %1227, %v1206
    %v1229 = vpop.permute.xlu0 %1228
    %1232 = vset.pattern.permute.xlu0 0
    %1233 = vperm.xlu0 %1232, %v1207
    %v1234 = vpop.permute.xlu0 %1233
    %1237 = vset.pattern.permute.xlu0 0
    %1238 = vperm.xlu0 %1237, %v1208
    %v1239 = vpop.permute.xlu0 %1238
    %1242 = vset.pattern.permute.xlu0 0
    %1243 = vperm.xlu0 %1242, %v1209
    %v1244 = vpop.permute.xlu0 %1243
    %1247 = vset.pattern.permute.xlu0 0
    %1248 = vperm.xlu0 %1247, %v1210
    %v1249 = vpop.permute.xlu0 %1248
    %v1251 = vmul.f32 %v1214, %v512
    %v1252 = vmul.f32 %v1219, %v512
    %v1253 = vmul.f32 %v1224, %v512
    %v1254 = vmul.f32 %v1229, %v512
    %v1255 = vmul.f32 %v1234, %v512
    %v1256 = vmul.f32 %v1239, %v512
    %v1257 = vmul.f32 %v1244, %v512
    %v1258 = vmul.f32 %v1249, %v512
    %v1259 = vadd.f32 %v1195, %v1251
    %v1260 = vadd.f32 %v1196, %v1252
    %v1261 = vadd.f32 %v1197, %v1253
    %v1262 = vadd.f32 %v1198, %v1254
    %v1263 = vadd.f32 %v1199, %v1255
    %v1264 = vadd.f32 %v1200, %v1256
    %v1265 = vadd.f32 %v1201, %v1257
    %v1266 = vadd.f32 %v1202, %v1258
    %v1267 = vld [vmem:[%s818 + $0x7] sm:$0xff]
    %v1268 = vld [vmem:[%s818 + $0xf] sm:$0xff]
    %v1269 = vld [vmem:[%s818 + $0x17] sm:$0xff]
    %v1270 = vld [vmem:[%s818 + $0x1f] sm:$0xff]
    %v1271 = vld [vmem:[%s818 + $0x27] sm:$0xff]
    %v1272 = vld [vmem:[%s818 + $0x2f] sm:$0xff]
    %v1273 = vld [vmem:[%s818 + $0x37] sm:$0xff]
    %v1274 = vld [vmem:[%s818 + $0x3f] sm:$0xff]
    %1276 = vset.pattern.permute.xlu0 0
    %1277 = vperm.xlu0 %1276, %v1267
    %v1278 = vpop.permute.xlu0 %1277
    %1281 = vset.pattern.permute.xlu0 0
    %1282 = vperm.xlu0 %1281, %v1268
    %v1283 = vpop.permute.xlu0 %1282
    %1286 = vset.pattern.permute.xlu0 0
    %1287 = vperm.xlu0 %1286, %v1269
    %v1288 = vpop.permute.xlu0 %1287
    %1291 = vset.pattern.permute.xlu0 0
    %1292 = vperm.xlu0 %1291, %v1270
    %v1293 = vpop.permute.xlu0 %1292
    %1296 = vset.pattern.permute.xlu0 0
    %1297 = vperm.xlu0 %1296, %v1271
    %v1298 = vpop.permute.xlu0 %1297
    %1301 = vset.pattern.permute.xlu0 0
    %1302 = vperm.xlu0 %1301, %v1272
    %v1303 = vpop.permute.xlu0 %1302
    %1306 = vset.pattern.permute.xlu0 0
    %1307 = vperm.xlu0 %1306, %v1273
    %v1308 = vpop.permute.xlu0 %1307
    %1311 = vset.pattern.permute.xlu0 0
    %1312 = vperm.xlu0 %1311, %v1274
    %v1313 = vpop.permute.xlu0 %1312
    %v1315 = vmul.f32 %v1278, %v584
    %v1316 = vmul.f32 %v1283, %v584
    %v1317 = vmul.f32 %v1288, %v584
    %v1318 = vmul.f32 %v1293, %v584
    %v1319 = vmul.f32 %v1298, %v584
    %v1320 = vmul.f32 %v1303, %v584
    %v1321 = vmul.f32 %v1308, %v584
    %v1322 = vmul.f32 %v1313, %v584
    %v1323 = vadd.f32 %v1259, %v1315
    %v1324 = vadd.f32 %v1260, %v1316
    %v1325 = vadd.f32 %v1261, %v1317
    %v1326 = vadd.f32 %v1262, %v1318
    %v1327 = vadd.f32 %v1263, %v1319
    %v1328 = vadd.f32 %v1264, %v1320
    %v1329 = vadd.f32 %v1265, %v1321
    %v1330 = vadd.f32 %v1266, %v1322
    %v1331 = vld [vmem:[%s818 + $0x8] sm:$0xff]
    %v1332 = vld [vmem:[%s818 + $0x10] sm:$0xff]
    %v1333 = vld [vmem:[%s818 + $0x18] sm:$0xff]
    %v1334 = vld [vmem:[%s818 + $0x20] sm:$0xff]
    %v1335 = vld [vmem:[%s818 + $0x28] sm:$0xff]
    %v1336 = vld [vmem:[%s818 + $0x30] sm:$0xff]
    %v1337 = vld [vmem:[%s818 + $0x38] sm:$0xff]
    %v1338 = vld [vmem:[%s818 + $0x40] sm:$0xff]
    %1340 = vset.pattern.permute.xlu0 0
    %1341 = vperm.xlu0 %1340, %v1331
    %v1342 = vpop.permute.xlu0 %1341
    %1345 = vset.pattern.permute.xlu0 0
    %1346 = vperm.xlu0 %1345, %v1332
    %v1347 = vpop.permute.xlu0 %1346
    %1350 = vset.pattern.permute.xlu0 0
    %1351 = vperm.xlu0 %1350, %v1333
    %v1352 = vpop.permute.xlu0 %1351
    %1355 = vset.pattern.permute.xlu0 0
    %1356 = vperm.xlu0 %1355, %v1334
    %v1357 = vpop.permute.xlu0 %1356
    %1360 = vset.pattern.permute.xlu0 0
    %1361 = vperm.xlu0 %1360, %v1335
    %v1362 = vpop.permute.xlu0 %1361
    %1365 = vset.pattern.permute.xlu0 0
    %1366 = vperm.xlu0 %1365, %v1336
    %v1367 = vpop.permute.xlu0 %1366
    %1370 = vset.pattern.permute.xlu0 0
    %1371 = vperm.xlu0 %1370, %v1337
    %v1372 = vpop.permute.xlu0 %1371
    %1375 = vset.pattern.permute.xlu0 0
    %1376 = vperm.xlu0 %1375, %v1338
    %v1377 = vpop.permute.xlu0 %1376
    %v1379 = vmul.f32 %v1342, %v656
    %v1380 = vmul.f32 %v1347, %v656
    %v1381 = vmul.f32 %v1352, %v656
    %v1382 = vmul.f32 %v1357, %v656
    %v1383 = vmul.f32 %v1362, %v656
    %v1384 = vmul.f32 %v1367, %v656
    %v1385 = vmul.f32 %v1372, %v656
    %v1386 = vmul.f32 %v1377, %v656
    %v1387 = vadd.f32 %v1323, %v1379
    %v1388 = vadd.f32 %v1324, %v1380
    %v1389 = vadd.f32 %v1325, %v1381
    %v1390 = vadd.f32 %v1326, %v1382
    %v1391 = vadd.f32 %v1327, %v1383
    %v1392 = vadd.f32 %v1328, %v1384
    %v1393 = vadd.f32 %v1329, %v1385
    %v1394 = vadd.f32 %v1330, %v1386
    %v1395 = vld [vmem:[%s818 + $0x9] sm:$0xff]
    %v1396 = vld [vmem:[%s818 + $0x11] sm:$0xff]
    %v1397 = vld [vmem:[%s818 + $0x19] sm:$0xff]
    %v1398 = vld [vmem:[%s818 + $0x21] sm:$0xff]
    %v1399 = vld [vmem:[%s818 + $0x29] sm:$0xff]
    %v1400 = vld [vmem:[%s818 + $0x31] sm:$0xff]
    %v1401 = vld [vmem:[%s818 + $0x39] sm:$0xff]
    %v1402 = vld [vmem:[%s818 + $0x41] sm:$0xff]
    %1404 = vset.pattern.permute.xlu0 0
    %1405 = vperm.xlu0 %1404, %v1395
    %v1406 = vpop.permute.xlu0 %1405
    %1409 = vset.pattern.permute.xlu0 0
    %1410 = vperm.xlu0 %1409, %v1396
    %v1411 = vpop.permute.xlu0 %1410
    %1414 = vset.pattern.permute.xlu0 0
    %1415 = vperm.xlu0 %1414, %v1397
    %v1416 = vpop.permute.xlu0 %1415
    %1419 = vset.pattern.permute.xlu0 0
    %1420 = vperm.xlu0 %1419, %v1398
    %v1421 = vpop.permute.xlu0 %1420
    %1424 = vset.pattern.permute.xlu0 0
    %1425 = vperm.xlu0 %1424, %v1399
    %v1426 = vpop.permute.xlu0 %1425
    %1429 = vset.pattern.permute.xlu0 0
    %1430 = vperm.xlu0 %1429, %v1400
    %v1431 = vpop.permute.xlu0 %1430
    %1434 = vset.pattern.permute.xlu0 0
    %1435 = vperm.xlu0 %1434, %v1401
    %v1436 = vpop.permute.xlu0 %1435
    %1439 = vset.pattern.permute.xlu0 0
    %1440 = vperm.xlu0 %1439, %v1402
    %v1441 = vpop.permute.xlu0 %1440
    %v1443 = vmul.f32 %v1406, %v728
    %v1444 = vmul.f32 %v1411, %v728
    %v1445 = vmul.f32 %v1416, %v728
    %v1446 = vmul.f32 %v1421, %v728
    %v1447 = vmul.f32 %v1426, %v728
    %v1448 = vmul.f32 %v1431, %v728
    %v1449 = vmul.f32 %v1436, %v728
    %v1450 = vmul.f32 %v1441, %v728
    %v1451 = vadd.f32 %v1387, %v1443
    %v1452 = vadd.f32 %v1388, %v1444
    %v1453 = vadd.f32 %v1389, %v1445
    %v1454 = vadd.f32 %v1390, %v1446
    %v1455 = vadd.f32 %v1391, %v1447
    %v1456 = vadd.f32 %v1392, %v1448
    %v1457 = vadd.f32 %v1393, %v1449
    %v1458 = vadd.f32 %v1394, %v1450
    %v1459 = vld [vmem:[%s818 + $0xa] sm:$0xff]
    %v1460 = vld [vmem:[%s818 + $0x12] sm:$0xff]
    %v1461 = vld [vmem:[%s818 + $0x1a] sm:$0xff]
    %v1462 = vld [vmem:[%s818 + $0x22] sm:$0xff]
    %v1463 = vld [vmem:[%s818 + $0x2a] sm:$0xff]
    %v1464 = vld [vmem:[%s818 + $0x32] sm:$0xff]
    %v1465 = vld [vmem:[%s818 + $0x3a] sm:$0xff]
    %v1466 = vld [vmem:[%s818 + $0x42] sm:$0xff]
    %1468 = vset.pattern.permute.xlu0 0
    %1469 = vperm.xlu0 %1468, %v1459
    %v1470 = vpop.permute.xlu0 %1469
    %1473 = vset.pattern.permute.xlu0 0
    %1474 = vperm.xlu0 %1473, %v1460
    %v1475 = vpop.permute.xlu0 %1474
    %1478 = vset.pattern.permute.xlu0 0
    %1479 = vperm.xlu0 %1478, %v1461
    %v1480 = vpop.permute.xlu0 %1479
    %1483 = vset.pattern.permute.xlu0 0
    %1484 = vperm.xlu0 %1483, %v1462
    %v1485 = vpop.permute.xlu0 %1484
    %1488 = vset.pattern.permute.xlu0 0
    %1489 = vperm.xlu0 %1488, %v1463
    %v1490 = vpop.permute.xlu0 %1489
    %1493 = vset.pattern.permute.xlu0 0
    %1494 = vperm.xlu0 %1493, %v1464
    %v1495 = vpop.permute.xlu0 %1494
    %1498 = vset.pattern.permute.xlu0 0
    %1499 = vperm.xlu0 %1498, %v1465
    %v1500 = vpop.permute.xlu0 %1499
    %1503 = vset.pattern.permute.xlu0 0
    %1504 = vperm.xlu0 %1503, %v1466
    %v1505 = vpop.permute.xlu0 %1504
    %v1507 = vmul.f32 %v1470, %v800
    %v1508 = vmul.f32 %v1475, %v800
    %v1509 = vmul.f32 %v1480, %v800
    %v1510 = vmul.f32 %v1485, %v800
    %v1511 = vmul.f32 %v1490, %v800
    %v1512 = vmul.f32 %v1495, %v800
    %v1513 = vmul.f32 %v1500, %v800
    %v1514 = vmul.f32 %v1505, %v800
    %v1515 = vadd.f32 %v1451, %v1507
    %v1516 = vadd.f32 %v1452, %v1508
    %v1517 = vadd.f32 %v1453, %v1509
    %v1518 = vadd.f32 %v1454, %v1510
    %v1519 = vadd.f32 %v1455, %v1511
    %v1520 = vadd.f32 %v1456, %v1512
    %v1521 = vadd.f32 %v1457, %v1513
    %v1522 = vadd.f32 %v1458, %v1514
    %v1523 = vld [vmem:[%s2] sm:$0x1]
    %v1525 = vlaneseq
    %v1526 = vshrl.u32 %v1525, 7
    %v1527 = vsub.s32 0, %v1526
    %v1528 = vrot.slane %v1523, %v1527
    %v1530 = vadd.f32 %v810, %v1528
    %v1531 = vadd.f32 %v811, %v1528
    %v1532 = vadd.f32 %v812, %v1528
    %v1533 = vadd.f32 %v813, %v1528
    %v1534 = vadd.f32 %v814, %v1528
    %v1535 = vadd.f32 %v815, %v1528
    %v1536 = vadd.f32 %v816, %v1528
    %v1537 = vadd.f32 %v817, %v1528
    %v1538 = vadd.f32 %v1515, %v1528
    %v1539 = vadd.f32 %v1516, %v1528
    %v1540 = vadd.f32 %v1517, %v1528
    %v1541 = vadd.f32 %v1518, %v1528
    %v1542 = vadd.f32 %v1519, %v1528
    %v1543 = vadd.f32 %v1520, %v1528
    %v1544 = vadd.f32 %v1521, %v1528
    %v1545 = vadd.f32 %v1522, %v1528
    %v1546 = vmax.f32 %v1530, 0.0
    %v1547 = vmax.f32 %v1531, 0.0
    %v1548 = vmax.f32 %v1532, 0.0
    %v1549 = vmax.f32 %v1533, 0.0
    %v1550 = vmax.f32 %v1534, 0.0
    %v1551 = vmax.f32 %v1535, 0.0
    %v1552 = vmax.f32 %v1536, 0.0
    %v1553 = vmax.f32 %v1537, 0.0
    %v1554 = vmax.f32 %v1538, 0.0
    %v1555 = vmax.f32 %v1539, 0.0
    %v1556 = vmax.f32 %v1540, 0.0
    %v1557 = vmax.f32 %v1541, 0.0
    %v1558 = vmax.f32 %v1542, 0.0
    %v1559 = vmax.f32 %v1543, 0.0
    %v1560 = vmax.f32 %v1544, 0.0
    %v1561 = vmax.f32 %v1545, 0.0
    %vm1562 = vcmask 261120
    %1563 = vst.msk [vmem:[#allocation3] sm:$0xff] %vm1562, %v1546
    %1564 = vst.msk [vmem:[#allocation3 + $0x8] sm:$0xff] %vm1562, %v1547
    %1565 = vst.msk [vmem:[#allocation3 + $0x10] sm:$0xff] %vm1562, %v1548
    %1566 = vst.msk [vmem:[#allocation3 + $0x18] sm:$0xff] %vm1562, %v1549
    %1567 = vst.msk [vmem:[#allocation3 + $0x20] sm:$0xff] %vm1562, %v1550
    %1568 = vst.msk [vmem:[#allocation3 + $0x28] sm:$0xff] %vm1562, %v1551
    %1569 = vst.msk [vmem:[#allocation3 + $0x30] sm:$0xff] %vm1562, %v1552
    %1570 = vst.msk [vmem:[#allocation3 + $0x38] sm:$0xff] %vm1562, %v1553
    %1571 = vst.msk [vmem:[#allocation3 + $0x40] sm:$0xff] %vm1562, %v1554
    %1572 = vst.msk [vmem:[#allocation3 + $0x48] sm:$0xff] %vm1562, %v1555
    %1573 = vst.msk [vmem:[#allocation3 + $0x50] sm:$0xff] %vm1562, %v1556
    %1574 = vst.msk [vmem:[#allocation3 + $0x58] sm:$0xff] %vm1562, %v1557
    %1575 = vst.msk [vmem:[#allocation3 + $0x60] sm:$0xff] %vm1562, %v1558
    %1576 = vst.msk [vmem:[#allocation3 + $0x68] sm:$0xff] %vm1562, %v1559
    %1577 = vst.msk [vmem:[#allocation3 + $0x70] sm:$0xff] %vm1562, %v1560
    %1578 = vst.msk [vmem:[#allocation3 + $0x78] sm:$0xff] %vm1562, %v1561
    %v1579 = vld [vmem:[#allocation3] ss:$2 sm:$0xff]
    %s1580 = scalar_lea.vmem [#allocation3], 16
    %v1581 = vld [vmem:[%s1580] ss:$2 sm:$0xff]
    %s1582 = scalar_lea.vmem [#allocation3], 32
    %v1583 = vld [vmem:[%s1582] ss:$2 sm:$0xff]
    %s1584 = scalar_lea.vmem [#allocation3], 48
    %v1585 = vld [vmem:[%s1584] ss:$2 sm:$0xff]
    %s1586 = scalar_lea.vmem [#allocation3], 64
    %v1587 = vld [vmem:[%s1586] ss:$2 sm:$0xff]
    %s1588 = scalar_lea.vmem [#allocation3], 80
    %v1589 = vld [vmem:[%s1588] ss:$2 sm:$0xff]
    %s1590 = scalar_lea.vmem [#allocation3], 96
    %v1591 = vld [vmem:[%s1590] ss:$2 sm:$0xff]
    %s1592 = scalar_lea.vmem [#allocation3], 112
    %v1593 = vld [vmem:[%s1592] ss:$2 sm:$0xff]
    %s1594 = scalar_lea.vmem [#allocation3], 1
    %v1595 = vld [vmem:[%s1594] ss:$2 sm:$0xff]
    %s1596 = scalar_lea.vmem [#allocation3], 17
    %v1597 = vld [vmem:[%s1596] ss:$2 sm:$0xff]
    %s1598 = scalar_lea.vmem [#allocation3], 33
    %v1599 = vld [vmem:[%s1598] ss:$2 sm:$0xff]
    %s1600 = scalar_lea.vmem [#allocation3], 49
    %v1601 = vld [vmem:[%s1600] ss:$2 sm:$0xff]
    %s1602 = scalar_lea.vmem [#allocation3], 65
    %v1603 = vld [vmem:[%s1602] ss:$2 sm:$0xff]
    %s1604 = scalar_lea.vmem [#allocation3], 81
    %v1605 = vld [vmem:[%s1604] ss:$2 sm:$0xff]
    %s1606 = scalar_lea.vmem [#allocation3], 97
    %v1607 = vld [vmem:[%s1606] ss:$2 sm:$0xff]
    %s1608 = scalar_lea.vmem [#allocation3], 113
    %v1609 = vld [vmem:[%s1608] ss:$2 sm:$0xff]
    %v1610 = vmax.f32 %v1579, %v1595
    %v1611 = vmax.f32 %v1581, %v1597
    %v1612 = vmax.f32 %v1583, %v1599
    %v1613 = vmax.f32 %v1585, %v1601
    %v1614 = vmax.f32 %v1587, %v1603
    %v1615 = vmax.f32 %v1589, %v1605
    %v1616 = vmax.f32 %v1591, %v1607
    %v1617 = vmax.f32 %v1593, %v1609
    %1618 = vst.msk [vmem:[#allocation2] sm:$0xff] %vm1562, 0.0
    %1619 = vst.msk [vmem:[#allocation2 + $0x8] sm:$0xff] %vm1562, 0.0
    %1620 = vst.msk [vmem:[#allocation2 + $0x10] sm:$0xff] %vm1562, 0.0
    %1621 = vst.msk [vmem:[#allocation2 + $0x18] sm:$0xff] %vm1562, 0.0
    %1622 = vst.msk [vmem:[#allocation2 + $0x20] sm:$0xff] %vm1562, 0.0
    %1623 = vst.msk [vmem:[#allocation2 + $0x28] sm:$0xff] %vm1562, 0.0
    %1624 = vst.msk [vmem:[#allocation2 + $0x30] sm:$0xff] %vm1562, 0.0
    %1625 = vst.msk [vmem:[#allocation2 + $0x38] sm:$0xff] %vm1562, 0.0
    %1626 = vst.msk [vmem:[#allocation2 + $0x40] sm:$0xff] %vm1562, 0.0
    %1627 = vst.msk [vmem:[#allocation2 + $0x48] sm:$0xff] %vm1562, 0.0
    %1628 = vst.msk [vmem:[#allocation2 + $0x50] sm:$0xff] %vm1562, 0.0
    %1629 = vst.msk [vmem:[#allocation2 + $0x58] sm:$0xff] %vm1562, 0.0
    %1630 = vst.msk [vmem:[#allocation2 + $0x8] sm:$0xff] %vm1562, %v1610
    %1631 = vst.msk [vmem:[#allocation2 + $0x10] sm:$0xff] %vm1562, %v1611
    %1632 = vst.msk [vmem:[#allocation2 + $0x18] sm:$0xff] %vm1562, %v1612
    %1633 = vst.msk [vmem:[#allocation2 + $0x20] sm:$0xff] %vm1562, %v1613
    %s1634 = scalar_lea.vmem [#allocation2], 48
    %1635 = vst.msk [vmem:[%s1634 + $0x8] sm:$0xff] %vm1562, %v1614
    %1636 = vst.msk [vmem:[%s1634 + $0x10] sm:$0xff] %vm1562, %v1615
    %1637 = vst.msk [vmem:[%s1634 + $0x18] sm:$0xff] %vm1562, %v1616
    %1638 = vst.msk [vmem:[%s1634 + $0x20] sm:$0xff] %vm1562, %v1617
    %v1639 = vld [vmem:[#allocation2 + $0x3] sm:$0xff]
    %v1640 = vld [vmem:[#allocation2 + $0xb] sm:$0xff]
    %v1641 = vld [vmem:[#allocation2 + $0x13] sm:$0xff]
    %v1642 = vld [vmem:[#allocation2 + $0x1b] sm:$0xff]
    %v1643 = vld [vmem:[%s1634 + $0x3] sm:$0xff]
    %v1644 = vld [vmem:[%s1634 + $0xb] sm:$0xff]
    %v1645 = vld [vmem:[%s1634 + $0x13] sm:$0xff]
    %v1646 = vld [vmem:[%s1634 + $0x1b] sm:$0xff]
    %v1647 = vld [vmem:[%s3] sm:$0xff]
    %v1648 = vld [vmem:[%s3 + $0x8] sm:$0xff]
    %v1649 = vld [vmem:[%s3 + $0x10] sm:$0xff]
    %v1650 = vld [vmem:[%s3 + $0x18] sm:$0xff]
    %v1651 = vld [vmem:[#allocation2 + $0x4] sm:$0xff]
    %v1652 = vld [vmem:[#allocation2 + $0xc] sm:$0xff]
    %v1653 = vld [vmem:[#allocation2 + $0x14] sm:$0xff]
    %v1654 = vld [vmem:[#allocation2 + $0x1c] sm:$0xff]
    %v1655 = vld [vmem:[%s1634 + $0x4] sm:$0xff]
    %v1656 = vld [vmem:[%s1634 + $0xc] sm:$0xff]
    %v1657 = vld [vmem:[%s1634 + $0x14] sm:$0xff]
    %v1658 = vld [vmem:[%s1634 + $0x1c] sm:$0xff]
    %s1659 = scalar_lea.vmem %s3, 32
    %v1660 = vld [vmem:[%s1659] sm:$0xff]
    %v1661 = vld [vmem:[%s1659 + $0x8] sm:$0xff]
    %v1662 = vld [vmem:[%s1659 + $0x10] sm:$0xff]
    %v1663 = vld [vmem:[%s1659 + $0x18] sm:$0xff]
    %v1665 = vsel %vm1562, %v1651, 0
    %v1668 = vsel %vm1562, %v1652, 0
    %v1671 = vsel %vm1562, %v1653, 0
    %v1674 = vsel %vm1562, %v1654, 0
    %v1677 = vsel %vm1562, %v1655, 0
    %v1680 = vsel %vm1562, %v1656, 0
    %v1683 = vsel %vm1562, %v1657, 0
    %v1686 = vsel %vm1562, %v1658, 0
    %1688 = vmatprep.subr.mxu0 0.0
    %1689 = vmatpush1.msra.mxu0 %v1660
    %1690 = vmatprep.subr.mxu0 0.0
    %1691 = vmatpush1.msra.mxu0 %v1661
    %1692 = vmatprep.subr.mxu0 0.0
    %1693 = vmatpush1.msra.mxu0 %v1662
    %1694 = vmatprep.subr.mxu0 0.0
    %1695 = vmatpush1.msra.mxu0 %v1663
    %1696 = vmatprep.subr.mxu0 0.0
    %1697 = vmatpush1.msra.mxu0 0.0
    %1698 = vmatprep.subr.mxu0 0.0
    %1699 = vmatpush1.msra.mxu0 0.0
    %1700 = vmatprep.subr.mxu0 0.0
    %1701 = vmatpush1.msra.mxu0 0.0
    %1702 = vmatprep.subr.mxu0 0.0
    %1703 = vmatpush1.msra.mxu0 0.0
    %1704 = vmatprep.subr.mxu0 0.0
    %1705 = vmatpush1.msra.mxu0 0.0
    %1706 = vmatprep.subr.mxu0 0.0
    %1707 = vmatpush1.msra.mxu0 0.0
    %1708 = vmatprep.subr.mxu0 0.0
    %1709 = vmatpush1.msra.mxu0 0.0
    %1710 = vmatprep.subr.mxu0 0.0
    %1711 = vmatpush1.msra.mxu0 0.0
    %1712 = vmatprep.subr.mxu0 0.0
    %1713 = vmatpush1.msra.mxu0 0.0
    %1714 = vmatprep.subr.mxu0 0.0
    %1715 = vmatpush1.msra.mxu0 0.0
    %1716 = vmatprep.subr.mxu0 0.0
    %1717 = vmatpush1.msra.mxu0 0.0
    %1718 = vmatprep.subr.mxu0 0.0
    %1719 = vmatpush1.msra.mxu0 0.0
    %1720 = vmatprep.subr.mxu0 0.0
    %1721 = vmatpush1.msra.mxu0 0.0
    %1722 = vmatprep.subr.mxu0 0.0
    %1723 = vmatpush1.msra.mxu0 0.0
    %1724 = vmatprep.subr.mxu0 0.0
    %1725 = vmatpush1.msra.mxu0 0.0
    %1726 = vmatprep.subr.mxu0 0.0
    %1727 = vmatpush1.msra.mxu0 0.0
    %1728 = vmatprep.subr.mxu0 0.0
    %1729 = vmatpush1.msra.mxu0 0.0
    %1730 = vmatprep.subr.mxu0 0.0
    %1731 = vmatpush1.msra.mxu0 0.0
    %1732 = vmatprep.subr.mxu0 0.0
    %1733 = vmatpush1.msra.mxu0 0.0
    %1734 = vmatprep.subr.mxu0 0.0
    %1735 = vmatpush1.msra.mxu0 0.0
    %1736 = vmatprep.subr.mxu0 0.0
    %1737 = vmatpush1.msra.mxu0 0.0
    %1738 = vmatprep.subr.mxu0 0.0
    %1739 = vmatpush1.msra.mxu0 0.0
    %1740 = vmatprep.subr.mxu0 0.0
    %1741 = vmatpush1.msra.mxu0 0.0
    %1742 = vmatprep.subr.mxu0 0.0
    %1743 = vmatpush1.msra.mxu0 0.0
    %1744 = vmatprep.subr.mxu0 0.0
    %1745 = vmatpush1.msra.mxu0 0.0
    %1746 = vmatprep.subr.mxu0 0.0
    %1747 = vmatpush1.msra.mxu0 0.0
    %1748 = vmatprep.subr.mxu0 0.0
    %1749 = vmatpush1.msra.mxu0 0.0
    %1750 = vmatprep.subr.mxu0 0.0
    %1751 = vmatpush1.msra.mxu0 0.0
    %1752 = vmatprep.mubr.f32.mxu0 0.0
    %1753 = vmatmul.mubr.f32.gmra.mrb[0].mxu0 %v1665
    %v1754 = vpop.f32.mrb[0].mxu0
    %v1755 = vadd.f32 0.0, %v1754
    %v1756 = vpop.f32.mrb[0].mxu0
    %1757 = vmatprep.mubr.f32.mxu0 0.0
    %1758 = vmatmul.mubr.f32.gmra.mrb[0].mxu0 %v1668
    %v1759 = vpop.f32.mrb[0].mxu0
    %v1760 = vadd.f32 0.0, %v1759
    %v1761 = vpop.f32.mrb[0].mxu0
    %1762 = vmatprep.mubr.f32.mxu0 0.0
    %1763 = vmatmul.mubr.f32.gmra.mrb[0].mxu0 %v1671
    %v1764 = vpop.f32.mrb[0].mxu0
    %v1765 = vadd.f32 0.0, %v1764
    %v1766 = vpop.f32.mrb[0].mxu0
    %1767 = vmatprep.mubr.f32.mxu0 0.0
    %1768 = vmatmul.mubr.f32.gmra.mrb[0].mxu0 %v1674
    %v1769 = vpop.f32.mrb[0].mxu0
    %v1770 = vadd.f32 0.0, %v1769
    %v1771 = vpop.f32.mrb[0].mxu0
    %1772 = vmatprep.mubr.f32.mxu0 0.0
    %1773 = vmatmul.mubr.f32.gmra.mrb[0].mxu0 %v1677
    %v1774 = vpop.f32.mrb[0].mxu0
    %v1775 = vadd.f32 0.0, %v1774
    %v1776 = vpop.f32.mrb[0].mxu0
    %1777 = vmatprep.mubr.f32.mxu0 0.0
    %1778 = vmatmul.mubr.f32.gmra.mrb[0].mxu0 %v1680
    %v1779 = vpop.f32.mrb[0].mxu0
    %v1780 = vadd.f32 0.0, %v1779
    %v1781 = vpop.f32.mrb[0].mxu0
    %1782 = vmatprep.mubr.f32.mxu0 0.0
    %1783 = vmatmul.mubr.f32.gmra.mrb[0].mxu0 %v1683
    %v1784 = vpop.f32.mrb[0].mxu0
    %v1785 = vadd.f32 0.0, %v1784
    %v1786 = vpop.f32.mrb[0].mxu0
    %1787 = vmatprep.mubr.f32.mxu0 0.0
    %1788 = vmatmul.mubr.f32.gmra.mrb[0].mxu0 %v1686
    %v1789 = vpop.f32.mrb[0].mxu0
    %v1790 = vadd.f32 0.0, %v1789
    %v1791 = vpop.f32.mrb[0].mxu0
    %1792 = vdwg.mxu0
    %v1794 = vsel %vm1562, %v1639, 0
    %v1797 = vsel %vm1562, %v1640, 0
    %v1800 = vsel %vm1562, %v1641, 0
    %v1803 = vsel %vm1562, %v1642, 0
    %v1806 = vsel %vm1562, %v1643, 0
    %v1809 = vsel %vm1562, %v1644, 0
    %v1812 = vsel %vm1562, %v1645, 0
    %v1815 = vsel %vm1562, %v1646, 0
    %1817 = vmatprep.subr.mxu0 0.0
    %1818 = vmatpush1.msra.mxu0 %v1647
    %1819 = vmatprep.subr.mxu0 0.0
    %1820 = vmatpush1.msra.mxu0 %v1648
    %1821 = vmatprep.subr.mxu0 0.0
    %1822 = vmatpush1.msra.mxu0 %v1649
    %1823 = vmatprep.subr.mxu0 0.0
    %1824 = vmatpush1.msra.mxu0 %v1650
    %1825 = vmatprep.subr.mxu0 0.0
    %1826 = vmatpush1.msra.mxu0 0.0
    %1827 = vmatprep.subr.mxu0 0.0
    %1828 = vmatpush1.msra.mxu0 0.0
    %1829 = vmatprep.subr.mxu0 0.0
    %1830 = vmatpush1.msra.mxu0 0.0
    %1831 = vmatprep.subr.mxu0 0.0
    %1832 = vmatpush1.msra.mxu0 0.0
    %1833 = vmatprep.subr.mxu0 0.0
    %1834 = vmatpush1.msra.mxu0 0.0
    %1835 = vmatprep.subr.mxu0 0.0
    %1836 = vmatpush1.msra.mxu0 0.0
    %1837 = vmatprep.subr.mxu0 0.0
    %1838 = vmatpush1.msra.mxu0 0.0
    %1839 = vmatprep.subr.mxu0 0.0
    %1840 = vmatpush1.msra.mxu0 0.0
    %1841 = vmatprep.subr.mxu0 0.0
    %1842 = vmatpush1.msra.mxu0 0.0
    %1843 = vmatprep.subr.mxu0 0.0
    %1844 = vmatpush1.msra.mxu0 0.0
    %1845 = vmatprep.subr.mxu0 0.0
    %1846 = vmatpush1.msra.mxu0 0.0
    %1847 = vmatprep.subr.mxu0 0.0
    %1848 = vmatpush1.msra.mxu0 0.0
    %1849 = vmatprep.subr.mxu0 0.0
    %1850 = vmatpush1.msra.mxu0 0.0
    %1851 = vmatprep.subr.mxu0 0.0
    %1852 = vmatpush1.msra.mxu0 0.0
    %1853 = vmatprep.subr.mxu0 0.0
    %1854 = vmatpush1.msra.mxu0 0.0
    %1855 = vmatprep.subr.mxu0 0.0
    %1856 = vmatpush1.msra.mxu0 0.0
    %1857 = vmatprep.subr.mxu0 0.0
    %1858 = vmatpush1.msra.mxu0 0.0
    %1859 = vmatprep.subr.mxu0 0.0
    %1860 = vmatpush1.msra.mxu0 0.0
    %1861 = vmatprep.subr.mxu0 0.0
    %1862 = vmatpush1.msra.mxu0 0.0
    %1863 = vmatprep.subr.mxu0 0.0
    %1864 = vmatpush1.msra.mxu0 0.0
    %1865 = vmatprep.subr.mxu0 0.0
    %1866 = vmatpush1.msra.mxu0 0.0
    %1867 = vmatprep.subr.mxu0 0.0
    %1868 = vmatpush1.msra.mxu0 0.0
    %1869 = vmatprep.subr.mxu0 0.0
    %1870 = vmatpush1.msra.mxu0 0.0
    %1871 = vmatprep.subr.mxu0 0.0
    %1872 = vmatpush1.msra.mxu0 0.0
    %1873 = vmatprep.subr.mxu0 0.0
    %1874 = vmatpush1.msra.mxu0 0.0
    %1875 = vmatprep.subr.mxu0 0.0
    %1876 = vmatpush1.msra.mxu0 0.0
    %1877 = vmatprep.subr.mxu0 0.0
    %1878 = vmatpush1.msra.mxu0 0.0
    %1879 = vmatprep.subr.mxu0 0.0
    %1880 = vmatpush1.msra.mxu0 0.0
    %1881 = vmatprep.mubr.f32.mxu0 0.0
    %1882 = vmatmul.mubr.f32.gmra.mrb[0].mxu0 %v1794
    %v1883 = vpop.f32.mrb[0].mxu0
    %v1884 = vadd.f32 %v1755, %v1883
    %v1885 = vpop.f32.mrb[0].mxu0
    %1886 = vmatprep.mubr.f32.mxu0 0.0
    %1887 = vmatmul.mubr.f32.gmra.mrb[0].mxu0 %v1797
    %v1888 = vpop.f32.mrb[0].mxu0
    %v1889 = vadd.f32 %v1760, %v1888
    %v1890 = vpop.f32.mrb[0].mxu0
    %1891 = vmatprep.mubr.f32.mxu0 0.0
    %1892 = vmatmul.mubr.f32.gmra.mrb[0].mxu0 %v1800
    %v1893 = vpop.f32.mrb[0].mxu0
    %v1894 = vadd.f32 %v1765, %v1893
    %v1895 = vpop.f32.mrb[0].mxu0
    %1896 = vmatprep.mubr.f32.mxu0 0.0
    %1897 = vmatmul.mubr.f32.gmra.mrb[0].mxu0 %v1803
    %v1898 = vpop.f32.mrb[0].mxu0
    %v1899 = vadd.f32 %v1770, %v1898
    %v1900 = vpop.f32.mrb[0].mxu0
    %1901 = vmatprep.mubr.f32.mxu0 0.0
    %1902 = vmatmul.mubr.f32.gmra.mrb[0].mxu0 %v1806
    %v1903 = vpop.f32.mrb[0].mxu0
    %v1904 = vadd.f32 %v1775, %v1903
    %v1905 = vpop.f32.mrb[0].mxu0
    %1906 = vmatprep.mubr.f32.mxu0 0.0
    %1907 = vmatmul.mubr.f32.gmra.mrb[0].mxu0 %v1809
    %v1908 = vpop.f32.mrb[0].mxu0
    %v1909 = vadd.f32 %v1780, %v1908
    %v1910 = vpop.f32.mrb[0].mxu0
    %1911 = vmatprep.mubr.f32.mxu0 0.0
    %1912 = vmatmul.mubr.f32.gmra.mrb[0].mxu0 %v1812
    %v1913 = vpop.f32.mrb[0].mxu0
    %v1914 = vadd.f32 %v1785, %v1913
    %v1915 = vpop.f32.mrb[0].mxu0
    %1916 = vmatprep.mubr.f32.mxu0 0.0
    %1917 = vmatmul.mubr.f32.gmra.mrb[0].mxu0 %v1815
    %v1918 = vpop.f32.mrb[0].mxu0
    %v1919 = vadd.f32 %v1790, %v1918
    %v1920 = vpop.f32.mrb[0].mxu0
    %1921 = vdwg.mxu0
    %v1922 = vld [vmem:[#allocation2 + $0x5] sm:$0xff]
    %v1923 = vld [vmem:[#allocation2 + $0xd] sm:$0xff]
    %v1924 = vld [vmem:[#allocation2 + $0x15] sm:$0xff]
    %v1925 = vld [vmem:[#allocation2 + $0x1d] sm:$0xff]
    %v1926 = vld [vmem:[%s1634 + $0x5] sm:$0xff]
    %v1927 = vld [vmem:[%s1634 + $0xd] sm:$0xff]
    %v1928 = vld [vmem:[%s1634 + $0x15] sm:$0xff]
    %v1929 = vld [vmem:[%s1634 + $0x1d] sm:$0xff]
    %s1930 = scalar_lea.vmem %s3, 64
    %v1931 = vld [vmem:[%s1930] sm:$0xff]
    %v1932 = vld [vmem:[%s1930 + $0x8] sm:$0xff]
    %v1933 = vld [vmem:[%s1930 + $0x10] sm:$0xff]
    %v1934 = vld [vmem:[%s1930 + $0x18] sm:$0xff]
    %v1936 = vsel %vm1562, %v1922, 0
    %v1939 = vsel %vm1562, %v1923, 0
    %v1942 = vsel %vm1562, %v1924, 0
    %v1945 = vsel %vm1562, %v1925, 0
    %v1948 = vsel %vm1562, %v1926, 0
    %v1951 = vsel %vm1562, %v1927, 0
    %v1954 = vsel %vm1562, %v1928, 0
    %v1957 = vsel %vm1562, %v1929, 0
    %1959 = vmatprep.subr.mxu0 0.0
    %1960 = vmatpush1.msra.mxu0 %v1931
    %1961 = vmatprep.subr.mxu0 0.0
    %1962 = vmatpush1.msra.mxu0 %v1932
    %1963 = vmatprep.subr.mxu0 0.0
    %1964 = vmatpush1.msra.mxu0 %v1933
    %1965 = vmatprep.subr.mxu0 0.0
    %1966 = vmatpush1.msra.mxu0 %v1934
    %1967 = vmatprep.subr.mxu0 0.0
    %1968 = vmatpush1.msra.mxu0 0.0
    %1969 = vmatprep.subr.mxu0 0.0
    %1970 = vmatpush1.msra.mxu0 0.0
    %1971 = vmatprep.subr.mxu0 0.0
    %1972 = vmatpush1.msra.mxu0 0.0
    %1973 = vmatprep.subr.mxu0 0.0
    %1974 = vmatpush1.msra.mxu0 0.0
    %1975 = vmatprep.subr.mxu0 0.0
    %1976 = vmatpush1.msra.mxu0 0.0
    %1977 = vmatprep.subr.mxu0 0.0
    %1978 = vmatpush1.msra.mxu0 0.0
    %1979 = vmatprep.subr.mxu0 0.0
    %1980 = vmatpush1.msra.mxu0 0.0
    %1981 = vmatprep.subr.mxu0 0.0
    %1982 = vmatpush1.msra.mxu0 0.0
    %1983 = vmatprep.subr.mxu0 0.0
    %1984 = vmatpush1.msra.mxu0 0.0
    %1985 = vmatprep.subr.mxu0 0.0
    %1986 = vmatpush1.msra.mxu0 0.0
    %1987 = vmatprep.subr.mxu0 0.0
    %1988 = vmatpush1.msra.mxu0 0.0
    %1989 = vmatprep.subr.mxu0 0.0
    %1990 = vmatpush1.msra.mxu0 0.0
    %1991 = vmatprep.subr.mxu0 0.0
    %1992 = vmatpush1.msra.mxu0 0.0
    %1993 = vmatprep.subr.mxu0 0.0
    %1994 = vmatpush1.msra.mxu0 0.0
    %1995 = vmatprep.subr.mxu0 0.0
    %1996 = vmatpush1.msra.mxu0 0.0
    %1997 = vmatprep.subr.mxu0 0.0
    %1998 = vmatpush1.msra.mxu0 0.0
    %1999 = vmatprep.subr.mxu0 0.0
    %2000 = vmatpush1.msra.mxu0 0.0
    %2001 = vmatprep.subr.mxu0 0.0
    %2002 = vmatpush1.msra.mxu0 0.0
    %2003 = vmatprep.subr.mxu0 0.0
    %2004 = vmatpush1.msra.mxu0 0.0
    %2005 = vmatprep.subr.mxu0 0.0
    %2006 = vmatpush1.msra.mxu0 0.0
    %2007 = vmatprep.subr.mxu0 0.0
    %2008 = vmatpush1.msra.mxu0 0.0
    %2009 = vmatprep.subr.mxu0 0.0
    %2010 = vmatpush1.msra.mxu0 0.0
    %2011 = vmatprep.subr.mxu0 0.0
    %2012 = vmatpush1.msra.mxu0 0.0
    %2013 = vmatprep.subr.mxu0 0.0
    %2014 = vmatpush1.msra.mxu0 0.0
    %2015 = vmatprep.subr.mxu0 0.0
    %2016 = vmatpush1.msra.mxu0 0.0
    %2017 = vmatprep.subr.mxu0 0.0
    %2018 = vmatpush1.msra.mxu0 0.0
    %2019 = vmatprep.subr.mxu0 0.0
    %2020 = vmatpush1.msra.mxu0 0.0
    %2021 = vmatprep.subr.mxu0 0.0
    %2022 = vmatpush1.msra.mxu0 0.0
    %2023 = vmatprep.mubr.f32.mxu0 0.0
    %2024 = vmatmul.mubr.f32.gmra.mrb[0].mxu0 %v1936
    %v2025 = vpop.f32.mrb[0].mxu0
    %v2026 = vadd.f32 0.0, %v2025
    %v2027 = vpop.f32.mrb[0].mxu0
    %2028 = vmatprep.mubr.f32.mxu0 0.0
    %2029 = vmatmul.mubr.f32.gmra.mrb[0].mxu0 %v1939
    %v2030 = vpop.f32.mrb[0].mxu0
    %v2031 = vadd.f32 0.0, %v2030
    %v2032 = vpop.f32.mrb[0].mxu0
    %2033 = vmatprep.mubr.f32.mxu0 0.0
    %2034 = vmatmul.mubr.f32.gmra.mrb[0].mxu0 %v1942
    %v2035 = vpop.f32.mrb[0].mxu0
    %v2036 = vadd.f32 0.0, %v2035
    %v2037 = vpop.f32.mrb[0].mxu0
    %2038 = vmatprep.mubr.f32.mxu0 0.0
    %2039 = vmatmul.mubr.f32.gmra.mrb[0].mxu0 %v1945
    %v2040 = vpop.f32.mrb[0].mxu0
    %v2041 = vadd.f32 0.0, %v2040
    %v2042 = vpop.f32.mrb[0].mxu0
    %2043 = vmatprep.mubr.f32.mxu0 0.0
    %2044 = vmatmul.mubr.f32.gmra.mrb[0].mxu0 %v1948
    %v2045 = vpop.f32.mrb[0].mxu0
    %v2046 = vadd.f32 0.0, %v2045
    %v2047 = vpop.f32.mrb[0].mxu0
    %2048 = vmatprep.mubr.f32.mxu0 0.0
    %2049 = vmatmul.mubr.f32.gmra.mrb[0].mxu0 %v1951
    %v2050 = vpop.f32.mrb[0].mxu0
    %v2051 = vadd.f32 0.0, %v2050
    %v2052 = vpop.f32.mrb[0].mxu0
    %2053 = vmatprep.mubr.f32.mxu0 0.0
    %2054 = vmatmul.mubr.f32.gmra.mrb[0].mxu0 %v1954
    %v2055 = vpop.f32.mrb[0].mxu0
    %v2056 = vadd.f32 0.0, %v2055
    %v2057 = vpop.f32.mrb[0].mxu0
    %2058 = vmatprep.mubr.f32.mxu0 0.0
    %2059 = vmatmul.mubr.f32.gmra.mrb[0].mxu0 %v1957
    %v2060 = vpop.f32.mrb[0].mxu0
    %v2061 = vadd.f32 0.0, %v2060
    %v2062 = vpop.f32.mrb[0].mxu0
    %2063 = vdwg.mxu0
    %v2064 = vadd.f32 %v1884, %v2026
    %v2065 = vadd.f32 %v1889, %v2031
    %v2066 = vadd.f32 %v1894, %v2036
    %v2067 = vadd.f32 %v1899, %v2041
    %v2068 = vadd.f32 %v1904, %v2046
    %v2069 = vadd.f32 %v1909, %v2051
    %v2070 = vadd.f32 %v1914, %v2056
    %v2071 = vadd.f32 %v1919, %v2061
    %v2072 = vld [vmem:[#allocation2 + $0x6] sm:$0xff]
    %v2073 = vld [vmem:[#allocation2 + $0xe] sm:$0xff]
    %v2074 = vld [vmem:[#allocation2 + $0x16] sm:$0xff]
    %v2075 = vld [vmem:[#allocation2 + $0x1e] sm:$0xff]
    %v2076 = vld [vmem:[%s1634 + $0x6] sm:$0xff]
    %v2077 = vld [vmem:[%s1634 + $0xe] sm:$0xff]
    %v2078 = vld [vmem:[%s1634 + $0x16] sm:$0xff]
    %v2079 = vld [vmem:[%s1634 + $0x1e] sm:$0xff]
    %s2080 = scalar_lea.vmem %s3, 96
    %v2081 = vld [vmem:[%s2080] sm:$0xff]
    %v2082 = vld [vmem:[%s2080 + $0x8] sm:$0xff]
    %v2083 = vld [vmem:[%s2080 + $0x10] sm:$0xff]
    %v2084 = vld [vmem:[%s2080 + $0x18] sm:$0xff]
    %v2086 = vsel %vm1562, %v2072, 0
    %v2089 = vsel %vm1562, %v2073, 0
    %v2092 = vsel %vm1562, %v2074, 0
    %v2095 = vsel %vm1562, %v2075, 0
    %v2098 = vsel %vm1562, %v2076, 0
    %v2101 = vsel %vm1562, %v2077, 0
    %v2104 = vsel %vm1562, %v2078, 0
    %v2107 = vsel %vm1562, %v2079, 0
    %2109 = vmatprep.subr.mxu0 0.0
    %2110 = vmatpush1.msra.mxu0 %v2081
    %2111 = vmatprep.subr.mxu0 0.0
    %2112 = vmatpush1.msra.mxu0 %v2082
    %2113 = vmatprep.subr.mxu0 0.0
    %2114 = vmatpush1.msra.mxu0 %v2083
    %2115 = vmatprep.subr.mxu0 0.0
    %2116 = vmatpush1.msra.mxu0 %v2084
    %2117 = vmatprep.subr.mxu0 0.0
    %2118 = vmatpush1.msra.mxu0 0.0
    %2119 = vmatprep.subr.mxu0 0.0
    %2120 = vmatpush1.msra.mxu0 0.0
    %2121 = vmatprep.subr.mxu0 0.0
    %2122 = vmatpush1.msra.mxu0 0.0
    %2123 = vmatprep.subr.mxu0 0.0
    %2124 = vmatpush1.msra.mxu0 0.0
    %2125 = vmatprep.subr.mxu0 0.0
    %2126 = vmatpush1.msra.mxu0 0.0
    %2127 = vmatprep.subr.mxu0 0.0
    %2128 = vmatpush1.msra.mxu0 0.0
    %2129 = vmatprep.subr.mxu0 0.0
    %2130 = vmatpush1.msra.mxu0 0.0
    %2131 = vmatprep.subr.mxu0 0.0
    %2132 = vmatpush1.msra.mxu0 0.0
    %2133 = vmatprep.subr.mxu0 0.0
    %2134 = vmatpush1.msra.mxu0 0.0
    %2135 = vmatprep.subr.mxu0 0.0
    %2136 = vmatpush1.msra.mxu0 0.0
    %2137 = vmatprep.subr.mxu0 0.0
    %2138 = vmatpush1.msra.mxu0 0.0
    %2139 = vmatprep.subr.mxu0 0.0
    %2140 = vmatpush1.msra.mxu0 0.0
    %2141 = vmatprep.subr.mxu0 0.0
    %2142 = vmatpush1.msra.mxu0 0.0
    %2143 = vmatprep.subr.mxu0 0.0
    %2144 = vmatpush1.msra.mxu0 0.0
    %2145 = vmatprep.subr.mxu0 0.0
    %2146 = vmatpush1.msra.mxu0 0.0
    %2147 = vmatprep.subr.mxu0 0.0
    %2148 = vmatpush1.msra.mxu0 0.0
    %2149 = vmatprep.subr.mxu0 0.0
    %2150 = vmatpush1.msra.mxu0 0.0
    %2151 = vmatprep.subr.mxu0 0.0
    %2152 = vmatpush1.msra.mxu0 0.0
    %2153 = vmatprep.subr.mxu0 0.0
    %2154 = vmatpush1.msra.mxu0 0.0
    %2155 = vmatprep.subr.mxu0 0.0
    %2156 = vmatpush1.msra.mxu0 0.0
    %2157 = vmatprep.subr.mxu0 0.0
    %2158 = vmatpush1.msra.mxu0 0.0
    %2159 = vmatprep.subr.mxu0 0.0
    %2160 = vmatpush1.msra.mxu0 0.0
    %2161 = vmatprep.subr.mxu0 0.0
    %2162 = vmatpush1.msra.mxu0 0.0
    %2163 = vmatprep.subr.mxu0 0.0
    %2164 = vmatpush1.msra.mxu0 0.0
    %2165 = vmatprep.subr.mxu0 0.0
    %2166 = vmatpush1.msra.mxu0 0.0
    %2167 = vmatprep.subr.mxu0 0.0
    %2168 = vmatpush1.msra.mxu0 0.0
    %2169 = vmatprep.subr.mxu0 0.0
    %2170 = vmatpush1.msra.mxu0 0.0
    %2171 = vmatprep.subr.mxu0 0.0
    %2172 = vmatpush1.msra.mxu0 0.0
    %2173 = vmatprep.mubr.f32.mxu0 0.0
    %2174 = vmatmul.mubr.f32.gmra.mrb[0].mxu0 %v2086
    %v2175 = vpop.f32.mrb[0].mxu0
    %v2176 = vadd.f32 0.0, %v2175
    %v2177 = vpop.f32.mrb[0].mxu0
    %2178 = vmatprep.mubr.f32.mxu0 0.0
    %2179 = vmatmul.mubr.f32.gmra.mrb[0].mxu0 %v2089
    %v2180 = vpop.f32.mrb[0].mxu0
    %v2181 = vadd.f32 0.0, %v2180
    %v2182 = vpop.f32.mrb[0].mxu0
    %2183 = vmatprep.mubr.f32.mxu0 0.0
    %2184 = vmatmul.mubr.f32.gmra.mrb[0].mxu0 %v2092
    %v2185 = vpop.f32.mrb[0].mxu0
    %v2186 = vadd.f32 0.0, %v2185
    %v2187 = vpop.f32.mrb[0].mxu0
    %2188 = vmatprep.mubr.f32.mxu0 0.0
    %2189 = vmatmul.mubr.f32.gmra.mrb[0].mxu0 %v2095
    %v2190 = vpop.f32.mrb[0].mxu0
    %v2191 = vadd.f32 0.0, %v2190
    %v2192 = vpop.f32.mrb[0].mxu0
    %2193 = vmatprep.mubr.f32.mxu0 0.0
    %2194 = vmatmul.mubr.f32.gmra.mrb[0].mxu0 %v2098
    %v2195 = vpop.f32.mrb[0].mxu0
    %v2196 = vadd.f32 0.0, %v2195
    %v2197 = vpop.f32.mrb[0].mxu0
    %2198 = vmatprep.mubr.f32.mxu0 0.0
    %2199 = vmatmul.mubr.f32.gmra.mrb[0].mxu0 %v2101
    %v2200 = vpop.f32.mrb[0].mxu0
    %v2201 = vadd.f32 0.0, %v2200
    %v2202 = vpop.f32.mrb[0].mxu0
    %2203 = vmatprep.mubr.f32.mxu0 0.0
    %2204 = vmatmul.mubr.f32.gmra.mrb[0].mxu0 %v2104
    %v2205 = vpop.f32.mrb[0].mxu0
    %v2206 = vadd.f32 0.0, %v2205
    %v2207 = vpop.f32.mrb[0].mxu0
    %2208 = vmatprep.mubr.f32.mxu0 0.0
    %2209 = vmatmul.mubr.f32.gmra.mrb[0].mxu0 %v2107
    %v2210 = vpop.f32.mrb[0].mxu0
    %v2211 = vadd.f32 0.0, %v2210
    %v2212 = vpop.f32.mrb[0].mxu0
    %2213 = vdwg.mxu0
    %v2214 = vadd.f32 %v2064, %v2176
    %v2215 = vadd.f32 %v2065, %v2181
    %v2216 = vadd.f32 %v2066, %v2186
    %v2217 = vadd.f32 %v2067, %v2191
    %v2218 = vadd.f32 %v2068, %v2196
    %v2219 = vadd.f32 %v2069, %v2201
    %v2220 = vadd.f32 %v2070, %v2206
    %v2221 = vadd.f32 %v2071, %v2211
    %v2222 = vld [vmem:[#allocation2 + $0x7] sm:$0xff]
    %v2223 = vld [vmem:[#allocation2 + $0xf] sm:$0xff]
    %v2224 = vld [vmem:[#allocation2 + $0x17] sm:$0xff]
    %v2225 = vld [vmem:[#allocation2 + $0x1f] sm:$0xff]
    %v2226 = vld [vmem:[%s1634 + $0x7] sm:$0xff]
    %v2227 = vld [vmem:[%s1634 + $0xf] sm:$0xff]
    %v2228 = vld [vmem:[%s1634 + $0x17] sm:$0xff]
    %v2229 = vld [vmem:[%s1634 + $0x1f] sm:$0xff]
    %s2230 = scalar_lea.vmem %s3, 128
    %v2231 = vld [vmem:[%s2230] sm:$0xff]
    %v2232 = vld [vmem:[%s2230 + $0x8] sm:$0xff]
    %v2233 = vld [vmem:[%s2230 + $0x10] sm:$0xff]
    %v2234 = vld [vmem:[%s2230 + $0x18] sm:$0xff]
    %v2236 = vsel %vm1562, %v2222, 0
    %v2239 = vsel %vm1562, %v2223, 0
    %v2242 = vsel %vm1562, %v2224, 0
    %v2245 = vsel %vm1562, %v2225, 0
    %v2248 = vsel %vm1562, %v2226, 0
    %v2251 = vsel %vm1562, %v2227, 0
    %v2254 = vsel %vm1562, %v2228, 0
    %v2257 = vsel %vm1562, %v2229, 0
    %2259 = vmatprep.subr.mxu0 0.0
    %2260 = vmatpush1.msra.mxu0 %v2231
    %2261 = vmatprep.subr.mxu0 0.0
    %2262 = vmatpush1.msra.mxu0 %v2232
    %2263 = vmatprep.subr.mxu0 0.0
    %2264 = vmatpush1.msra.mxu0 %v2233
    %2265 = vmatprep.subr.mxu0 0.0
    %2266 = vmatpush1.msra.mxu0 %v2234
    %2267 = vmatprep.subr.mxu0 0.0
    %2268 = vmatpush1.msra.mxu0 0.0
    %2269 = vmatprep.subr.mxu0 0.0
    %2270 = vmatpush1.msra.mxu0 0.0
    %2271 = vmatprep.subr.mxu0 0.0
    %2272 = vmatpush1.msra.mxu0 0.0
    %2273 = vmatprep.subr.mxu0 0.0
    %2274 = vmatpush1.msra.mxu0 0.0
    %2275 = vmatprep.subr.mxu0 0.0
    %2276 = vmatpush1.msra.mxu0 0.0
    %2277 = vmatprep.subr.mxu0 0.0
    %2278 = vmatpush1.msra.mxu0 0.0
    %2279 = vmatprep.subr.mxu0 0.0
    %2280 = vmatpush1.msra.mxu0 0.0
    %2281 = vmatprep.subr.mxu0 0.0
    %2282 = vmatpush1.msra.mxu0 0.0
    %2283 = vmatprep.subr.mxu0 0.0
    %2284 = vmatpush1.msra.mxu0 0.0
    %2285 = vmatprep.subr.mxu0 0.0
    %2286 = vmatpush1.msra.mxu0 0.0
    %2287 = vmatprep.subr.mxu0 0.0
    %2288 = vmatpush1.msra.mxu0 0.0
    %2289 = vmatprep.subr.mxu0 0.0
    %2290 = vmatpush1.msra.mxu0 0.0
    %2291 = vmatprep.subr.mxu0 0.0
    %2292 = vmatpush1.msra.mxu0 0.0
    %2293 = vmatprep.subr.mxu0 0.0
    %2294 = vmatpush1.msra.mxu0 0.0
    %2295 = vmatprep.subr.mxu0 0.0
    %2296 = vmatpush1.msra.mxu0 0.0
    %2297 = vmatprep.subr.mxu0 0.0
    %2298 = vmatpush1.msra.mxu0 0.0
    %2299 = vmatprep.subr.mxu0 0.0
    %2300 = vmatpush1.msra.mxu0 0.0
    %2301 = vmatprep.subr.mxu0 0.0
    %2302 = vmatpush1.msra.mxu0 0.0
    %2303 = vmatprep.subr.mxu0 0.0
    %2304 = vmatpush1.msra.mxu0 0.0
    %2305 = vmatprep.subr.mxu0 0.0
    %2306 = vmatpush1.msra.mxu0 0.0
    %2307 = vmatprep.subr.mxu0 0.0
    %2308 = vmatpush1.msra.mxu0 0.0
    %2309 = vmatprep.subr.mxu0 0.0
    %2310 = vmatpush1.msra.mxu0 0.0
    %2311 = vmatprep.subr.mxu0 0.0
    %2312 = vmatpush1.msra.mxu0 0.0
    %2313 = vmatprep.subr.mxu0 0.0
    %2314 = vmatpush1.msra.mxu0 0.0
    %2315 = vmatprep.subr.mxu0 0.0
    %2316 = vmatpush1.msra.mxu0 0.0
    %2317 = vmatprep.subr.mxu0 0.0
    %2318 = vmatpush1.msra.mxu0 0.0
    %2319 = vmatprep.subr.mxu0 0.0
    %2320 = vmatpush1.msra.mxu0 0.0
    %2321 = vmatprep.subr.mxu0 0.0
    %2322 = vmatpush1.msra.mxu0 0.0
    %2323 = vmatprep.mubr.f32.mxu0 0.0
    %2324 = vmatmul.mubr.f32.gmra.mrb[0].mxu0 %v2236
    %v2325 = vpop.f32.mrb[0].mxu0
    %v2326 = vadd.f32 0.0, %v2325
    %v2327 = vpop.f32.mrb[0].mxu0
    %2328 = vmatprep.mubr.f32.mxu0 0.0
    %2329 = vmatmul.mubr.f32.gmra.mrb[0].mxu0 %v2239
    %v2330 = vpop.f32.mrb[0].mxu0
    %v2331 = vadd.f32 0.0, %v2330
    %v2332 = vpop.f32.mrb[0].mxu0
    %2333 = vmatprep.mubr.f32.mxu0 0.0
    %2334 = vmatmul.mubr.f32.gmra.mrb[0].mxu0 %v2242
    %v2335 = vpop.f32.mrb[0].mxu0
    %v2336 = vadd.f32 0.0, %v2335
    %v2337 = vpop.f32.mrb[0].mxu0
    %2338 = vmatprep.mubr.f32.mxu0 0.0
    %2339 = vmatmul.mubr.f32.gmra.mrb[0].mxu0 %v2245
    %v2340 = vpop.f32.mrb[0].mxu0
    %v2341 = vadd.f32 0.0, %v2340
    %v2342 = vpop.f32.mrb[0].mxu0
    %2343 = vmatprep.mubr.f32.mxu0 0.0
    %2344 = vmatmul.mubr.f32.gmra.mrb[0].mxu0 %v2248
    %v2345 = vpop.f32.mrb[0].mxu0
    %v2346 = vadd.f32 0.0, %v2345
    %v2347 = vpop.f32.mrb[0].mxu0
    %2348 = vmatprep.mubr.f32.mxu0 0.0
    %2349 = vmatmul.mubr.f32.gmra.mrb[0].mxu0 %v2251
    %v2350 = vpop.f32.mrb[0].mxu0
    %v2351 = vadd.f32 0.0, %v2350
    %v2352 = vpop.f32.mrb[0].mxu0
    %2353 = vmatprep.mubr.f32.mxu0 0.0
    %2354 = vmatmul.mubr.f32.gmra.mrb[0].mxu0 %v2254
    %v2355 = vpop.f32.mrb[0].mxu0
    %v2356 = vadd.f32 0.0, %v2355
    %v2357 = vpop.f32.mrb[0].mxu0
    %2358 = vmatprep.mubr.f32.mxu0 0.0
    %2359 = vmatmul.mubr.f32.gmra.mrb[0].mxu0 %v2257
    %v2360 = vpop.f32.mrb[0].mxu0
    %v2361 = vadd.f32 0.0, %v2360
    %v2362 = vpop.f32.mrb[0].mxu0
    %2363 = vdwg.mxu0
    %v2364 = vadd.f32 %v2214, %v2326
    %v2365 = vadd.f32 %v2215, %v2331
    %v2366 = vadd.f32 %v2216, %v2336
    %v2367 = vadd.f32 %v2217, %v2341
    %v2368 = vadd.f32 %v2218, %v2346
    %v2369 = vadd.f32 %v2219, %v2351
    %v2370 = vadd.f32 %v2220, %v2356
    %v2371 = vadd.f32 %v2221, %v2361
    %v2372 = vld [vmem:[#allocation2 + $0x8] sm:$0xff]
    %v2373 = vld [vmem:[#allocation2 + $0x10] sm:$0xff]
    %v2374 = vld [vmem:[#allocation2 + $0x18] sm:$0xff]
    %v2375 = vld [vmem:[#allocation2 + $0x20] sm:$0xff]
    %v2376 = vld [vmem:[%s1634 + $0x8] sm:$0xff]
    %v2377 = vld [vmem:[%s1634 + $0x10] sm:$0xff]
    %v2378 = vld [vmem:[%s1634 + $0x18] sm:$0xff]
    %v2379 = vld [vmem:[%s1634 + $0x20] sm:$0xff]
    %s2380 = scalar_lea.vmem %s3, 160
    %v2381 = vld [vmem:[%s2380] sm:$0xff]
    %v2382 = vld [vmem:[%s2380 + $0x8] sm:$0xff]
    %v2383 = vld [vmem:[%s2380 + $0x10] sm:$0xff]
    %v2384 = vld [vmem:[%s2380 + $0x18] sm:$0xff]
    %v2386 = vsel %vm1562, %v2372, 0
    %v2389 = vsel %vm1562, %v2373, 0
    %v2392 = vsel %vm1562, %v2374, 0
    %v2395 = vsel %vm1562, %v2375, 0
    %v2398 = vsel %vm1562, %v2376, 0
    %v2401 = vsel %vm1562, %v2377, 0
    %v2404 = vsel %vm1562, %v2378, 0
    %v2407 = vsel %vm1562, %v2379, 0
    %2409 = vmatprep.subr.mxu0 0.0
    %2410 = vmatpush1.msra.mxu0 %v2381
    %2411 = vmatprep.subr.mxu0 0.0
    %2412 = vmatpush1.msra.mxu0 %v2382
    %2413 = vmatprep.subr.mxu0 0.0
    %2414 = vmatpush1.msra.mxu0 %v2383
    %2415 = vmatprep.subr.mxu0 0.0
    %2416 = vmatpush1.msra.mxu0 %v2384
    %2417 = vmatprep.subr.mxu0 0.0
    %2418 = vmatpush1.msra.mxu0 0.0
    %2419 = vmatprep.subr.mxu0 0.0
    %2420 = vmatpush1.msra.mxu0 0.0
    %2421 = vmatprep.subr.mxu0 0.0
    %2422 = vmatpush1.msra.mxu0 0.0
    %2423 = vmatprep.subr.mxu0 0.0
    %2424 = vmatpush1.msra.mxu0 0.0
    %2425 = vmatprep.subr.mxu0 0.0
    %2426 = vmatpush1.msra.mxu0 0.0
    %2427 = vmatprep.subr.mxu0 0.0
    %2428 = vmatpush1.msra.mxu0 0.0
    %2429 = vmatprep.subr.mxu0 0.0
    %2430 = vmatpush1.msra.mxu0 0.0
    %2431 = vmatprep.subr.mxu0 0.0
    %2432 = vmatpush1.msra.mxu0 0.0
    %2433 = vmatprep.subr.mxu0 0.0
    %2434 = vmatpush1.msra.mxu0 0.0
    %2435 = vmatprep.subr.mxu0 0.0
    %2436 = vmatpush1.msra.mxu0 0.0
    %2437 = vmatprep.subr.mxu0 0.0
    %2438 = vmatpush1.msra.mxu0 0.0
    %2439 = vmatprep.subr.mxu0 0.0
    %2440 = vmatpush1.msra.mxu0 0.0
    %2441 = vmatprep.subr.mxu0 0.0
    %2442 = vmatpush1.msra.mxu0 0.0
    %2443 = vmatprep.subr.mxu0 0.0
    %2444 = vmatpush1.msra.mxu0 0.0
    %2445 = vmatprep.subr.mxu0 0.0
    %2446 = vmatpush1.msra.mxu0 0.0
    %2447 = vmatprep.subr.mxu0 0.0
    %2448 = vmatpush1.msra.mxu0 0.0
    %2449 = vmatprep.subr.mxu0 0.0
    %2450 = vmatpush1.msra.mxu0 0.0
    %2451 = vmatprep.subr.mxu0 0.0
    %2452 = vmatpush1.msra.mxu0 0.0
    %2453 = vmatprep.subr.mxu0 0.0
    %2454 = vmatpush1.msra.mxu0 0.0
    %2455 = vmatprep.subr.mxu0 0.0
    %2456 = vmatpush1.msra.mxu0 0.0
    %2457 = vmatprep.subr.mxu0 0.0
    %2458 = vmatpush1.msra.mxu0 0.0
    %2459 = vmatprep.subr.mxu0 0.0
    %2460 = vmatpush1.msra.mxu0 0.0
    %2461 = vmatprep.subr.mxu0 0.0
    %2462 = vmatpush1.msra.mxu0 0.0
    %2463 = vmatprep.subr.mxu0 0.0
    %2464 = vmatpush1.msra.mxu0 0.0
    %2465 = vmatprep.subr.mxu0 0.0
    %2466 = vmatpush1.msra.mxu0 0.0
    %2467 = vmatprep.subr.mxu0 0.0
    %2468 = vmatpush1.msra.mxu0 0.0
    %2469 = vmatprep.subr.mxu0 0.0
    %2470 = vmatpush1.msra.mxu0 0.0
    %2471 = vmatprep.subr.mxu0 0.0
    %2472 = vmatpush1.msra.mxu0 0.0
    %2473 = vmatprep.mubr.f32.mxu0 0.0
    %2474 = vmatmul.mubr.f32.gmra.mrb[0].mxu0 %v2386
    %v2475 = vpop.f32.mrb[0].mxu0
    %v2476 = vadd.f32 0.0, %v2475
    %v2477 = vpop.f32.mrb[0].mxu0
    %2478 = vmatprep.mubr.f32.mxu0 0.0
    %2479 = vmatmul.mubr.f32.gmra.mrb[0].mxu0 %v2389
    %v2480 = vpop.f32.mrb[0].mxu0
    %v2481 = vadd.f32 0.0, %v2480
    %v2482 = vpop.f32.mrb[0].mxu0
    %2483 = vmatprep.mubr.f32.mxu0 0.0
    %2484 = vmatmul.mubr.f32.gmra.mrb[0].mxu0 %v2392
    %v2485 = vpop.f32.mrb[0].mxu0
    %v2486 = vadd.f32 0.0, %v2485
    %v2487 = vpop.f32.mrb[0].mxu0
    %2488 = vmatprep.mubr.f32.mxu0 0.0
    %2489 = vmatmul.mubr.f32.gmra.mrb[0].mxu0 %v2395
    %v2490 = vpop.f32.mrb[0].mxu0
    %v2491 = vadd.f32 0.0, %v2490
    %v2492 = vpop.f32.mrb[0].mxu0
    %2493 = vmatprep.mubr.f32.mxu0 0.0
    %2494 = vmatmul.mubr.f32.gmra.mrb[0].mxu0 %v2398
    %v2495 = vpop.f32.mrb[0].mxu0
    %v2496 = vadd.f32 0.0, %v2495
    %v2497 = vpop.f32.mrb[0].mxu0
    %2498 = vmatprep.mubr.f32.mxu0 0.0
    %2499 = vmatmul.mubr.f32.gmra.mrb[0].mxu0 %v2401
    %v2500 = vpop.f32.mrb[0].mxu0
    %v2501 = vadd.f32 0.0, %v2500
    %v2502 = vpop.f32.mrb[0].mxu0
    %2503 = vmatprep.mubr.f32.mxu0 0.0
    %2504 = vmatmul.mubr.f32.gmra.mrb[0].mxu0 %v2404
    %v2505 = vpop.f32.mrb[0].mxu0
    %v2506 = vadd.f32 0.0, %v2505
    %v2507 = vpop.f32.mrb[0].mxu0
    %2508 = vmatprep.mubr.f32.mxu0 0.0
    %2509 = vmatmul.mubr.f32.gmra.mrb[0].mxu0 %v2407
    %v2510 = vpop.f32.mrb[0].mxu0
    %v2511 = vadd.f32 0.0, %v2510
    %v2512 = vpop.f32.mrb[0].mxu0
    %2513 = vdwg.mxu0
    %v2514 = vadd.f32 %v2364, %v2476
    %v2515 = vadd.f32 %v2365, %v2481
    %v2516 = vadd.f32 %v2366, %v2486
    %v2517 = vadd.f32 %v2367, %v2491
    %v2518 = vadd.f32 %v2368, %v2496
    %v2519 = vadd.f32 %v2369, %v2501
    %v2520 = vadd.f32 %v2370, %v2506
    %v2521 = vadd.f32 %v2371, %v2511
    %v2522 = vld [vmem:[#allocation2 + $0x9] sm:$0xff]
    %v2523 = vld [vmem:[#allocation2 + $0x11] sm:$0xff]
    %v2524 = vld [vmem:[#allocation2 + $0x19] sm:$0xff]
    %v2525 = vld [vmem:[#allocation2 + $0x21] sm:$0xff]
    %v2526 = vld [vmem:[%s1634 + $0x9] sm:$0xff]
    %v2527 = vld [vmem:[%s1634 + $0x11] sm:$0xff]
    %v2528 = vld [vmem:[%s1634 + $0x19] sm:$0xff]
    %v2529 = vld [vmem:[%s1634 + $0x21] sm:$0xff]
    %s2530 = scalar_lea.vmem %s3, 192
    %v2531 = vld [vmem:[%s2530] sm:$0xff]
    %v2532 = vld [vmem:[%s2530 + $0x8] sm:$0xff]
    %v2533 = vld [vmem:[%s2530 + $0x10] sm:$0xff]
    %v2534 = vld [vmem:[%s2530 + $0x18] sm:$0xff]
    %v2536 = vsel %vm1562, %v2522, 0
    %v2539 = vsel %vm1562, %v2523, 0
    %v2542 = vsel %vm1562, %v2524, 0
    %v2545 = vsel %vm1562, %v2525, 0
    %v2548 = vsel %vm1562, %v2526, 0
    %v2551 = vsel %vm1562, %v2527, 0
    %v2554 = vsel %vm1562, %v2528, 0
    %v2557 = vsel %vm1562, %v2529, 0
    %2559 = vmatprep.subr.mxu0 0.0
    %2560 = vmatpush1.msra.mxu0 %v2531
    %2561 = vmatprep.subr.mxu0 0.0
    %2562 = vmatpush1.msra.mxu0 %v2532
    %2563 = vmatprep.subr.mxu0 0.0
    %2564 = vmatpush1.msra.mxu0 %v2533
    %2565 = vmatprep.subr.mxu0 0.0
    %2566 = vmatpush1.msra.mxu0 %v2534
    %2567 = vmatprep.subr.mxu0 0.0
    %2568 = vmatpush1.msra.mxu0 0.0
    %2569 = vmatprep.subr.mxu0 0.0
    %2570 = vmatpush1.msra.mxu0 0.0
    %2571 = vmatprep.subr.mxu0 0.0
    %2572 = vmatpush1.msra.mxu0 0.0
    %2573 = vmatprep.subr.mxu0 0.0
    %2574 = vmatpush1.msra.mxu0 0.0
    %2575 = vmatprep.subr.mxu0 0.0
    %2576 = vmatpush1.msra.mxu0 0.0
    %2577 = vmatprep.subr.mxu0 0.0
    %2578 = vmatpush1.msra.mxu0 0.0
    %2579 = vmatprep.subr.mxu0 0.0
    %2580 = vmatpush1.msra.mxu0 0.0
    %2581 = vmatprep.subr.mxu0 0.0
    %2582 = vmatpush1.msra.mxu0 0.0
    %2583 = vmatprep.subr.mxu0 0.0
    %2584 = vmatpush1.msra.mxu0 0.0
    %2585 = vmatprep.subr.mxu0 0.0
    %2586 = vmatpush1.msra.mxu0 0.0
    %2587 = vmatprep.subr.mxu0 0.0
    %2588 = vmatpush1.msra.mxu0 0.0
    %2589 = vmatprep.subr.mxu0 0.0
    %2590 = vmatpush1.msra.mxu0 0.0
    %2591 = vmatprep.subr.mxu0 0.0
    %2592 = vmatpush1.msra.mxu0 0.0
    %2593 = vmatprep.subr.mxu0 0.0
    %2594 = vmatpush1.msra.mxu0 0.0
    %2595 = vmatprep.subr.mxu0 0.0
    %2596 = vmatpush1.msra.mxu0 0.0
    %2597 = vmatprep.subr.mxu0 0.0
    %2598 = vmatpush1.msra.mxu0 0.0
    %2599 = vmatprep.subr.mxu0 0.0
    %2600 = vmatpush1.msra.mxu0 0.0
    %2601 = vmatprep.subr.mxu0 0.0
    %2602 = vmatpush1.msra.mxu0 0.0
    %2603 = vmatprep.subr.mxu0 0.0
    %2604 = vmatpush1.msra.mxu0 0.0
    %2605 = vmatprep.subr.mxu0 0.0
    %2606 = vmatpush1.msra.mxu0 0.0
    %2607 = vmatprep.subr.mxu0 0.0
    %2608 = vmatpush1.msra.mxu0 0.0
    %2609 = vmatprep.subr.mxu0 0.0
    %2610 = vmatpush1.msra.mxu0 0.0
    %2611 = vmatprep.subr.mxu0 0.0
    %2612 = vmatpush1.msra.mxu0 0.0
    %2613 = vmatprep.subr.mxu0 0.0
    %2614 = vmatpush1.msra.mxu0 0.0
    %2615 = vmatprep.subr.mxu0 0.0
    %2616 = vmatpush1.msra.mxu0 0.0
    %2617 = vmatprep.subr.mxu0 0.0
    %2618 = vmatpush1.msra.mxu0 0.0
    %2619 = vmatprep.subr.mxu0 0.0
    %2620 = vmatpush1.msra.mxu0 0.0
    %2621 = vmatprep.subr.mxu0 0.0
    %2622 = vmatpush1.msra.mxu0 0.0
    %2623 = vmatprep.mubr.f32.mxu0 0.0
    %2624 = vmatmul.mubr.f32.gmra.mrb[0].mxu0 %v2536
    %v2625 = vpop.f32.mrb[0].mxu0
    %v2626 = vadd.f32 0.0, %v2625
    %v2627 = vpop.f32.mrb[0].mxu0
    %2628 = vmatprep.mubr.f32.mxu0 0.0
    %2629 = vmatmul.mubr.f32.gmra.mrb[0].mxu0 %v2539
    %v2630 = vpop.f32.mrb[0].mxu0
    %v2631 = vadd.f32 0.0, %v2630
    %v2632 = vpop.f32.mrb[0].mxu0
    %2633 = vmatprep.mubr.f32.mxu0 0.0
    %2634 = vmatmul.mubr.f32.gmra.mrb[0].mxu0 %v2542
    %v2635 = vpop.f32.mrb[0].mxu0
    %v2636 = vadd.f32 0.0, %v2635
    %v2637 = vpop.f32.mrb[0].mxu0
    %2638 = vmatprep.mubr.f32.mxu0 0.0
    %2639 = vmatmul.mubr.f32.gmra.mrb[0].mxu0 %v2545
    %v2640 = vpop.f32.mrb[0].mxu0
    %v2641 = vadd.f32 0.0, %v2640
    %v2642 = vpop.f32.mrb[0].mxu0
    %2643 = vmatprep.mubr.f32.mxu0 0.0
    %2644 = vmatmul.mubr.f32.gmra.mrb[0].mxu0 %v2548
    %v2645 = vpop.f32.mrb[0].mxu0
    %v2646 = vadd.f32 0.0, %v2645
    %v2647 = vpop.f32.mrb[0].mxu0
    %2648 = vmatprep.mubr.f32.mxu0 0.0
    %2649 = vmatmul.mubr.f32.gmra.mrb[0].mxu0 %v2551
    %v2650 = vpop.f32.mrb[0].mxu0
    %v2651 = vadd.f32 0.0, %v2650
    %v2652 = vpop.f32.mrb[0].mxu0
    %2653 = vmatprep.mubr.f32.mxu0 0.0
    %2654 = vmatmul.mubr.f32.gmra.mrb[0].mxu0 %v2554
    %v2655 = vpop.f32.mrb[0].mxu0
    %v2656 = vadd.f32 0.0, %v2655
    %v2657 = vpop.f32.mrb[0].mxu0
    %2658 = vmatprep.mubr.f32.mxu0 0.0
    %2659 = vmatmul.mubr.f32.gmra.mrb[0].mxu0 %v2557
    %v2660 = vpop.f32.mrb[0].mxu0
    %v2661 = vadd.f32 0.0, %v2660
    %v2662 = vpop.f32.mrb[0].mxu0
    %2663 = vdwg.mxu0
    %v2664 = vadd.f32 %v2514, %v2626
    %v2665 = vadd.f32 %v2515, %v2631
    %v2666 = vadd.f32 %v2516, %v2636
    %v2667 = vadd.f32 %v2517, %v2641
    %v2668 = vadd.f32 %v2518, %v2646
    %v2669 = vadd.f32 %v2519, %v2651
    %v2670 = vadd.f32 %v2520, %v2656
    %v2671 = vadd.f32 %v2521, %v2661
    %v2672 = vld [vmem:[#allocation2 + $0xa] sm:$0xff]
    %v2673 = vld [vmem:[#allocation2 + $0x12] sm:$0xff]
    %v2674 = vld [vmem:[#allocation2 + $0x1a] sm:$0xff]
    %v2675 = vld [vmem:[#allocation2 + $0x22] sm:$0xff]
    %v2676 = vld [vmem:[%s1634 + $0xa] sm:$0xff]
    %v2677 = vld [vmem:[%s1634 + $0x12] sm:$0xff]
    %v2678 = vld [vmem:[%s1634 + $0x1a] sm:$0xff]
    %v2679 = vld [vmem:[%s1634 + $0x22] sm:$0xff]
    %s2680 = scalar_lea.vmem %s3, 224
    %v2681 = vld [vmem:[%s2680] sm:$0xff]
    %v2682 = vld [vmem:[%s2680 + $0x8] sm:$0xff]
    %v2683 = vld [vmem:[%s2680 + $0x10] sm:$0xff]
    %v2684 = vld [vmem:[%s2680 + $0x18] sm:$0xff]
    %v2686 = vsel %vm1562, %v2672, 0
    %v2689 = vsel %vm1562, %v2673, 0
    %v2692 = vsel %vm1562, %v2674, 0
    %v2695 = vsel %vm1562, %v2675, 0
    %v2698 = vsel %vm1562, %v2676, 0
    %v2701 = vsel %vm1562, %v2677, 0
    %v2704 = vsel %vm1562, %v2678, 0
    %v2707 = vsel %vm1562, %v2679, 0
    %2709 = vmatprep.subr.mxu0 0.0
    %2710 = vmatpush1.msra.mxu0 %v2681
    %2711 = vmatprep.subr.mxu0 0.0
    %2712 = vmatpush1.msra.mxu0 %v2682
    %2713 = vmatprep.subr.mxu0 0.0
    %2714 = vmatpush1.msra.mxu0 %v2683
    %2715 = vmatprep.subr.mxu0 0.0
    %2716 = vmatpush1.msra.mxu0 %v2684
    %2717 = vmatprep.subr.mxu0 0.0
    %2718 = vmatpush1.msra.mxu0 0.0
    %2719 = vmatprep.subr.mxu0 0.0
    %2720 = vmatpush1.msra.mxu0 0.0
    %2721 = vmatprep.subr.mxu0 0.0
    %2722 = vmatpush1.msra.mxu0 0.0
    %2723 = vmatprep.subr.mxu0 0.0
    %2724 = vmatpush1.msra.mxu0 0.0
    %2725 = vmatprep.subr.mxu0 0.0
    %2726 = vmatpush1.msra.mxu0 0.0
    %2727 = vmatprep.subr.mxu0 0.0
    %2728 = vmatpush1.msra.mxu0 0.0
    %2729 = vmatprep.subr.mxu0 0.0
    %2730 = vmatpush1.msra.mxu0 0.0
    %2731 = vmatprep.subr.mxu0 0.0
    %2732 = vmatpush1.msra.mxu0 0.0
    %2733 = vmatprep.subr.mxu0 0.0
    %2734 = vmatpush1.msra.mxu0 0.0
    %2735 = vmatprep.subr.mxu0 0.0
    %2736 = vmatpush1.msra.mxu0 0.0
    %2737 = vmatprep.subr.mxu0 0.0
    %2738 = vmatpush1.msra.mxu0 0.0
    %2739 = vmatprep.subr.mxu0 0.0
    %2740 = vmatpush1.msra.mxu0 0.0
    %2741 = vmatprep.subr.mxu0 0.0
    %2742 = vmatpush1.msra.mxu0 0.0
    %2743 = vmatprep.subr.mxu0 0.0
    %2744 = vmatpush1.msra.mxu0 0.0
    %2745 = vmatprep.subr.mxu0 0.0
    %2746 = vmatpush1.msra.mxu0 0.0
    %2747 = vmatprep.subr.mxu0 0.0
    %2748 = vmatpush1.msra.mxu0 0.0
    %2749 = vmatprep.subr.mxu0 0.0
    %2750 = vmatpush1.msra.mxu0 0.0
    %2751 = vmatprep.subr.mxu0 0.0
    %2752 = vmatpush1.msra.mxu0 0.0
    %2753 = vmatprep.subr.mxu0 0.0
    %2754 = vmatpush1.msra.mxu0 0.0
    %2755 = vmatprep.subr.mxu0 0.0
    %2756 = vmatpush1.msra.mxu0 0.0
    %2757 = vmatprep.subr.mxu0 0.0
    %2758 = vmatpush1.msra.mxu0 0.0
    %2759 = vmatprep.subr.mxu0 0.0
    %2760 = vmatpush1.msra.mxu0 0.0
    %2761 = vmatprep.subr.mxu0 0.0
    %2762 = vmatpush1.msra.mxu0 0.0
    %2763 = vmatprep.subr.mxu0 0.0
    %2764 = vmatpush1.msra.mxu0 0.0
    %2765 = vmatprep.subr.mxu0 0.0
    %2766 = vmatpush1.msra.mxu0 0.0
    %2767 = vmatprep.subr.mxu0 0.0
    %2768 = vmatpush1.msra.mxu0 0.0
    %2769 = vmatprep.subr.mxu0 0.0
    %2770 = vmatpush1.msra.mxu0 0.0
    %2771 = vmatprep.subr.mxu0 0.0
    %2772 = vmatpush1.msra.mxu0 0.0
    %2773 = vmatprep.mubr.f32.mxu0 0.0
    %2774 = vmatmul.mubr.f32.gmra.mrb[0].mxu0 %v2686
    %v2775 = vpop.f32.mrb[0].mxu0
    %v2776 = vadd.f32 0.0, %v2775
    %v2777 = vpop.f32.mrb[0].mxu0
    %2778 = vmatprep.mubr.f32.mxu0 0.0
    %2779 = vmatmul.mubr.f32.gmra.mrb[0].mxu0 %v2689
    %v2780 = vpop.f32.mrb[0].mxu0
    %v2781 = vadd.f32 0.0, %v2780
    %v2782 = vpop.f32.mrb[0].mxu0
    %2783 = vmatprep.mubr.f32.mxu0 0.0
    %2784 = vmatmul.mubr.f32.gmra.mrb[0].mxu0 %v2692
    %v2785 = vpop.f32.mrb[0].mxu0
    %v2786 = vadd.f32 0.0, %v2785
    %v2787 = vpop.f32.mrb[0].mxu0
    %2788 = vmatprep.mubr.f32.mxu0 0.0
    %2789 = vmatmul.mubr.f32.gmra.mrb[0].mxu0 %v2695
    %v2790 = vpop.f32.mrb[0].mxu0
    %v2791 = vadd.f32 0.0, %v2790
    %v2792 = vpop.f32.mrb[0].mxu0
    %2793 = vmatprep.mubr.f32.mxu0 0.0
    %2794 = vmatmul.mubr.f32.gmra.mrb[0].mxu0 %v2698
    %v2795 = vpop.f32.mrb[0].mxu0
    %v2796 = vadd.f32 0.0, %v2795
    %v2797 = vpop.f32.mrb[0].mxu0
    %2798 = vmatprep.mubr.f32.mxu0 0.0
    %2799 = vmatmul.mubr.f32.gmra.mrb[0].mxu0 %v2701
    %v2800 = vpop.f32.mrb[0].mxu0
    %v2801 = vadd.f32 0.0, %v2800
    %v2802 = vpop.f32.mrb[0].mxu0
    %2803 = vmatprep.mubr.f32.mxu0 0.0
    %2804 = vmatmul.mubr.f32.gmra.mrb[0].mxu0 %v2704
    %v2805 = vpop.f32.mrb[0].mxu0
    %v2806 = vadd.f32 0.0, %v2805
    %v2807 = vpop.f32.mrb[0].mxu0
    %2808 = vmatprep.mubr.f32.mxu0 0.0
    %2809 = vmatmul.mubr.f32.gmra.mrb[0].mxu0 %v2707
    %v2810 = vpop.f32.mrb[0].mxu0
    %v2811 = vadd.f32 0.0, %v2810
    %v2812 = vpop.f32.mrb[0].mxu0
    %2813 = vdwg.mxu0
    %v2814 = vadd.f32 %v2664, %v2776
    %v2815 = vadd.f32 %v2665, %v2781
    %v2816 = vadd.f32 %v2666, %v2786
    %v2817 = vadd.f32 %v2667, %v2791
    %v2818 = vadd.f32 %v2668, %v2796
    %v2819 = vadd.f32 %v2669, %v2801
    %v2820 = vadd.f32 %v2670, %v2806
    %v2821 = vadd.f32 %v2671, %v2811
    %v2822 = vld [vmem:[#allocation2 + $0xb] sm:$0xff]
    %v2823 = vld [vmem:[#allocation2 + $0x13] sm:$0xff]
    %v2824 = vld [vmem:[#allocation2 + $0x1b] sm:$0xff]
    %v2825 = vld [vmem:[#allocation2 + $0x23] sm:$0xff]
    %v2826 = vld [vmem:[%s1634 + $0xb] sm:$0xff]
    %v2827 = vld [vmem:[%s1634 + $0x13] sm:$0xff]
    %v2828 = vld [vmem:[%s1634 + $0x1b] sm:$0xff]
    %v2829 = vld [vmem:[%s1634 + $0x23] sm:$0xff]
    %s2830 = scalar_lea.vmem %s3, 256
    %v2831 = vld [vmem:[%s2830] sm:$0xff]
    %v2832 = vld [vmem:[%s2830 + $0x8] sm:$0xff]
    %v2833 = vld [vmem:[%s2830 + $0x10] sm:$0xff]
    %v2834 = vld [vmem:[%s2830 + $0x18] sm:$0xff]
    %v2836 = vsel %vm1562, %v2822, 0
    %v2839 = vsel %vm1562, %v2823, 0
    %v2842 = vsel %vm1562, %v2824, 0
    %v2845 = vsel %vm1562, %v2825, 0
    %v2848 = vsel %vm1562, %v2826, 0
    %v2851 = vsel %vm1562, %v2827, 0
    %v2854 = vsel %vm1562, %v2828, 0
    %v2857 = vsel %vm1562, %v2829, 0
    %2859 = vmatprep.subr.mxu0 0.0
    %2860 = vmatpush1.msra.mxu0 %v2831
    %2861 = vmatprep.subr.mxu0 0.0
    %2862 = vmatpush1.msra.mxu0 %v2832
    %2863 = vmatprep.subr.mxu0 0.0
    %2864 = vmatpush1.msra.mxu0 %v2833
    %2865 = vmatprep.subr.mxu0 0.0
    %2866 = vmatpush1.msra.mxu0 %v2834
    %2867 = vmatprep.subr.mxu0 0.0
    %2868 = vmatpush1.msra.mxu0 0.0
    %2869 = vmatprep.subr.mxu0 0.0
    %2870 = vmatpush1.msra.mxu0 0.0
    %2871 = vmatprep.subr.mxu0 0.0
    %2872 = vmatpush1.msra.mxu0 0.0
    %2873 = vmatprep.subr.mxu0 0.0
    %2874 = vmatpush1.msra.mxu0 0.0
    %2875 = vmatprep.subr.mxu0 0.0
    %2876 = vmatpush1.msra.mxu0 0.0
    %2877 = vmatprep.subr.mxu0 0.0
    %2878 = vmatpush1.msra.mxu0 0.0
    %2879 = vmatprep.subr.mxu0 0.0
    %2880 = vmatpush1.msra.mxu0 0.0
    %2881 = vmatprep.subr.mxu0 0.0
    %2882 = vmatpush1.msra.mxu0 0.0
    %2883 = vmatprep.subr.mxu0 0.0
    %2884 = vmatpush1.msra.mxu0 0.0
    %2885 = vmatprep.subr.mxu0 0.0
    %2886 = vmatpush1.msra.mxu0 0.0
    %2887 = vmatprep.subr.mxu0 0.0
    %2888 = vmatpush1.msra.mxu0 0.0
    %2889 = vmatprep.subr.mxu0 0.0
    %2890 = vmatpush1.msra.mxu0 0.0
    %2891 = vmatprep.subr.mxu0 0.0
    %2892 = vmatpush1.msra.mxu0 0.0
    %2893 = vmatprep.subr.mxu0 0.0
    %2894 = vmatpush1.msra.mxu0 0.0
    %2895 = vmatprep.subr.mxu0 0.0
    %2896 = vmatpush1.msra.mxu0 0.0
    %2897 = vmatprep.subr.mxu0 0.0
    %2898 = vmatpush1.msra.mxu0 0.0
    %2899 = vmatprep.subr.mxu0 0.0
    %2900 = vmatpush1.msra.mxu0 0.0
    %2901 = vmatprep.subr.mxu0 0.0
    %2902 = vmatpush1.msra.mxu0 0.0
    %2903 = vmatprep.subr.mxu0 0.0
    %2904 = vmatpush1.msra.mxu0 0.0
    %2905 = vmatprep.subr.mxu0 0.0
    %2906 = vmatpush1.msra.mxu0 0.0
    %2907 = vmatprep.subr.mxu0 0.0
    %2908 = vmatpush1.msra.mxu0 0.0
    %2909 = vmatprep.subr.mxu0 0.0
    %2910 = vmatpush1.msra.mxu0 0.0
    %2911 = vmatprep.subr.mxu0 0.0
    %2912 = vmatpush1.msra.mxu0 0.0
    %2913 = vmatprep.subr.mxu0 0.0
    %2914 = vmatpush1.msra.mxu0 0.0
    %2915 = vmatprep.subr.mxu0 0.0
    %2916 = vmatpush1.msra.mxu0 0.0
    %2917 = vmatprep.subr.mxu0 0.0
    %2918 = vmatpush1.msra.mxu0 0.0
    %2919 = vmatprep.subr.mxu0 0.0
    %2920 = vmatpush1.msra.mxu0 0.0
    %2921 = vmatprep.subr.mxu0 0.0
    %2922 = vmatpush1.msra.mxu0 0.0
    %2923 = vmatprep.mubr.f32.mxu0 0.0
    %2924 = vmatmul.mubr.f32.gmra.mrb[0].mxu0 %v2836
    %v2925 = vpop.f32.mrb[0].mxu0
    %v2926 = vadd.f32 0.0, %v2925
    %v2927 = vpop.f32.mrb[0].mxu0
    %2928 = vmatprep.mubr.f32.mxu0 0.0
    %2929 = vmatmul.mubr.f32.gmra.mrb[0].mxu0 %v2839
    %v2930 = vpop.f32.mrb[0].mxu0
    %v2931 = vadd.f32 0.0, %v2930
    %v2932 = vpop.f32.mrb[0].mxu0
    %2933 = vmatprep.mubr.f32.mxu0 0.0
    %2934 = vmatmul.mubr.f32.gmra.mrb[0].mxu0 %v2842
    %v2935 = vpop.f32.mrb[0].mxu0
    %v2936 = vadd.f32 0.0, %v2935
    %v2937 = vpop.f32.mrb[0].mxu0
    %2938 = vmatprep.mubr.f32.mxu0 0.0
    %2939 = vmatmul.mubr.f32.gmra.mrb[0].mxu0 %v2845
    %v2940 = vpop.f32.mrb[0].mxu0
    %v2941 = vadd.f32 0.0, %v2940
    %v2942 = vpop.f32.mrb[0].mxu0
    %2943 = vmatprep.mubr.f32.mxu0 0.0
    %2944 = vmatmul.mubr.f32.gmra.mrb[0].mxu0 %v2848
    %v2945 = vpop.f32.mrb[0].mxu0
    %v2946 = vadd.f32 0.0, %v2945
    %v2947 = vpop.f32.mrb[0].mxu0
    %2948 = vmatprep.mubr.f32.mxu0 0.0
    %2949 = vmatmul.mubr.f32.gmra.mrb[0].mxu0 %v2851
    %v2950 = vpop.f32.mrb[0].mxu0
    %v2951 = vadd.f32 0.0, %v2950
    %v2952 = vpop.f32.mrb[0].mxu0
    %2953 = vmatprep.mubr.f32.mxu0 0.0
    %2954 = vmatmul.mubr.f32.gmra.mrb[0].mxu0 %v2854
    %v2955 = vpop.f32.mrb[0].mxu0
    %v2956 = vadd.f32 0.0, %v2955
    %v2957 = vpop.f32.mrb[0].mxu0
    %2958 = vmatprep.mubr.f32.mxu0 0.0
    %2959 = vmatmul.mubr.f32.gmra.mrb[0].mxu0 %v2857
    %v2960 = vpop.f32.mrb[0].mxu0
    %v2961 = vadd.f32 0.0, %v2960
    %v2962 = vpop.f32.mrb[0].mxu0
    %2963 = vdwg.mxu0
    %v2964 = vadd.f32 %v2814, %v2926
    %v2965 = vadd.f32 %v2815, %v2931
    %v2966 = vadd.f32 %v2816, %v2936
    %v2967 = vadd.f32 %v2817, %v2941
    %v2968 = vadd.f32 %v2818, %v2946
    %v2969 = vadd.f32 %v2819, %v2951
    %v2970 = vadd.f32 %v2820, %v2956
    %v2971 = vadd.f32 %v2821, %v2961
    %v2972 = vld [vmem:[#allocation2 + $0xc] sm:$0xff]
    %v2973 = vld [vmem:[#allocation2 + $0x14] sm:$0xff]
    %v2974 = vld [vmem:[#allocation2 + $0x1c] sm:$0xff]
    %v2975 = vld [vmem:[#allocation2 + $0x24] sm:$0xff]
    %v2976 = vld [vmem:[%s1634 + $0xc] sm:$0xff]
    %v2977 = vld [vmem:[%s1634 + $0x14] sm:$0xff]
    %v2978 = vld [vmem:[%s1634 + $0x1c] sm:$0xff]
    %v2979 = vld [vmem:[%s1634 + $0x24] sm:$0xff]
    %s2980 = scalar_lea.vmem %s3, 288
    %v2981 = vld [vmem:[%s2980] sm:$0xff]
    %v2982 = vld [vmem:[%s2980 + $0x8] sm:$0xff]
    %v2983 = vld [vmem:[%s2980 + $0x10] sm:$0xff]
    %v2984 = vld [vmem:[%s2980 + $0x18] sm:$0xff]
    %v2986 = vsel %vm1562, %v2972, 0
    %v2989 = vsel %vm1562, %v2973, 0
    %v2992 = vsel %vm1562, %v2974, 0
    %v2995 = vsel %vm1562, %v2975, 0
    %v2998 = vsel %vm1562, %v2976, 0
    %v3001 = vsel %vm1562, %v2977, 0
    %v3004 = vsel %vm1562, %v2978, 0
    %v3007 = vsel %vm1562, %v2979, 0
    %3009 = vmatprep.subr.mxu0 0.0
    %3010 = vmatpush1.msra.mxu0 %v2981
    %3011 = vmatprep.subr.mxu0 0.0
    %3012 = vmatpush1.msra.mxu0 %v2982
    %3013 = vmatprep.subr.mxu0 0.0
    %3014 = vmatpush1.msra.mxu0 %v2983
    %3015 = vmatprep.subr.mxu0 0.0
    %3016 = vmatpush1.msra.mxu0 %v2984
    %3017 = vmatprep.subr.mxu0 0.0
    %3018 = vmatpush1.msra.mxu0 0.0
    %3019 = vmatprep.subr.mxu0 0.0
    %3020 = vmatpush1.msra.mxu0 0.0
    %3021 = vmatprep.subr.mxu0 0.0
    %3022 = vmatpush1.msra.mxu0 0.0
    %3023 = vmatprep.subr.mxu0 0.0
    %3024 = vmatpush1.msra.mxu0 0.0
    %3025 = vmatprep.subr.mxu0 0.0
    %3026 = vmatpush1.msra.mxu0 0.0
    %3027 = vmatprep.subr.mxu0 0.0
    %3028 = vmatpush1.msra.mxu0 0.0
    %3029 = vmatprep.subr.mxu0 0.0
    %3030 = vmatpush1.msra.mxu0 0.0
    %3031 = vmatprep.subr.mxu0 0.0
    %3032 = vmatpush1.msra.mxu0 0.0
    %3033 = vmatprep.subr.mxu0 0.0
    %3034 = vmatpush1.msra.mxu0 0.0
    %3035 = vmatprep.subr.mxu0 0.0
    %3036 = vmatpush1.msra.mxu0 0.0
    %3037 = vmatprep.subr.mxu0 0.0
    %3038 = vmatpush1.msra.mxu0 0.0
    %3039 = vmatprep.subr.mxu0 0.0
    %3040 = vmatpush1.msra.mxu0 0.0
    %3041 = vmatprep.subr.mxu0 0.0
    %3042 = vmatpush1.msra.mxu0 0.0
    %3043 = vmatprep.subr.mxu0 0.0
    %3044 = vmatpush1.msra.mxu0 0.0
    %3045 = vmatprep.subr.mxu0 0.0
    %3046 = vmatpush1.msra.mxu0 0.0
    %3047 = vmatprep.subr.mxu0 0.0
    %3048 = vmatpush1.msra.mxu0 0.0
    %3049 = vmatprep.subr.mxu0 0.0
    %3050 = vmatpush1.msra.mxu0 0.0
    %3051 = vmatprep.subr.mxu0 0.0
    %3052 = vmatpush1.msra.mxu0 0.0
    %3053 = vmatprep.subr.mxu0 0.0
    %3054 = vmatpush1.msra.mxu0 0.0
    %3055 = vmatprep.subr.mxu0 0.0
    %3056 = vmatpush1.msra.mxu0 0.0
    %3057 = vmatprep.subr.mxu0 0.0
    %3058 = vmatpush1.msra.mxu0 0.0
    %3059 = vmatprep.subr.mxu0 0.0
    %3060 = vmatpush1.msra.mxu0 0.0
    %3061 = vmatprep.subr.mxu0 0.0
    %3062 = vmatpush1.msra.mxu0 0.0
    %3063 = vmatprep.subr.mxu0 0.0
    %3064 = vmatpush1.msra.mxu0 0.0
    %3065 = vmatprep.subr.mxu0 0.0
    %3066 = vmatpush1.msra.mxu0 0.0
    %3067 = vmatprep.subr.mxu0 0.0
    %3068 = vmatpush1.msra.mxu0 0.0
    %3069 = vmatprep.subr.mxu0 0.0
    %3070 = vmatpush1.msra.mxu0 0.0
    %3071 = vmatprep.subr.mxu0 0.0
    %3072 = vmatpush1.msra.mxu0 0.0
    %3073 = vmatprep.mubr.f32.mxu0 0.0
    %3074 = vmatmul.mubr.f32.gmra.mrb[0].mxu0 %v2986
    %v3075 = vpop.f32.mrb[0].mxu0
    %v3076 = vadd.f32 0.0, %v3075
    %v3077 = vpop.f32.mrb[0].mxu0
    %3078 = vmatprep.mubr.f32.mxu0 0.0
    %3079 = vmatmul.mubr.f32.gmra.mrb[0].mxu0 %v2989
    %v3080 = vpop.f32.mrb[0].mxu0
    %v3081 = vadd.f32 0.0, %v3080
    %v3082 = vpop.f32.mrb[0].mxu0
    %3083 = vmatprep.mubr.f32.mxu0 0.0
    %3084 = vmatmul.mubr.f32.gmra.mrb[0].mxu0 %v2992
    %v3085 = vpop.f32.mrb[0].mxu0
    %v3086 = vadd.f32 0.0, %v3085
    %v3087 = vpop.f32.mrb[0].mxu0
    %3088 = vmatprep.mubr.f32.mxu0 0.0
    %3089 = vmatmul.mubr.f32.gmra.mrb[0].mxu0 %v2995
    %v3090 = vpop.f32.mrb[0].mxu0
    %v3091 = vadd.f32 0.0, %v3090
    %v3092 = vpop.f32.mrb[0].mxu0
    %3093 = vmatprep.mubr.f32.mxu0 0.0
    %3094 = vmatmul.mubr.f32.gmra.mrb[0].mxu0 %v2998
    %v3095 = vpop.f32.mrb[0].mxu0
    %v3096 = vadd.f32 0.0, %v3095
    %v3097 = vpop.f32.mrb[0].mxu0
    %3098 = vmatprep.mubr.f32.mxu0 0.0
    %3099 = vmatmul.mubr.f32.gmra.mrb[0].mxu0 %v3001
    %v3100 = vpop.f32.mrb[0].mxu0
    %v3101 = vadd.f32 0.0, %v3100
    %v3102 = vpop.f32.mrb[0].mxu0
    %3103 = vmatprep.mubr.f32.mxu0 0.0
    %3104 = vmatmul.mubr.f32.gmra.mrb[0].mxu0 %v3004
    %v3105 = vpop.f32.mrb[0].mxu0
    %v3106 = vadd.f32 0.0, %v3105
    %v3107 = vpop.f32.mrb[0].mxu0
    %3108 = vmatprep.mubr.f32.mxu0 0.0
    %3109 = vmatmul.mubr.f32.gmra.mrb[0].mxu0 %v3007
    %v3110 = vpop.f32.mrb[0].mxu0
    %v3111 = vadd.f32 0.0, %v3110
    %v3112 = vpop.f32.mrb[0].mxu0
    %3113 = vdwg.mxu0
    %v3114 = vadd.f32 %v2964, %v3076
    %v3115 = vadd.f32 %v2965, %v3081
    %v3116 = vadd.f32 %v2966, %v3086
    %v3117 = vadd.f32 %v2967, %v3091
    %v3118 = vadd.f32 %v2968, %v3096
    %v3119 = vadd.f32 %v2969, %v3101
    %v3120 = vadd.f32 %v2970, %v3106
    %v3121 = vadd.f32 %v2971, %v3111
    %v3122 = vld [vmem:[#allocation2 + $0xd] sm:$0xff]
    %v3123 = vld [vmem:[#allocation2 + $0x15] sm:$0xff]
    %v3124 = vld [vmem:[#allocation2 + $0x1d] sm:$0xff]
    %v3125 = vld [vmem:[#allocation2 + $0x25] sm:$0xff]
    %v3126 = vld [vmem:[%s1634 + $0xd] sm:$0xff]
    %v3127 = vld [vmem:[%s1634 + $0x15] sm:$0xff]
    %v3128 = vld [vmem:[%s1634 + $0x1d] sm:$0xff]
    %v3129 = vld [vmem:[%s1634 + $0x25] sm:$0xff]
    %s3130 = scalar_lea.vmem %s3, 320
    %v3131 = vld [vmem:[%s3130] sm:$0xff]
    %v3132 = vld [vmem:[%s3130 + $0x8] sm:$0xff]
    %v3133 = vld [vmem:[%s3130 + $0x10] sm:$0xff]
    %v3134 = vld [vmem:[%s3130 + $0x18] sm:$0xff]
    %v3136 = vsel %vm1562, %v3122, 0
    %v3139 = vsel %vm1562, %v3123, 0
    %v3142 = vsel %vm1562, %v3124, 0
    %v3145 = vsel %vm1562, %v3125, 0
    %v3148 = vsel %vm1562, %v3126, 0
    %v3151 = vsel %vm1562, %v3127, 0
    %v3154 = vsel %vm1562, %v3128, 0
    %v3157 = vsel %vm1562, %v3129, 0
    %3159 = vmatprep.subr.mxu0 0.0
    %3160 = vmatpush1.msra.mxu0 %v3131
    %3161 = vmatprep.subr.mxu0 0.0
    %3162 = vmatpush1.msra.mxu0 %v3132
    %3163 = vmatprep.subr.mxu0 0.0
    %3164 = vmatpush1.msra.mxu0 %v3133
    %3165 = vmatprep.subr.mxu0 0.0
    %3166 = vmatpush1.msra.mxu0 %v3134
    %3167 = vmatprep.subr.mxu0 0.0
    %3168 = vmatpush1.msra.mxu0 0.0
    %3169 = vmatprep.subr.mxu0 0.0
    %3170 = vmatpush1.msra.mxu0 0.0
    %3171 = vmatprep.subr.mxu0 0.0
    %3172 = vmatpush1.msra.mxu0 0.0
    %3173 = vmatprep.subr.mxu0 0.0
    %3174 = vmatpush1.msra.mxu0 0.0
    %3175 = vmatprep.subr.mxu0 0.0
    %3176 = vmatpush1.msra.mxu0 0.0
    %3177 = vmatprep.subr.mxu0 0.0
    %3178 = vmatpush1.msra.mxu0 0.0
    %3179 = vmatprep.subr.mxu0 0.0
    %3180 = vmatpush1.msra.mxu0 0.0
    %3181 = vmatprep.subr.mxu0 0.0
    %3182 = vmatpush1.msra.mxu0 0.0
    %3183 = vmatprep.subr.mxu0 0.0
    %3184 = vmatpush1.msra.mxu0 0.0
    %3185 = vmatprep.subr.mxu0 0.0
    %3186 = vmatpush1.msra.mxu0 0.0
    %3187 = vmatprep.subr.mxu0 0.0
    %3188 = vmatpush1.msra.mxu0 0.0
    %3189 = vmatprep.subr.mxu0 0.0
    %3190 = vmatpush1.msra.mxu0 0.0
    %3191 = vmatprep.subr.mxu0 0.0
    %3192 = vmatpush1.msra.mxu0 0.0
    %3193 = vmatprep.subr.mxu0 0.0
    %3194 = vmatpush1.msra.mxu0 0.0
    %3195 = vmatprep.subr.mxu0 0.0
    %3196 = vmatpush1.msra.mxu0 0.0
    %3197 = vmatprep.subr.mxu0 0.0
    %3198 = vmatpush1.msra.mxu0 0.0
    %3199 = vmatprep.subr.mxu0 0.0
    %3200 = vmatpush1.msra.mxu0 0.0
    %3201 = vmatprep.subr.mxu0 0.0
    %3202 = vmatpush1.msra.mxu0 0.0
    %3203 = vmatprep.subr.mxu0 0.0
    %3204 = vmatpush1.msra.mxu0 0.0
    %3205 = vmatprep.subr.mxu0 0.0
    %3206 = vmatpush1.msra.mxu0 0.0
    %3207 = vmatprep.subr.mxu0 0.0
    %3208 = vmatpush1.msra.mxu0 0.0
    %3209 = vmatprep.subr.mxu0 0.0
    %3210 = vmatpush1.msra.mxu0 0.0
    %3211 = vmatprep.subr.mxu0 0.0
    %3212 = vmatpush1.msra.mxu0 0.0
    %3213 = vmatprep.subr.mxu0 0.0
    %3214 = vmatpush1.msra.mxu0 0.0
    %3215 = vmatprep.subr.mxu0 0.0
    %3216 = vmatpush1.msra.mxu0 0.0
    %3217 = vmatprep.subr.mxu0 0.0
    %3218 = vmatpush1.msra.mxu0 0.0
    %3219 = vmatprep.subr.mxu0 0.0
    %3220 = vmatpush1.msra.mxu0 0.0
    %3221 = vmatprep.subr.mxu0 0.0
    %3222 = vmatpush1.msra.mxu0 0.0
    %3223 = vmatprep.mubr.f32.mxu0 0.0
    %3224 = vmatmul.mubr.f32.gmra.mrb[0].mxu0 %v3136
    %v3225 = vpop.f32.mrb[0].mxu0
    %v3226 = vadd.f32 0.0, %v3225
    %v3227 = vpop.f32.mrb[0].mxu0
    %3228 = vmatprep.mubr.f32.mxu0 0.0
    %3229 = vmatmul.mubr.f32.gmra.mrb[0].mxu0 %v3139
    %v3230 = vpop.f32.mrb[0].mxu0
    %v3231 = vadd.f32 0.0, %v3230
    %v3232 = vpop.f32.mrb[0].mxu0
    %3233 = vmatprep.mubr.f32.mxu0 0.0
    %3234 = vmatmul.mubr.f32.gmra.mrb[0].mxu0 %v3142
    %v3235 = vpop.f32.mrb[0].mxu0
    %v3236 = vadd.f32 0.0, %v3235
    %v3237 = vpop.f32.mrb[0].mxu0
    %3238 = vmatprep.mubr.f32.mxu0 0.0
    %3239 = vmatmul.mubr.f32.gmra.mrb[0].mxu0 %v3145
    %v3240 = vpop.f32.mrb[0].mxu0
    %v3241 = vadd.f32 0.0, %v3240
    %v3242 = vpop.f32.mrb[0].mxu0
    %3243 = vmatprep.mubr.f32.mxu0 0.0
    %3244 = vmatmul.mubr.f32.gmra.mrb[0].mxu0 %v3148
    %v3245 = vpop.f32.mrb[0].mxu0
    %v3246 = vadd.f32 0.0, %v3245
    %v3247 = vpop.f32.mrb[0].mxu0
    %3248 = vmatprep.mubr.f32.mxu0 0.0
    %3249 = vmatmul.mubr.f32.gmra.mrb[0].mxu0 %v3151
    %v3250 = vpop.f32.mrb[0].mxu0
    %v3251 = vadd.f32 0.0, %v3250
    %v3252 = vpop.f32.mrb[0].mxu0
    %3253 = vmatprep.mubr.f32.mxu0 0.0
    %3254 = vmatmul.mubr.f32.gmra.mrb[0].mxu0 %v3154
    %v3255 = vpop.f32.mrb[0].mxu0
    %v3256 = vadd.f32 0.0, %v3255
    %v3257 = vpop.f32.mrb[0].mxu0
    %3258 = vmatprep.mubr.f32.mxu0 0.0
    %3259 = vmatmul.mubr.f32.gmra.mrb[0].mxu0 %v3157
    %v3260 = vpop.f32.mrb[0].mxu0
    %v3261 = vadd.f32 0.0, %v3260
    %v3262 = vpop.f32.mrb[0].mxu0
    %3263 = vdwg.mxu0
    %v3264 = vadd.f32 %v3114, %v3226
    %v3265 = vadd.f32 %v3115, %v3231
    %v3266 = vadd.f32 %v3116, %v3236
    %v3267 = vadd.f32 %v3117, %v3241
    %v3268 = vadd.f32 %v3118, %v3246
    %v3269 = vadd.f32 %v3119, %v3251
    %v3270 = vadd.f32 %v3120, %v3256
    %v3271 = vadd.f32 %v3121, %v3261
    %v3272 = vld [vmem:[%s4] sm:$0x1]
    %v3274 = vlaneseq
    %v3275 = vshrl.u32 %v3274, 7
    %v3276 = vsub.s32 0, %v3275
    %v3277 = vrot.slane %v3272, %v3276
    %v3279 = vadd.f32 %v3264, %v3277
    %v3280 = vadd.f32 %v3265, %v3277
    %v3281 = vadd.f32 %v3266, %v3277
    %v3282 = vadd.f32 %v3267, %v3277
    %v3283 = vadd.f32 %v3268, %v3277
    %v3284 = vadd.f32 %v3269, %v3277
    %v3285 = vadd.f32 %v3270, %v3277
    %v3286 = vadd.f32 %v3271, %v3277
    %v3287 = vmax.f32 %v3279, 0.0
    %v3288 = vmax.f32 %v3280, 0.0
    %v3289 = vmax.f32 %v3281, 0.0
    %v3290 = vmax.f32 %v3282, 0.0
    %v3291 = vmax.f32 %v3283, 0.0
    %v3292 = vmax.f32 %v3284, 0.0
    %v3293 = vmax.f32 %v3285, 0.0
    %v3294 = vmax.f32 %v3286, 0.0
    %3295 = vst.msk [vmem:[#allocation3] sm:$0xff] %vm1562, %v3287
    %3296 = vst.msk [vmem:[#allocation3 + $0x8] sm:$0xff] %vm1562, %v3288
    %3297 = vst.msk [vmem:[#allocation3 + $0x10] sm:$0xff] %vm1562, %v3289
    %3298 = vst.msk [vmem:[#allocation3 + $0x18] sm:$0xff] %vm1562, %v3290
    %3299 = vst.msk [vmem:[#allocation3 + $0x20] sm:$0xff] %vm1562, %v3291
    %3300 = vst.msk [vmem:[#allocation3 + $0x28] sm:$0xff] %vm1562, %v3292
    %3301 = vst.msk [vmem:[#allocation3 + $0x30] sm:$0xff] %vm1562, %v3293
    %3302 = vst.msk [vmem:[#allocation3 + $0x38] sm:$0xff] %vm1562, %v3294
    %v3303 = vld [vmem:[#allocation3] ss:$2 sm:$0xff]
    %v3304 = vld [vmem:[%s1580] ss:$2 sm:$0xff]
    %v3305 = vld [vmem:[%s1582] ss:$2 sm:$0xff]
    %v3306 = vld [vmem:[%s1584] ss:$2 sm:$0xff]
    %v3307 = vld [vmem:[%s1594] ss:$2 sm:$0xff]
    %v3308 = vld [vmem:[%s1596] ss:$2 sm:$0xff]
    %v3309 = vld [vmem:[%s1598] ss:$2 sm:$0xff]
    %v3310 = vld [vmem:[%s1600] ss:$2 sm:$0xff]
    %v3311 = vmax.f32 %v3303, %v3307
    %v3312 = vmax.f32 %v3304, %v3308
    %v3313 = vmax.f32 %v3305, %v3309
    %v3314 = vmax.f32 %v3306, %v3310
    %3315 = vst.msk [vmem:[#allocation2] sm:$0xff] %vm1562, 0.0
    %3316 = vst.msk [vmem:[#allocation2 + $0x8] sm:$0xff] %vm1562, 0.0
    %3317 = vst.msk [vmem:[#allocation2 + $0x10] sm:$0xff] %vm1562, 0.0
    %3318 = vst.msk [vmem:[#allocation2 + $0x18] sm:$0xff] %vm1562, 0.0
    %3319 = vst.msk [vmem:[#allocation2 + $0x20] sm:$0xff] %vm1562, 0.0
    %3320 = vst.msk [vmem:[#allocation2 + $0x28] sm:$0xff] %vm1562, 0.0
    %3321 = vst.msk [vmem:[#allocation2 + $0x30] sm:$0xff] %vm1562, 0.0
    %3322 = vst.msk [vmem:[#allocation2 + $0x38] sm:$0xff] %vm1562, 0.0
    %3323 = vst.msk [vmem:[#allocation2 + $0x40] sm:$0xff] %vm1562, 0.0
    %3324 = vst.msk [vmem:[#allocation2 + $0x48] sm:$0xff] %vm1562, 0.0
    %3325 = vst.msk [vmem:[#allocation2 + $0x50] sm:$0xff] %vm1562, 0.0
    %3326 = vst.msk [vmem:[#allocation2 + $0x58] sm:$0xff] %vm1562, 0.0
    %3327 = vst.msk [vmem:[#allocation2 + $0x8] sm:$0xff] %vm1562, %v3311
    %3328 = vst.msk [vmem:[#allocation2 + $0x10] sm:$0xff] %vm1562, %v3312
    %3329 = vst.msk [vmem:[%s1634 + $0x8] sm:$0xff] %vm1562, %v3313
    %3330 = vst.msk [vmem:[%s1634 + $0x10] sm:$0xff] %vm1562, %v3314
    %v3331 = vld [vmem:[#allocation2 + $0x3] sm:$0xff]
    %v3332 = vld [vmem:[#allocation2 + $0xb] sm:$0xff]
    %v3333 = vld [vmem:[%s1634 + $0x3] sm:$0xff]
    %v3334 = vld [vmem:[%s1634 + $0xb] sm:$0xff]
    %v3335 = vld [vmem:[%s5] sm:$0xff]
    %v3336 = vld [vmem:[%s5 + $0x8] sm:$0xff]
    %v3337 = vld [vmem:[%s5 + $0x10] sm:$0xff]
    %v3338 = vld [vmem:[%s5 + $0x18] sm:$0xff]
    %v3339 = vld [vmem:[#allocation2 + $0x4] sm:$0xff]
    %v3340 = vld [vmem:[#allocation2 + $0xc] sm:$0xff]
    %v3341 = vld [vmem:[%s1634 + $0x4] sm:$0xff]
    %v3342 = vld [vmem:[%s1634 + $0xc] sm:$0xff]
    %s3343 = scalar_lea.vmem %s5, 32
    %v3344 = vld [vmem:[%s3343] sm:$0xff]
    %v3345 = vld [vmem:[%s3343 + $0x8] sm:$0xff]
    %v3346 = vld [vmem:[%s3343 + $0x10] sm:$0xff]
    %v3347 = vld [vmem:[%s3343 + $0x18] sm:$0xff]
    %v3349 = vsel %vm1562, %v3339, 0
    %v3352 = vsel %vm1562, %v3340, 0
    %v3355 = vsel %vm1562, %v3341, 0
    %v3358 = vsel %vm1562, %v3342, 0
    %3360 = vmatprep.subr.mxu0 0.0
    %3361 = vmatpush1.msra.mxu0 %v3344
    %3362 = vmatprep.subr.mxu0 0.0
    %3363 = vmatpush1.msra.mxu0 %v3345
    %3364 = vmatprep.subr.mxu0 0.0
    %3365 = vmatpush1.msra.mxu0 %v3346
    %3366 = vmatprep.subr.mxu0 0.0
    %3367 = vmatpush1.msra.mxu0 %v3347
    %3368 = vmatprep.subr.mxu0 0.0
    %3369 = vmatpush1.msra.mxu0 0.0
    %3370 = vmatprep.subr.mxu0 0.0
    %3371 = vmatpush1.msra.mxu0 0.0
    %3372 = vmatprep.subr.mxu0 0.0
    %3373 = vmatpush1.msra.mxu0 0.0
    %3374 = vmatprep.subr.mxu0 0.0
    %3375 = vmatpush1.msra.mxu0 0.0
    %3376 = vmatprep.subr.mxu0 0.0
    %3377 = vmatpush1.msra.mxu0 0.0
    %3378 = vmatprep.subr.mxu0 0.0
    %3379 = vmatpush1.msra.mxu0 0.0
    %3380 = vmatprep.subr.mxu0 0.0
    %3381 = vmatpush1.msra.mxu0 0.0
    %3382 = vmatprep.subr.mxu0 0.0
    %3383 = vmatpush1.msra.mxu0 0.0
    %3384 = vmatprep.subr.mxu0 0.0
    %3385 = vmatpush1.msra.mxu0 0.0
    %3386 = vmatprep.subr.mxu0 0.0
    %3387 = vmatpush1.msra.mxu0 0.0
    %3388 = vmatprep.subr.mxu0 0.0
    %3389 = vmatpush1.msra.mxu0 0.0
    %3390 = vmatprep.subr.mxu0 0.0
    %3391 = vmatpush1.msra.mxu0 0.0
    %3392 = vmatprep.subr.mxu0 0.0
    %3393 = vmatpush1.msra.mxu0 0.0
    %3394 = vmatprep.subr.mxu0 0.0
    %3395 = vmatpush1.msra.mxu0 0.0
    %3396 = vmatprep.subr.mxu0 0.0
    %3397 = vmatpush1.msra.mxu0 0.0
    %3398 = vmatprep.subr.mxu0 0.0
    %3399 = vmatpush1.msra.mxu0 0.0
    %3400 = vmatprep.subr.mxu0 0.0
    %3401 = vmatpush1.msra.mxu0 0.0
    %3402 = vmatprep.subr.mxu0 0.0
    %3403 = vmatpush1.msra.mxu0 0.0
    %3404 = vmatprep.subr.mxu0 0.0
    %3405 = vmatpush1.msra.mxu0 0.0
    %3406 = vmatprep.subr.mxu0 0.0
    %3407 = vmatpush1.msra.mxu0 0.0
    %3408 = vmatprep.subr.mxu0 0.0
    %3409 = vmatpush1.msra.mxu0 0.0
    %3410 = vmatprep.subr.mxu0 0.0
    %3411 = vmatpush1.msra.mxu0 0.0
    %3412 = vmatprep.subr.mxu0 0.0
    %3413 = vmatpush1.msra.mxu0 0.0
    %3414 = vmatprep.subr.mxu0 0.0
    %3415 = vmatpush1.msra.mxu0 0.0
    %3416 = vmatprep.subr.mxu0 0.0
    %3417 = vmatpush1.msra.mxu0 0.0
    %3418 = vmatprep.subr.mxu0 0.0
    %3419 = vmatpush1.msra.mxu0 0.0
    %3420 = vmatprep.subr.mxu0 0.0
    %3421 = vmatpush1.msra.mxu0 0.0
    %3422 = vmatprep.subr.mxu0 0.0
    %3423 = vmatpush1.msra.mxu0 0.0
    %3424 = vmatprep.mubr.f32.mxu0 0.0
    %3425 = vmatmul.mubr.f32.gmra.mrb[0].mxu0 %v3349
    %v3426 = vpop.f32.mrb[0].mxu0
    %v3427 = vadd.f32 0.0, %v3426
    %v3428 = vpop.f32.mrb[0].mxu0
    %3429 = vmatprep.mubr.f32.mxu0 0.0
    %3430 = vmatmul.mubr.f32.gmra.mrb[0].mxu0 %v3352
    %v3431 = vpop.f32.mrb[0].mxu0
    %v3432 = vadd.f32 0.0, %v3431
    %v3433 = vpop.f32.mrb[0].mxu0
    %3434 = vmatprep.mubr.f32.mxu0 0.0
    %3435 = vmatmul.mubr.f32.gmra.mrb[0].mxu0 %v3355
    %v3436 = vpop.f32.mrb[0].mxu0
    %v3437 = vadd.f32 0.0, %v3436
    %v3438 = vpop.f32.mrb[0].mxu0
    %3439 = vmatprep.mubr.f32.mxu0 0.0
    %3440 = vmatmul.mubr.f32.gmra.mrb[0].mxu0 %v3358
    %v3441 = vpop.f32.mrb[0].mxu0
    %v3442 = vadd.f32 0.0, %v3441
    %v3443 = vpop.f32.mrb[0].mxu0
    %3444 = vdwg.mxu0
    %v3446 = vsel %vm1562, %v3331, 0
    %v3449 = vsel %vm1562, %v3332, 0
    %v3452 = vsel %vm1562, %v3333, 0
    %v3455 = vsel %vm1562, %v3334, 0
    %3457 = vmatprep.subr.mxu0 0.0
    %3458 = vmatpush1.msra.mxu0 %v3335
    %3459 = vmatprep.subr.mxu0 0.0
    %3460 = vmatpush1.msra.mxu0 %v3336
    %3461 = vmatprep.subr.mxu0 0.0
    %3462 = vmatpush1.msra.mxu0 %v3337
    %3463 = vmatprep.subr.mxu0 0.0
    %3464 = vmatpush1.msra.mxu0 %v3338
    %3465 = vmatprep.subr.mxu0 0.0
    %3466 = vmatpush1.msra.mxu0 0.0
    %3467 = vmatprep.subr.mxu0 0.0
    %3468 = vmatpush1.msra.mxu0 0.0
    %3469 = vmatprep.subr.mxu0 0.0
    %3470 = vmatpush1.msra.mxu0 0.0
    %3471 = vmatprep.subr.mxu0 0.0
    %3472 = vmatpush1.msra.mxu0 0.0
    %3473 = vmatprep.subr.mxu0 0.0
    %3474 = vmatpush1.msra.mxu0 0.0
    %3475 = vmatprep.subr.mxu0 0.0
    %3476 = vmatpush1.msra.mxu0 0.0
    %3477 = vmatprep.subr.mxu0 0.0
    %3478 = vmatpush1.msra.mxu0 0.0
    %3479 = vmatprep.subr.mxu0 0.0
    %3480 = vmatpush1.msra.mxu0 0.0
    %3481 = vmatprep.subr.mxu0 0.0
    %3482 = vmatpush1.msra.mxu0 0.0
    %3483 = vmatprep.subr.mxu0 0.0
    %3484 = vmatpush1.msra.mxu0 0.0
    %3485 = vmatprep.subr.mxu0 0.0
    %3486 = vmatpush1.msra.mxu0 0.0
    %3487 = vmatprep.subr.mxu0 0.0
    %3488 = vmatpush1.msra.mxu0 0.0
    %3489 = vmatprep.subr.mxu0 0.0
    %3490 = vmatpush1.msra.mxu0 0.0
    %3491 = vmatprep.subr.mxu0 0.0
    %3492 = vmatpush1.msra.mxu0 0.0
    %3493 = vmatprep.subr.mxu0 0.0
    %3494 = vmatpush1.msra.mxu0 0.0
    %3495 = vmatprep.subr.mxu0 0.0
    %3496 = vmatpush1.msra.mxu0 0.0
    %3497 = vmatprep.subr.mxu0 0.0
    %3498 = vmatpush1.msra.mxu0 0.0
    %3499 = vmatprep.subr.mxu0 0.0
    %3500 = vmatpush1.msra.mxu0 0.0
    %3501 = vmatprep.subr.mxu0 0.0
    %3502 = vmatpush1.msra.mxu0 0.0
    %3503 = vmatprep.subr.mxu0 0.0
    %3504 = vmatpush1.msra.mxu0 0.0
    %3505 = vmatprep.subr.mxu0 0.0
    %3506 = vmatpush1.msra.mxu0 0.0
    %3507 = vmatprep.subr.mxu0 0.0
    %3508 = vmatpush1.msra.mxu0 0.0
    %3509 = vmatprep.subr.mxu0 0.0
    %3510 = vmatpush1.msra.mxu0 0.0
    %3511 = vmatprep.subr.mxu0 0.0
    %3512 = vmatpush1.msra.mxu0 0.0
    %3513 = vmatprep.subr.mxu0 0.0
    %3514 = vmatpush1.msra.mxu0 0.0
    %3515 = vmatprep.subr.mxu0 0.0
    %3516 = vmatpush1.msra.mxu0 0.0
    %3517 = vmatprep.subr.mxu0 0.0
    %3518 = vmatpush1.msra.mxu0 0.0
    %3519 = vmatprep.subr.mxu0 0.0
    %3520 = vmatpush1.msra.mxu0 0.0
    %3521 = vmatprep.mubr.f32.mxu0 0.0
    %3522 = vmatmul.mubr.f32.gmra.mrb[0].mxu0 %v3446
    %v3523 = vpop.f32.mrb[0].mxu0
    %v3524 = vadd.f32 %v3427, %v3523
    %v3525 = vpop.f32.mrb[0].mxu0
    %3526 = vmatprep.mubr.f32.mxu0 0.0
    %3527 = vmatmul.mubr.f32.gmra.mrb[0].mxu0 %v3449
    %v3528 = vpop.f32.mrb[0].mxu0
    %v3529 = vadd.f32 %v3432, %v3528
    %v3530 = vpop.f32.mrb[0].mxu0
    %3531 = vmatprep.mubr.f32.mxu0 0.0
    %3532 = vmatmul.mubr.f32.gmra.mrb[0].mxu0 %v3452
    %v3533 = vpop.f32.mrb[0].mxu0
    %v3534 = vadd.f32 %v3437, %v3533
    %v3535 = vpop.f32.mrb[0].mxu0
    %3536 = vmatprep.mubr.f32.mxu0 0.0
    %3537 = vmatmul.mubr.f32.gmra.mrb[0].mxu0 %v3455
    %v3538 = vpop.f32.mrb[0].mxu0
    %v3539 = vadd.f32 %v3442, %v3538
    %v3540 = vpop.f32.mrb[0].mxu0
    %3541 = vdwg.mxu0
    %v3542 = vld [vmem:[#allocation2 + $0x5] sm:$0xff]
    %v3543 = vld [vmem:[#allocation2 + $0xd] sm:$0xff]
    %v3544 = vld [vmem:[%s1634 + $0x5] sm:$0xff]
    %v3545 = vld [vmem:[%s1634 + $0xd] sm:$0xff]
    %s3546 = scalar_lea.vmem %s5, 64
    %v3547 = vld [vmem:[%s3546] sm:$0xff]
    %v3548 = vld [vmem:[%s3546 + $0x8] sm:$0xff]
    %v3549 = vld [vmem:[%s3546 + $0x10] sm:$0xff]
    %v3550 = vld [vmem:[%s3546 + $0x18] sm:$0xff]
    %v3552 = vsel %vm1562, %v3542, 0
    %v3555 = vsel %vm1562, %v3543, 0
    %v3558 = vsel %vm1562, %v3544, 0
    %v3561 = vsel %vm1562, %v3545, 0
    %3563 = vmatprep.subr.mxu0 0.0
    %3564 = vmatpush1.msra.mxu0 %v3547
    %3565 = vmatprep.subr.mxu0 0.0
    %3566 = vmatpush1.msra.mxu0 %v3548
    %3567 = vmatprep.subr.mxu0 0.0
    %3568 = vmatpush1.msra.mxu0 %v3549
    %3569 = vmatprep.subr.mxu0 0.0
    %3570 = vmatpush1.msra.mxu0 %v3550
    %3571 = vmatprep.subr.mxu0 0.0
    %3572 = vmatpush1.msra.mxu0 0.0
    %3573 = vmatprep.subr.mxu0 0.0
    %3574 = vmatpush1.msra.mxu0 0.0
    %3575 = vmatprep.subr.mxu0 0.0
    %3576 = vmatpush1.msra.mxu0 0.0
    %3577 = vmatprep.subr.mxu0 0.0
    %3578 = vmatpush1.msra.mxu0 0.0
    %3579 = vmatprep.subr.mxu0 0.0
    %3580 = vmatpush1.msra.mxu0 0.0
    %3581 = vmatprep.subr.mxu0 0.0
    %3582 = vmatpush1.msra.mxu0 0.0
    %3583 = vmatprep.subr.mxu0 0.0
    %3584 = vmatpush1.msra.mxu0 0.0
    %3585 = vmatprep.subr.mxu0 0.0
    %3586 = vmatpush1.msra.mxu0 0.0
    %3587 = vmatprep.subr.mxu0 0.0
    %3588 = vmatpush1.msra.mxu0 0.0
    %3589 = vmatprep.subr.mxu0 0.0
    %3590 = vmatpush1.msra.mxu0 0.0
    %3591 = vmatprep.subr.mxu0 0.0
    %3592 = vmatpush1.msra.mxu0 0.0
    %3593 = vmatprep.subr.mxu0 0.0
    %3594 = vmatpush1.msra.mxu0 0.0
    %3595 = vmatprep.subr.mxu0 0.0
    %3596 = vmatpush1.msra.mxu0 0.0
    %3597 = vmatprep.subr.mxu0 0.0
    %3598 = vmatpush1.msra.mxu0 0.0
    %3599 = vmatprep.subr.mxu0 0.0
    %3600 = vmatpush1.msra.mxu0 0.0
    %3601 = vmatprep.subr.mxu0 0.0
    %3602 = vmatpush1.msra.mxu0 0.0
    %3603 = vmatprep.subr.mxu0 0.0
    %3604 = vmatpush1.msra.mxu0 0.0
    %3605 = vmatprep.subr.mxu0 0.0
    %3606 = vmatpush1.msra.mxu0 0.0
    %3607 = vmatprep.subr.mxu0 0.0
    %3608 = vmatpush1.msra.mxu0 0.0
    %3609 = vmatprep.subr.mxu0 0.0
    %3610 = vmatpush1.msra.mxu0 0.0
    %3611 = vmatprep.subr.mxu0 0.0
    %3612 = vmatpush1.msra.mxu0 0.0
    %3613 = vmatprep.subr.mxu0 0.0
    %3614 = vmatpush1.msra.mxu0 0.0
    %3615 = vmatprep.subr.mxu0 0.0
    %3616 = vmatpush1.msra.mxu0 0.0
    %3617 = vmatprep.subr.mxu0 0.0
    %3618 = vmatpush1.msra.mxu0 0.0
    %3619 = vmatprep.subr.mxu0 0.0
    %3620 = vmatpush1.msra.mxu0 0.0
    %3621 = vmatprep.subr.mxu0 0.0
    %3622 = vmatpush1.msra.mxu0 0.0
    %3623 = vmatprep.subr.mxu0 0.0
    %3624 = vmatpush1.msra.mxu0 0.0
    %3625 = vmatprep.subr.mxu0 0.0
    %3626 = vmatpush1.msra.mxu0 0.0
    %3627 = vmatprep.mubr.f32.mxu0 0.0
    %3628 = vmatmul.mubr.f32.gmra.mrb[0].mxu0 %v3552
    %v3629 = vpop.f32.mrb[0].mxu0
    %v3630 = vadd.f32 0.0, %v3629
    %v3631 = vpop.f32.mrb[0].mxu0
    %3632 = vmatprep.mubr.f32.mxu0 0.0
    %3633 = vmatmul.mubr.f32.gmra.mrb[0].mxu0 %v3555
    %v3634 = vpop.f32.mrb[0].mxu0
    %v3635 = vadd.f32 0.0, %v3634
    %v3636 = vpop.f32.mrb[0].mxu0
    %3637 = vmatprep.mubr.f32.mxu0 0.0
    %3638 = vmatmul.mubr.f32.gmra.mrb[0].mxu0 %v3558
    %v3639 = vpop.f32.mrb[0].mxu0
    %v3640 = vadd.f32 0.0, %v3639
    %v3641 = vpop.f32.mrb[0].mxu0
    %3642 = vmatprep.mubr.f32.mxu0 0.0
    %3643 = vmatmul.mubr.f32.gmra.mrb[0].mxu0 %v3561
    %v3644 = vpop.f32.mrb[0].mxu0
    %v3645 = vadd.f32 0.0, %v3644
    %v3646 = vpop.f32.mrb[0].mxu0
    %3647 = vdwg.mxu0
    %v3648 = vadd.f32 %v3524, %v3630
    %v3649 = vadd.f32 %v3529, %v3635
    %v3650 = vadd.f32 %v3534, %v3640
    %v3651 = vadd.f32 %v3539, %v3645
    %v3652 = vld [vmem:[#allocation2 + $0x6] sm:$0xff]
    %v3653 = vld [vmem:[#allocation2 + $0xe] sm:$0xff]
    %v3654 = vld [vmem:[%s1634 + $0x6] sm:$0xff]
    %v3655 = vld [vmem:[%s1634 + $0xe] sm:$0xff]
    %s3656 = scalar_lea.vmem %s5, 96
    %v3657 = vld [vmem:[%s3656] sm:$0xff]
    %v3658 = vld [vmem:[%s3656 + $0x8] sm:$0xff]
    %v3659 = vld [vmem:[%s3656 + $0x10] sm:$0xff]
    %v3660 = vld [vmem:[%s3656 + $0x18] sm:$0xff]
    %v3662 = vsel %vm1562, %v3652, 0
    %v3665 = vsel %vm1562, %v3653, 0
    %v3668 = vsel %vm1562, %v3654, 0
    %v3671 = vsel %vm1562, %v3655, 0
    %3673 = vmatprep.subr.mxu0 0.0
    %3674 = vmatpush1.msra.mxu0 %v3657
    %3675 = vmatprep.subr.mxu0 0.0
    %3676 = vmatpush1.msra.mxu0 %v3658
    %3677 = vmatprep.subr.mxu0 0.0
    %3678 = vmatpush1.msra.mxu0 %v3659
    %3679 = vmatprep.subr.mxu0 0.0
    %3680 = vmatpush1.msra.mxu0 %v3660
    %3681 = vmatprep.subr.mxu0 0.0
    %3682 = vmatpush1.msra.mxu0 0.0
    %3683 = vmatprep.subr.mxu0 0.0
    %3684 = vmatpush1.msra.mxu0 0.0
    %3685 = vmatprep.subr.mxu0 0.0
    %3686 = vmatpush1.msra.mxu0 0.0
    %3687 = vmatprep.subr.mxu0 0.0
    %3688 = vmatpush1.msra.mxu0 0.0
    %3689 = vmatprep.subr.mxu0 0.0
    %3690 = vmatpush1.msra.mxu0 0.0
    %3691 = vmatprep.subr.mxu0 0.0
    %3692 = vmatpush1.msra.mxu0 0.0
    %3693 = vmatprep.subr.mxu0 0.0
    %3694 = vmatpush1.msra.mxu0 0.0
    %3695 = vmatprep.subr.mxu0 0.0
    %3696 = vmatpush1.msra.mxu0 0.0
    %3697 = vmatprep.subr.mxu0 0.0
    %3698 = vmatpush1.msra.mxu0 0.0
    %3699 = vmatprep.subr.mxu0 0.0
    %3700 = vmatpush1.msra.mxu0 0.0
    %3701 = vmatprep.subr.mxu0 0.0
    %3702 = vmatpush1.msra.mxu0 0.0
    %3703 = vmatprep.subr.mxu0 0.0
    %3704 = vmatpush1.msra.mxu0 0.0
    %3705 = vmatprep.subr.mxu0 0.0
    %3706 = vmatpush1.msra.mxu0 0.0
    %3707 = vmatprep.subr.mxu0 0.0
    %3708 = vmatpush1.msra.mxu0 0.0
    %3709 = vmatprep.subr.mxu0 0.0
    %3710 = vmatpush1.msra.mxu0 0.0
    %3711 = vmatprep.subr.mxu0 0.0
    %3712 = vmatpush1.msra.mxu0 0.0
    %3713 = vmatprep.subr.mxu0 0.0
    %3714 = vmatpush1.msra.mxu0 0.0
    %3715 = vmatprep.subr.mxu0 0.0
    %3716 = vmatpush1.msra.mxu0 0.0
    %3717 = vmatprep.subr.mxu0 0.0
    %3718 = vmatpush1.msra.mxu0 0.0
    %3719 = vmatprep.subr.mxu0 0.0
    %3720 = vmatpush1.msra.mxu0 0.0
    %3721 = vmatprep.subr.mxu0 0.0
    %3722 = vmatpush1.msra.mxu0 0.0
    %3723 = vmatprep.subr.mxu0 0.0
    %3724 = vmatpush1.msra.mxu0 0.0
    %3725 = vmatprep.subr.mxu0 0.0
    %3726 = vmatpush1.msra.mxu0 0.0
    %3727 = vmatprep.subr.mxu0 0.0
    %3728 = vmatpush1.msra.mxu0 0.0
    %3729 = vmatprep.subr.mxu0 0.0
    %3730 = vmatpush1.msra.mxu0 0.0
    %3731 = vmatprep.subr.mxu0 0.0
    %3732 = vmatpush1.msra.mxu0 0.0
    %3733 = vmatprep.subr.mxu0 0.0
    %3734 = vmatpush1.msra.mxu0 0.0
    %3735 = vmatprep.subr.mxu0 0.0
    %3736 = vmatpush1.msra.mxu0 0.0
    %3737 = vmatprep.mubr.f32.mxu0 0.0
    %3738 = vmatmul.mubr.f32.gmra.mrb[0].mxu0 %v3662
    %v3739 = vpop.f32.mrb[0].mxu0
    %v3740 = vadd.f32 0.0, %v3739
    %v3741 = vpop.f32.mrb[0].mxu0
    %3742 = vmatprep.mubr.f32.mxu0 0.0
    %3743 = vmatmul.mubr.f32.gmra.mrb[0].mxu0 %v3665
    %v3744 = vpop.f32.mrb[0].mxu0
    %v3745 = vadd.f32 0.0, %v3744
    %v3746 = vpop.f32.mrb[0].mxu0
    %3747 = vmatprep.mubr.f32.mxu0 0.0
    %3748 = vmatmul.mubr.f32.gmra.mrb[0].mxu0 %v3668
    %v3749 = vpop.f32.mrb[0].mxu0
    %v3750 = vadd.f32 0.0, %v3749
    %v3751 = vpop.f32.mrb[0].mxu0
    %3752 = vmatprep.mubr.f32.mxu0 0.0
    %3753 = vmatmul.mubr.f32.gmra.mrb[0].mxu0 %v3671
    %v3754 = vpop.f32.mrb[0].mxu0
    %v3755 = vadd.f32 0.0, %v3754
    %v3756 = vpop.f32.mrb[0].mxu0
    %3757 = vdwg.mxu0
    %v3758 = vadd.f32 %v3648, %v3740
    %v3759 = vadd.f32 %v3649, %v3745
    %v3760 = vadd.f32 %v3650, %v3750
    %v3761 = vadd.f32 %v3651, %v3755
    %v3762 = vld [vmem:[#allocation2 + $0x7] sm:$0xff]
    %v3763 = vld [vmem:[#allocation2 + $0xf] sm:$0xff]
    %v3764 = vld [vmem:[%s1634 + $0x7] sm:$0xff]
    %v3765 = vld [vmem:[%s1634 + $0xf] sm:$0xff]
    %s3766 = scalar_lea.vmem %s5, 128
    %v3767 = vld [vmem:[%s3766] sm:$0xff]
    %v3768 = vld [vmem:[%s3766 + $0x8] sm:$0xff]
    %v3769 = vld [vmem:[%s3766 + $0x10] sm:$0xff]
    %v3770 = vld [vmem:[%s3766 + $0x18] sm:$0xff]
    %v3772 = vsel %vm1562, %v3762, 0
    %v3775 = vsel %vm1562, %v3763, 0
    %v3778 = vsel %vm1562, %v3764, 0
    %v3781 = vsel %vm1562, %v3765, 0
    %3783 = vmatprep.subr.mxu0 0.0
    %3784 = vmatpush1.msra.mxu0 %v3767
    %3785 = vmatprep.subr.mxu0 0.0
    %3786 = vmatpush1.msra.mxu0 %v3768
    %3787 = vmatprep.subr.mxu0 0.0
    %3788 = vmatpush1.msra.mxu0 %v3769
    %3789 = vmatprep.subr.mxu0 0.0
    %3790 = vmatpush1.msra.mxu0 %v3770
    %3791 = vmatprep.subr.mxu0 0.0
    %3792 = vmatpush1.msra.mxu0 0.0
    %3793 = vmatprep.subr.mxu0 0.0
    %3794 = vmatpush1.msra.mxu0 0.0
    %3795 = vmatprep.subr.mxu0 0.0
    %3796 = vmatpush1.msra.mxu0 0.0
    %3797 = vmatprep.subr.mxu0 0.0
    %3798 = vmatpush1.msra.mxu0 0.0
    %3799 = vmatprep.subr.mxu0 0.0
    %3800 = vmatpush1.msra.mxu0 0.0
    %3801 = vmatprep.subr.mxu0 0.0
    %3802 = vmatpush1.msra.mxu0 0.0
    %3803 = vmatprep.subr.mxu0 0.0
    %3804 = vmatpush1.msra.mxu0 0.0
    %3805 = vmatprep.subr.mxu0 0.0
    %3806 = vmatpush1.msra.mxu0 0.0
    %3807 = vmatprep.subr.mxu0 0.0
    %3808 = vmatpush1.msra.mxu0 0.0
    %3809 = vmatprep.subr.mxu0 0.0
    %3810 = vmatpush1.msra.mxu0 0.0
    %3811 = vmatprep.subr.mxu0 0.0
    %3812 = vmatpush1.msra.mxu0 0.0
    %3813 = vmatprep.subr.mxu0 0.0
    %3814 = vmatpush1.msra.mxu0 0.0
    %3815 = vmatprep.subr.mxu0 0.0
    %3816 = vmatpush1.msra.mxu0 0.0
    %3817 = vmatprep.subr.mxu0 0.0
    %3818 = vmatpush1.msra.mxu0 0.0
    %3819 = vmatprep.subr.mxu0 0.0
    %3820 = vmatpush1.msra.mxu0 0.0
    %3821 = vmatprep.subr.mxu0 0.0
    %3822 = vmatpush1.msra.mxu0 0.0
    %3823 = vmatprep.subr.mxu0 0.0
    %3824 = vmatpush1.msra.mxu0 0.0
    %3825 = vmatprep.subr.mxu0 0.0
    %3826 = vmatpush1.msra.mxu0 0.0
    %3827 = vmatprep.subr.mxu0 0.0
    %3828 = vmatpush1.msra.mxu0 0.0
    %3829 = vmatprep.subr.mxu0 0.0
    %3830 = vmatpush1.msra.mxu0 0.0
    %3831 = vmatprep.subr.mxu0 0.0
    %3832 = vmatpush1.msra.mxu0 0.0
    %3833 = vmatprep.subr.mxu0 0.0
    %3834 = vmatpush1.msra.mxu0 0.0
    %3835 = vmatprep.subr.mxu0 0.0
    %3836 = vmatpush1.msra.mxu0 0.0
    %3837 = vmatprep.subr.mxu0 0.0
    %3838 = vmatpush1.msra.mxu0 0.0
    %3839 = vmatprep.subr.mxu0 0.0
    %3840 = vmatpush1.msra.mxu0 0.0
    %3841 = vmatprep.subr.mxu0 0.0
    %3842 = vmatpush1.msra.mxu0 0.0
    %3843 = vmatprep.subr.mxu0 0.0
    %3844 = vmatpush1.msra.mxu0 0.0
    %3845 = vmatprep.subr.mxu0 0.0
    %3846 = vmatpush1.msra.mxu0 0.0
    %3847 = vmatprep.mubr.f32.mxu0 0.0
    %3848 = vmatmul.mubr.f32.gmra.mrb[0].mxu0 %v3772
    %v3849 = vpop.f32.mrb[0].mxu0
    %v3850 = vadd.f32 0.0, %v3849
    %v3851 = vpop.f32.mrb[0].mxu0
    %3852 = vmatprep.mubr.f32.mxu0 0.0
    %3853 = vmatmul.mubr.f32.gmra.mrb[0].mxu0 %v3775
    %v3854 = vpop.f32.mrb[0].mxu0
    %v3855 = vadd.f32 0.0, %v3854
    %v3856 = vpop.f32.mrb[0].mxu0
    %3857 = vmatprep.mubr.f32.mxu0 0.0
    %3858 = vmatmul.mubr.f32.gmra.mrb[0].mxu0 %v3778
    %v3859 = vpop.f32.mrb[0].mxu0
    %v3860 = vadd.f32 0.0, %v3859
    %v3861 = vpop.f32.mrb[0].mxu0
    %3862 = vmatprep.mubr.f32.mxu0 0.0
    %3863 = vmatmul.mubr.f32.gmra.mrb[0].mxu0 %v3781
    %v3864 = vpop.f32.mrb[0].mxu0
    %v3865 = vadd.f32 0.0, %v3864
    %v3866 = vpop.f32.mrb[0].mxu0
    %3867 = vdwg.mxu0
    %v3868 = vadd.f32 %v3758, %v3850
    %v3869 = vadd.f32 %v3759, %v3855
    %v3870 = vadd.f32 %v3760, %v3860
    %v3871 = vadd.f32 %v3761, %v3865
    %v3872 = vld [vmem:[#allocation2 + $0x8] sm:$0xff]
    %v3873 = vld [vmem:[#allocation2 + $0x10] sm:$0xff]
    %v3874 = vld [vmem:[%s1634 + $0x8] sm:$0xff]
    %v3875 = vld [vmem:[%s1634 + $0x10] sm:$0xff]
    %s3876 = scalar_lea.vmem %s5, 160
    %v3877 = vld [vmem:[%s3876] sm:$0xff]
    %v3878 = vld [vmem:[%s3876 + $0x8] sm:$0xff]
    %v3879 = vld [vmem:[%s3876 + $0x10] sm:$0xff]
    %v3880 = vld [vmem:[%s3876 + $0x18] sm:$0xff]
    %v3882 = vsel %vm1562, %v3872, 0
    %v3885 = vsel %vm1562, %v3873, 0
    %v3888 = vsel %vm1562, %v3874, 0
    %v3891 = vsel %vm1562, %v3875, 0
    %3893 = vmatprep.subr.mxu0 0.0
    %3894 = vmatpush1.msra.mxu0 %v3877
    %3895 = vmatprep.subr.mxu0 0.0
    %3896 = vmatpush1.msra.mxu0 %v3878
    %3897 = vmatprep.subr.mxu0 0.0
    %3898 = vmatpush1.msra.mxu0 %v3879
    %3899 = vmatprep.subr.mxu0 0.0
    %3900 = vmatpush1.msra.mxu0 %v3880
    %3901 = vmatprep.subr.mxu0 0.0
    %3902 = vmatpush1.msra.mxu0 0.0
    %3903 = vmatprep.subr.mxu0 0.0
    %3904 = vmatpush1.msra.mxu0 0.0
    %3905 = vmatprep.subr.mxu0 0.0
    %3906 = vmatpush1.msra.mxu0 0.0
    %3907 = vmatprep.subr.mxu0 0.0
    %3908 = vmatpush1.msra.mxu0 0.0
    %3909 = vmatprep.subr.mxu0 0.0
    %3910 = vmatpush1.msra.mxu0 0.0
    %3911 = vmatprep.subr.mxu0 0.0
    %3912 = vmatpush1.msra.mxu0 0.0
    %3913 = vmatprep.subr.mxu0 0.0
    %3914 = vmatpush1.msra.mxu0 0.0
    %3915 = vmatprep.subr.mxu0 0.0
    %3916 = vmatpush1.msra.mxu0 0.0
    %3917 = vmatprep.subr.mxu0 0.0
    %3918 = vmatpush1.msra.mxu0 0.0
    %3919 = vmatprep.subr.mxu0 0.0
    %3920 = vmatpush1.msra.mxu0 0.0
    %3921 = vmatprep.subr.mxu0 0.0
    %3922 = vmatpush1.msra.mxu0 0.0
    %3923 = vmatprep.subr.mxu0 0.0
    %3924 = vmatpush1.msra.mxu0 0.0
    %3925 = vmatprep.subr.mxu0 0.0
    %3926 = vmatpush1.msra.mxu0 0.0
    %3927 = vmatprep.subr.mxu0 0.0
    %3928 = vmatpush1.msra.mxu0 0.0
    %3929 = vmatprep.subr.mxu0 0.0
    %3930 = vmatpush1.msra.mxu0 0.0
    %3931 = vmatprep.subr.mxu0 0.0
    %3932 = vmatpush1.msra.mxu0 0.0
    %3933 = vmatprep.subr.mxu0 0.0
    %3934 = vmatpush1.msra.mxu0 0.0
    %3935 = vmatprep.subr.mxu0 0.0
    %3936 = vmatpush1.msra.mxu0 0.0
    %3937 = vmatprep.subr.mxu0 0.0
    %3938 = vmatpush1.msra.mxu0 0.0
    %3939 = vmatprep.subr.mxu0 0.0
    %3940 = vmatpush1.msra.mxu0 0.0
    %3941 = vmatprep.subr.mxu0 0.0
    %3942 = vmatpush1.msra.mxu0 0.0
    %3943 = vmatprep.subr.mxu0 0.0
    %3944 = vmatpush1.msra.mxu0 0.0
    %3945 = vmatprep.subr.mxu0 0.0
    %3946 = vmatpush1.msra.mxu0 0.0
    %3947 = vmatprep.subr.mxu0 0.0
    %3948 = vmatpush1.msra.mxu0 0.0
    %3949 = vmatprep.subr.mxu0 0.0
    %3950 = vmatpush1.msra.mxu0 0.0
    %3951 = vmatprep.subr.mxu0 0.0
    %3952 = vmatpush1.msra.mxu0 0.0
    %3953 = vmatprep.subr.mxu0 0.0
    %3954 = vmatpush1.msra.mxu0 0.0
    %3955 = vmatprep.subr.mxu0 0.0
    %3956 = vmatpush1.msra.mxu0 0.0
    %3957 = vmatprep.mubr.f32.mxu0 0.0
    %3958 = vmatmul.mubr.f32.gmra.mrb[0].mxu0 %v3882
    %v3959 = vpop.f32.mrb[0].mxu0
    %v3960 = vadd.f32 0.0, %v3959
    %v3961 = vpop.f32.mrb[0].mxu0
    %3962 = vmatprep.mubr.f32.mxu0 0.0
    %3963 = vmatmul.mubr.f32.gmra.mrb[0].mxu0 %v3885
    %v3964 = vpop.f32.mrb[0].mxu0
    %v3965 = vadd.f32 0.0, %v3964
    %v3966 = vpop.f32.mrb[0].mxu0
    %3967 = vmatprep.mubr.f32.mxu0 0.0
    %3968 = vmatmul.mubr.f32.gmra.mrb[0].mxu0 %v3888
    %v3969 = vpop.f32.mrb[0].mxu0
    %v3970 = vadd.f32 0.0, %v3969
    %v3971 = vpop.f32.mrb[0].mxu0
    %3972 = vmatprep.mubr.f32.mxu0 0.0
    %3973 = vmatmul.mubr.f32.gmra.mrb[0].mxu0 %v3891
    %v3974 = vpop.f32.mrb[0].mxu0
    %v3975 = vadd.f32 0.0, %v3974
    %v3976 = vpop.f32.mrb[0].mxu0
    %3977 = vdwg.mxu0
    %v3978 = vadd.f32 %v3868, %v3960
    %v3979 = vadd.f32 %v3869, %v3965
    %v3980 = vadd.f32 %v3870, %v3970
    %v3981 = vadd.f32 %v3871, %v3975
    %v3982 = vld [vmem:[#allocation2 + $0x9] sm:$0xff]
    %v3983 = vld [vmem:[#allocation2 + $0x11] sm:$0xff]
    %v3984 = vld [vmem:[%s1634 + $0x9] sm:$0xff]
    %v3985 = vld [vmem:[%s1634 + $0x11] sm:$0xff]
    %s3986 = scalar_lea.vmem %s5, 192
    %v3987 = vld [vmem:[%s3986] sm:$0xff]
    %v3988 = vld [vmem:[%s3986 + $0x8] sm:$0xff]
    %v3989 = vld [vmem:[%s3986 + $0x10] sm:$0xff]
    %v3990 = vld [vmem:[%s3986 + $0x18] sm:$0xff]
    %v3992 = vsel %vm1562, %v3982, 0
    %v3995 = vsel %vm1562, %v3983, 0
    %v3998 = vsel %vm1562, %v3984, 0
    %v4001 = vsel %vm1562, %v3985, 0
    %4003 = vmatprep.subr.mxu0 0.0
    %4004 = vmatpush1.msra.mxu0 %v3987
    %4005 = vmatprep.subr.mxu0 0.0
    %4006 = vmatpush1.msra.mxu0 %v3988
    %4007 = vmatprep.subr.mxu0 0.0
    %4008 = vmatpush1.msra.mxu0 %v3989
    %4009 = vmatprep.subr.mxu0 0.0
    %4010 = vmatpush1.msra.mxu0 %v3990
    %4011 = vmatprep.subr.mxu0 0.0
    %4012 = vmatpush1.msra.mxu0 0.0
    %4013 = vmatprep.subr.mxu0 0.0
    %4014 = vmatpush1.msra.mxu0 0.0
    %4015 = vmatprep.subr.mxu0 0.0
    %4016 = vmatpush1.msra.mxu0 0.0
    %4017 = vmatprep.subr.mxu0 0.0
    %4018 = vmatpush1.msra.mxu0 0.0
    %4019 = vmatprep.subr.mxu0 0.0
    %4020 = vmatpush1.msra.mxu0 0.0
    %4021 = vmatprep.subr.mxu0 0.0
    %4022 = vmatpush1.msra.mxu0 0.0
    %4023 = vmatprep.subr.mxu0 0.0
    %4024 = vmatpush1.msra.mxu0 0.0
    %4025 = vmatprep.subr.mxu0 0.0
    %4026 = vmatpush1.msra.mxu0 0.0
    %4027 = vmatprep.subr.mxu0 0.0
    %4028 = vmatpush1.msra.mxu0 0.0
    %4029 = vmatprep.subr.mxu0 0.0
    %4030 = vmatpush1.msra.mxu0 0.0
    %4031 = vmatprep.subr.mxu0 0.0
    %4032 = vmatpush1.msra.mxu0 0.0
    %4033 = vmatprep.subr.mxu0 0.0
    %4034 = vmatpush1.msra.mxu0 0.0
    %4035 = vmatprep.subr.mxu0 0.0
    %4036 = vmatpush1.msra.mxu0 0.0
    %4037 = vmatprep.subr.mxu0 0.0
    %4038 = vmatpush1.msra.mxu0 0.0
    %4039 = vmatprep.subr.mxu0 0.0
    %4040 = vmatpush1.msra.mxu0 0.0
    %4041 = vmatprep.subr.mxu0 0.0
    %4042 = vmatpush1.msra.mxu0 0.0
    %4043 = vmatprep.subr.mxu0 0.0
    %4044 = vmatpush1.msra.mxu0 0.0
    %4045 = vmatprep.subr.mxu0 0.0
    %4046 = vmatpush1.msra.mxu0 0.0
    %4047 = vmatprep.subr.mxu0 0.0
    %4048 = vmatpush1.msra.mxu0 0.0
    %4049 = vmatprep.subr.mxu0 0.0
    %4050 = vmatpush1.msra.mxu0 0.0
    %4051 = vmatprep.subr.mxu0 0.0
    %4052 = vmatpush1.msra.mxu0 0.0
    %4053 = vmatprep.subr.mxu0 0.0
    %4054 = vmatpush1.msra.mxu0 0.0
    %4055 = vmatprep.subr.mxu0 0.0
    %4056 = vmatpush1.msra.mxu0 0.0
    %4057 = vmatprep.subr.mxu0 0.0
    %4058 = vmatpush1.msra.mxu0 0.0
    %4059 = vmatprep.subr.mxu0 0.0
    %4060 = vmatpush1.msra.mxu0 0.0
    %4061 = vmatprep.subr.mxu0 0.0
    %4062 = vmatpush1.msra.mxu0 0.0
    %4063 = vmatprep.subr.mxu0 0.0
    %4064 = vmatpush1.msra.mxu0 0.0
    %4065 = vmatprep.subr.mxu0 0.0
    %4066 = vmatpush1.msra.mxu0 0.0
    %4067 = vmatprep.mubr.f32.mxu0 0.0
    %4068 = vmatmul.mubr.f32.gmra.mrb[0].mxu0 %v3992
    %v4069 = vpop.f32.mrb[0].mxu0
    %v4070 = vadd.f32 0.0, %v4069
    %v4071 = vpop.f32.mrb[0].mxu0
    %4072 = vmatprep.mubr.f32.mxu0 0.0
    %4073 = vmatmul.mubr.f32.gmra.mrb[0].mxu0 %v3995
    %v4074 = vpop.f32.mrb[0].mxu0
    %v4075 = vadd.f32 0.0, %v4074
    %v4076 = vpop.f32.mrb[0].mxu0
    %4077 = vmatprep.mubr.f32.mxu0 0.0
    %4078 = vmatmul.mubr.f32.gmra.mrb[0].mxu0 %v3998
    %v4079 = vpop.f32.mrb[0].mxu0
    %v4080 = vadd.f32 0.0, %v4079
    %v4081 = vpop.f32.mrb[0].mxu0
    %4082 = vmatprep.mubr.f32.mxu0 0.0
    %4083 = vmatmul.mubr.f32.gmra.mrb[0].mxu0 %v4001
    %v4084 = vpop.f32.mrb[0].mxu0
    %v4085 = vadd.f32 0.0, %v4084
    %v4086 = vpop.f32.mrb[0].mxu0
    %4087 = vdwg.mxu0
    %v4088 = vadd.f32 %v3978, %v4070
    %v4089 = vadd.f32 %v3979, %v4075
    %v4090 = vadd.f32 %v3980, %v4080
    %v4091 = vadd.f32 %v3981, %v4085
    %v4092 = vld [vmem:[#allocation2 + $0xa] sm:$0xff]
    %v4093 = vld [vmem:[#allocation2 + $0x12] sm:$0xff]
    %v4094 = vld [vmem:[%s1634 + $0xa] sm:$0xff]
    %v4095 = vld [vmem:[%s1634 + $0x12] sm:$0xff]
    %s4096 = scalar_lea.vmem %s5, 224
    %v4097 = vld [vmem:[%s4096] sm:$0xff]
    %v4098 = vld [vmem:[%s4096 + $0x8] sm:$0xff]
    %v4099 = vld [vmem:[%s4096 + $0x10] sm:$0xff]
    %v4100 = vld [vmem:[%s4096 + $0x18] sm:$0xff]
    %v4102 = vsel %vm1562, %v4092, 0
    %v4105 = vsel %vm1562, %v4093, 0
    %v4108 = vsel %vm1562, %v4094, 0
    %v4111 = vsel %vm1562, %v4095, 0
    %4113 = vmatprep.subr.mxu0 0.0
    %4114 = vmatpush1.msra.mxu0 %v4097
    %4115 = vmatprep.subr.mxu0 0.0
    %4116 = vmatpush1.msra.mxu0 %v4098
    %4117 = vmatprep.subr.mxu0 0.0
    %4118 = vmatpush1.msra.mxu0 %v4099
    %4119 = vmatprep.subr.mxu0 0.0
    %4120 = vmatpush1.msra.mxu0 %v4100
    %4121 = vmatprep.subr.mxu0 0.0
    %4122 = vmatpush1.msra.mxu0 0.0
    %4123 = vmatprep.subr.mxu0 0.0
    %4124 = vmatpush1.msra.mxu0 0.0
    %4125 = vmatprep.subr.mxu0 0.0
    %4126 = vmatpush1.msra.mxu0 0.0
    %4127 = vmatprep.subr.mxu0 0.0
    %4128 = vmatpush1.msra.mxu0 0.0
    %4129 = vmatprep.subr.mxu0 0.0
    %4130 = vmatpush1.msra.mxu0 0.0
    %4131 = vmatprep.subr.mxu0 0.0
    %4132 = vmatpush1.msra.mxu0 0.0
    %4133 = vmatprep.subr.mxu0 0.0
    %4134 = vmatpush1.msra.mxu0 0.0
    %4135 = vmatprep.subr.mxu0 0.0
    %4136 = vmatpush1.msra.mxu0 0.0
    %4137 = vmatprep.subr.mxu0 0.0
    %4138 = vmatpush1.msra.mxu0 0.0
    %4139 = vmatprep.subr.mxu0 0.0
    %4140 = vmatpush1.msra.mxu0 0.0
    %4141 = vmatprep.subr.mxu0 0.0
    %4142 = vmatpush1.msra.mxu0 0.0
    %4143 = vmatprep.subr.mxu0 0.0
    %4144 = vmatpush1.msra.mxu0 0.0
    %4145 = vmatprep.subr.mxu0 0.0
    %4146 = vmatpush1.msra.mxu0 0.0
    %4147 = vmatprep.subr.mxu0 0.0
    %4148 = vmatpush1.msra.mxu0 0.0
    %4149 = vmatprep.subr.mxu0 0.0
    %4150 = vmatpush1.msra.mxu0 0.0
    %4151 = vmatprep.subr.mxu0 0.0
    %4152 = vmatpush1.msra.mxu0 0.0
    %4153 = vmatprep.subr.mxu0 0.0
    %4154 = vmatpush1.msra.mxu0 0.0
    %4155 = vmatprep.subr.mxu0 0.0
    %4156 = vmatpush1.msra.mxu0 0.0
    %4157 = vmatprep.subr.mxu0 0.0
    %4158 = vmatpush1.msra.mxu0 0.0
    %4159 = vmatprep.subr.mxu0 0.0
    %4160 = vmatpush1.msra.mxu0 0.0
    %4161 = vmatprep.subr.mxu0 0.0
    %4162 = vmatpush1.msra.mxu0 0.0
    %4163 = vmatprep.subr.mxu0 0.0
    %4164 = vmatpush1.msra.mxu0 0.0
    %4165 = vmatprep.subr.mxu0 0.0
    %4166 = vmatpush1.msra.mxu0 0.0
    %4167 = vmatprep.subr.mxu0 0.0
    %4168 = vmatpush1.msra.mxu0 0.0
    %4169 = vmatprep.subr.mxu0 0.0
    %4170 = vmatpush1.msra.mxu0 0.0
    %4171 = vmatprep.subr.mxu0 0.0
    %4172 = vmatpush1.msra.mxu0 0.0
    %4173 = vmatprep.subr.mxu0 0.0
    %4174 = vmatpush1.msra.mxu0 0.0
    %4175 = vmatprep.subr.mxu0 0.0
    %4176 = vmatpush1.msra.mxu0 0.0
    %4177 = vmatprep.mubr.f32.mxu0 0.0
    %4178 = vmatmul.mubr.f32.gmra.mrb[0].mxu0 %v4102
    %v4179 = vpop.f32.mrb[0].mxu0
    %v4180 = vadd.f32 0.0, %v4179
    %v4181 = vpop.f32.mrb[0].mxu0
    %4182 = vmatprep.mubr.f32.mxu0 0.0
    %4183 = vmatmul.mubr.f32.gmra.mrb[0].mxu0 %v4105
    %v4184 = vpop.f32.mrb[0].mxu0
    %v4185 = vadd.f32 0.0, %v4184
    %v4186 = vpop.f32.mrb[0].mxu0
    %4187 = vmatprep.mubr.f32.mxu0 0.0
    %4188 = vmatmul.mubr.f32.gmra.mrb[0].mxu0 %v4108
    %v4189 = vpop.f32.mrb[0].mxu0
    %v4190 = vadd.f32 0.0, %v4189
    %v4191 = vpop.f32.mrb[0].mxu0
    %4192 = vmatprep.mubr.f32.mxu0 0.0
    %4193 = vmatmul.mubr.f32.gmra.mrb[0].mxu0 %v4111
    %v4194 = vpop.f32.mrb[0].mxu0
    %v4195 = vadd.f32 0.0, %v4194
    %v4196 = vpop.f32.mrb[0].mxu0
    %4197 = vdwg.mxu0
    %v4198 = vadd.f32 %v4088, %v4180
    %v4199 = vadd.f32 %v4089, %v4185
    %v4200 = vadd.f32 %v4090, %v4190
    %v4201 = vadd.f32 %v4091, %v4195
    %v4202 = vld [vmem:[#allocation2 + $0xb] sm:$0xff]
    %v4203 = vld [vmem:[#allocation2 + $0x13] sm:$0xff]
    %v4204 = vld [vmem:[%s1634 + $0xb] sm:$0xff]
    %v4205 = vld [vmem:[%s1634 + $0x13] sm:$0xff]
    %s4206 = scalar_lea.vmem %s5, 256
    %v4207 = vld [vmem:[%s4206] sm:$0xff]
    %v4208 = vld [vmem:[%s4206 + $0x8] sm:$0xff]
    %v4209 = vld [vmem:[%s4206 + $0x10] sm:$0xff]
    %v4210 = vld [vmem:[%s4206 + $0x18] sm:$0xff]
    %v4212 = vsel %vm1562, %v4202, 0
    %v4215 = vsel %vm1562, %v4203, 0
    %v4218 = vsel %vm1562, %v4204, 0
    %v4221 = vsel %vm1562, %v4205, 0
    %4223 = vmatprep.subr.mxu0 0.0
    %4224 = vmatpush1.msra.mxu0 %v4207
    %4225 = vmatprep.subr.mxu0 0.0
    %4226 = vmatpush1.msra.mxu0 %v4208
    %4227 = vmatprep.subr.mxu0 0.0
    %4228 = vmatpush1.msra.mxu0 %v4209
    %4229 = vmatprep.subr.mxu0 0.0
    %4230 = vmatpush1.msra.mxu0 %v4210
    %4231 = vmatprep.subr.mxu0 0.0
    %4232 = vmatpush1.msra.mxu0 0.0
    %4233 = vmatprep.subr.mxu0 0.0
    %4234 = vmatpush1.msra.mxu0 0.0
    %4235 = vmatprep.subr.mxu0 0.0
    %4236 = vmatpush1.msra.mxu0 0.0
    %4237 = vmatprep.subr.mxu0 0.0
    %4238 = vmatpush1.msra.mxu0 0.0
    %4239 = vmatprep.subr.mxu0 0.0
    %4240 = vmatpush1.msra.mxu0 0.0
    %4241 = vmatprep.subr.mxu0 0.0
    %4242 = vmatpush1.msra.mxu0 0.0
    %4243 = vmatprep.subr.mxu0 0.0
    %4244 = vmatpush1.msra.mxu0 0.0
    %4245 = vmatprep.subr.mxu0 0.0
    %4246 = vmatpush1.msra.mxu0 0.0
    %4247 = vmatprep.subr.mxu0 0.0
    %4248 = vmatpush1.msra.mxu0 0.0
    %4249 = vmatprep.subr.mxu0 0.0
    %4250 = vmatpush1.msra.mxu0 0.0
    %4251 = vmatprep.subr.mxu0 0.0
    %4252 = vmatpush1.msra.mxu0 0.0
    %4253 = vmatprep.subr.mxu0 0.0
    %4254 = vmatpush1.msra.mxu0 0.0
    %4255 = vmatprep.subr.mxu0 0.0
    %4256 = vmatpush1.msra.mxu0 0.0
    %4257 = vmatprep.subr.mxu0 0.0
    %4258 = vmatpush1.msra.mxu0 0.0
    %4259 = vmatprep.subr.mxu0 0.0
    %4260 = vmatpush1.msra.mxu0 0.0
    %4261 = vmatprep.subr.mxu0 0.0
    %4262 = vmatpush1.msra.mxu0 0.0
    %4263 = vmatprep.subr.mxu0 0.0
    %4264 = vmatpush1.msra.mxu0 0.0
    %4265 = vmatprep.subr.mxu0 0.0
    %4266 = vmatpush1.msra.mxu0 0.0
    %4267 = vmatprep.subr.mxu0 0.0
    %4268 = vmatpush1.msra.mxu0 0.0
    %4269 = vmatprep.subr.mxu0 0.0
    %4270 = vmatpush1.msra.mxu0 0.0
    %4271 = vmatprep.subr.mxu0 0.0
    %4272 = vmatpush1.msra.mxu0 0.0
    %4273 = vmatprep.subr.mxu0 0.0
    %4274 = vmatpush1.msra.mxu0 0.0
    %4275 = vmatprep.subr.mxu0 0.0
    %4276 = vmatpush1.msra.mxu0 0.0
    %4277 = vmatprep.subr.mxu0 0.0
    %4278 = vmatpush1.msra.mxu0 0.0
    %4279 = vmatprep.subr.mxu0 0.0
    %4280 = vmatpush1.msra.mxu0 0.0
    %4281 = vmatprep.subr.mxu0 0.0
    %4282 = vmatpush1.msra.mxu0 0.0
    %4283 = vmatprep.subr.mxu0 0.0
    %4284 = vmatpush1.msra.mxu0 0.0
    %4285 = vmatprep.subr.mxu0 0.0
    %4286 = vmatpush1.msra.mxu0 0.0
    %4287 = vmatprep.mubr.f32.mxu0 0.0
    %4288 = vmatmul.mubr.f32.gmra.mrb[0].mxu0 %v4212
    %v4289 = vpop.f32.mrb[0].mxu0
    %v4290 = vadd.f32 0.0, %v4289
    %v4291 = vpop.f32.mrb[0].mxu0
    %4292 = vmatprep.mubr.f32.mxu0 0.0
    %4293 = vmatmul.mubr.f32.gmra.mrb[0].mxu0 %v4215
    %v4294 = vpop.f32.mrb[0].mxu0
    %v4295 = vadd.f32 0.0, %v4294
    %v4296 = vpop.f32.mrb[0].mxu0
    %4297 = vmatprep.mubr.f32.mxu0 0.0
    %4298 = vmatmul.mubr.f32.gmra.mrb[0].mxu0 %v4218
    %v4299 = vpop.f32.mrb[0].mxu0
    %v4300 = vadd.f32 0.0, %v4299
    %v4301 = vpop.f32.mrb[0].mxu0
    %4302 = vmatprep.mubr.f32.mxu0 0.0
    %4303 = vmatmul.mubr.f32.gmra.mrb[0].mxu0 %v4221
    %v4304 = vpop.f32.mrb[0].mxu0
    %v4305 = vadd.f32 0.0, %v4304
    %v4306 = vpop.f32.mrb[0].mxu0
    %4307 = vdwg.mxu0
    %v4308 = vadd.f32 %v4198, %v4290
    %v4309 = vadd.f32 %v4199, %v4295
    %v4310 = vadd.f32 %v4200, %v4300
    %v4311 = vadd.f32 %v4201, %v4305
    %v4312 = vld [vmem:[#allocation2 + $0xc] sm:$0xff]
    %v4313 = vld [vmem:[#allocation2 + $0x14] sm:$0xff]
    %v4314 = vld [vmem:[%s1634 + $0xc] sm:$0xff]
    %v4315 = vld [vmem:[%s1634 + $0x14] sm:$0xff]
    %s4316 = scalar_lea.vmem %s5, 288
    %v4317 = vld [vmem:[%s4316] sm:$0xff]
    %v4318 = vld [vmem:[%s4316 + $0x8] sm:$0xff]
    %v4319 = vld [vmem:[%s4316 + $0x10] sm:$0xff]
    %v4320 = vld [vmem:[%s4316 + $0x18] sm:$0xff]
    %v4322 = vsel %vm1562, %v4312, 0
    %v4325 = vsel %vm1562, %v4313, 0
    %v4328 = vsel %vm1562, %v4314, 0
    %v4331 = vsel %vm1562, %v4315, 0
    %4333 = vmatprep.subr.mxu0 0.0
    %4334 = vmatpush1.msra.mxu0 %v4317
    %4335 = vmatprep.subr.mxu0 0.0
    %4336 = vmatpush1.msra.mxu0 %v4318
    %4337 = vmatprep.subr.mxu0 0.0
    %4338 = vmatpush1.msra.mxu0 %v4319
    %4339 = vmatprep.subr.mxu0 0.0
    %4340 = vmatpush1.msra.mxu0 %v4320
    %4341 = vmatprep.subr.mxu0 0.0
    %4342 = vmatpush1.msra.mxu0 0.0
    %4343 = vmatprep.subr.mxu0 0.0
    %4344 = vmatpush1.msra.mxu0 0.0
    %4345 = vmatprep.subr.mxu0 0.0
    %4346 = vmatpush1.msra.mxu0 0.0
    %4347 = vmatprep.subr.mxu0 0.0
    %4348 = vmatpush1.msra.mxu0 0.0
    %4349 = vmatprep.subr.mxu0 0.0
    %4350 = vmatpush1.msra.mxu0 0.0
    %4351 = vmatprep.subr.mxu0 0.0
    %4352 = vmatpush1.msra.mxu0 0.0
    %4353 = vmatprep.subr.mxu0 0.0
    %4354 = vmatpush1.msra.mxu0 0.0
    %4355 = vmatprep.subr.mxu0 0.0
    %4356 = vmatpush1.msra.mxu0 0.0
    %4357 = vmatprep.subr.mxu0 0.0
    %4358 = vmatpush1.msra.mxu0 0.0
    %4359 = vmatprep.subr.mxu0 0.0
    %4360 = vmatpush1.msra.mxu0 0.0
    %4361 = vmatprep.subr.mxu0 0.0
    %4362 = vmatpush1.msra.mxu0 0.0
    %4363 = vmatprep.subr.mxu0 0.0
    %4364 = vmatpush1.msra.mxu0 0.0
    %4365 = vmatprep.subr.mxu0 0.0
    %4366 = vmatpush1.msra.mxu0 0.0
    %4367 = vmatprep.subr.mxu0 0.0
    %4368 = vmatpush1.msra.mxu0 0.0
    %4369 = vmatprep.subr.mxu0 0.0
    %4370 = vmatpush1.msra.mxu0 0.0
    %4371 = vmatprep.subr.mxu0 0.0
    %4372 = vmatpush1.msra.mxu0 0.0
    %4373 = vmatprep.subr.mxu0 0.0
    %4374 = vmatpush1.msra.mxu0 0.0
    %4375 = vmatprep.subr.mxu0 0.0
    %4376 = vmatpush1.msra.mxu0 0.0
    %4377 = vmatprep.subr.mxu0 0.0
    %4378 = vmatpush1.msra.mxu0 0.0
    %4379 = vmatprep.subr.mxu0 0.0
    %4380 = vmatpush1.msra.mxu0 0.0
    %4381 = vmatprep.subr.mxu0 0.0
    %4382 = vmatpush1.msra.mxu0 0.0
    %4383 = vmatprep.subr.mxu0 0.0
    %4384 = vmatpush1.msra.mxu0 0.0
    %4385 = vmatprep.subr.mxu0 0.0
    %4386 = vmatpush1.msra.mxu0 0.0
    %4387 = vmatprep.subr.mxu0 0.0
    %4388 = vmatpush1.msra.mxu0 0.0
    %4389 = vmatprep.subr.mxu0 0.0
    %4390 = vmatpush1.msra.mxu0 0.0
    %4391 = vmatprep.subr.mxu0 0.0
    %4392 = vmatpush1.msra.mxu0 0.0
    %4393 = vmatprep.subr.mxu0 0.0
    %4394 = vmatpush1.msra.mxu0 0.0
    %4395 = vmatprep.subr.mxu0 0.0
    %4396 = vmatpush1.msra.mxu0 0.0
    %4397 = vmatprep.mubr.f32.mxu0 0.0
    %4398 = vmatmul.mubr.f32.gmra.mrb[0].mxu0 %v4322
    %v4399 = vpop.f32.mrb[0].mxu0
    %v4400 = vadd.f32 0.0, %v4399
    %v4401 = vpop.f32.mrb[0].mxu0
    %4402 = vmatprep.mubr.f32.mxu0 0.0
    %4403 = vmatmul.mubr.f32.gmra.mrb[0].mxu0 %v4325
    %v4404 = vpop.f32.mrb[0].mxu0
    %v4405 = vadd.f32 0.0, %v4404
    %v4406 = vpop.f32.mrb[0].mxu0
    %4407 = vmatprep.mubr.f32.mxu0 0.0
    %4408 = vmatmul.mubr.f32.gmra.mrb[0].mxu0 %v4328
    %v4409 = vpop.f32.mrb[0].mxu0
    %v4410 = vadd.f32 0.0, %v4409
    %v4411 = vpop.f32.mrb[0].mxu0
    %4412 = vmatprep.mubr.f32.mxu0 0.0
    %4413 = vmatmul.mubr.f32.gmra.mrb[0].mxu0 %v4331
    %v4414 = vpop.f32.mrb[0].mxu0
    %v4415 = vadd.f32 0.0, %v4414
    %v4416 = vpop.f32.mrb[0].mxu0
    %4417 = vdwg.mxu0
    %v4418 = vadd.f32 %v4308, %v4400
    %v4419 = vadd.f32 %v4309, %v4405
    %v4420 = vadd.f32 %v4310, %v4410
    %v4421 = vadd.f32 %v4311, %v4415
    %v4422 = vld [vmem:[#allocation2 + $0xd] sm:$0xff]
    %v4423 = vld [vmem:[#allocation2 + $0x15] sm:$0xff]
    %v4424 = vld [vmem:[%s1634 + $0xd] sm:$0xff]
    %v4425 = vld [vmem:[%s1634 + $0x15] sm:$0xff]
    %s4426 = scalar_lea.vmem %s5, 320
    %v4427 = vld [vmem:[%s4426] sm:$0xff]
    %v4428 = vld [vmem:[%s4426 + $0x8] sm:$0xff]
    %v4429 = vld [vmem:[%s4426 + $0x10] sm:$0xff]
    %v4430 = vld [vmem:[%s4426 + $0x18] sm:$0xff]
    %v4432 = vsel %vm1562, %v4422, 0
    %v4435 = vsel %vm1562, %v4423, 0
    %v4438 = vsel %vm1562, %v4424, 0
    %v4441 = vsel %vm1562, %v4425, 0
    %4443 = vmatprep.subr.mxu0 0.0
    %4444 = vmatpush1.msra.mxu0 %v4427
    %4445 = vmatprep.subr.mxu0 0.0
    %4446 = vmatpush1.msra.mxu0 %v4428
    %4447 = vmatprep.subr.mxu0 0.0
    %4448 = vmatpush1.msra.mxu0 %v4429
    %4449 = vmatprep.subr.mxu0 0.0
    %4450 = vmatpush1.msra.mxu0 %v4430
    %4451 = vmatprep.subr.mxu0 0.0
    %4452 = vmatpush1.msra.mxu0 0.0
    %4453 = vmatprep.subr.mxu0 0.0
    %4454 = vmatpush1.msra.mxu0 0.0
    %4455 = vmatprep.subr.mxu0 0.0
    %4456 = vmatpush1.msra.mxu0 0.0
    %4457 = vmatprep.subr.mxu0 0.0
    %4458 = vmatpush1.msra.mxu0 0.0
    %4459 = vmatprep.subr.mxu0 0.0
    %4460 = vmatpush1.msra.mxu0 0.0
    %4461 = vmatprep.subr.mxu0 0.0
    %4462 = vmatpush1.msra.mxu0 0.0
    %4463 = vmatprep.subr.mxu0 0.0
    %4464 = vmatpush1.msra.mxu0 0.0
    %4465 = vmatprep.subr.mxu0 0.0
    %4466 = vmatpush1.msra.mxu0 0.0
    %4467 = vmatprep.subr.mxu0 0.0
    %4468 = vmatpush1.msra.mxu0 0.0
    %4469 = vmatprep.subr.mxu0 0.0
    %4470 = vmatpush1.msra.mxu0 0.0
    %4471 = vmatprep.subr.mxu0 0.0
    %4472 = vmatpush1.msra.mxu0 0.0
    %4473 = vmatprep.subr.mxu0 0.0
    %4474 = vmatpush1.msra.mxu0 0.0
    %4475 = vmatprep.subr.mxu0 0.0
    %4476 = vmatpush1.msra.mxu0 0.0
    %4477 = vmatprep.subr.mxu0 0.0
    %4478 = vmatpush1.msra.mxu0 0.0
    %4479 = vmatprep.subr.mxu0 0.0
    %4480 = vmatpush1.msra.mxu0 0.0
    %4481 = vmatprep.subr.mxu0 0.0
    %4482 = vmatpush1.msra.mxu0 0.0
    %4483 = vmatprep.subr.mxu0 0.0
    %4484 = vmatpush1.msra.mxu0 0.0
    %4485 = vmatprep.subr.mxu0 0.0
    %4486 = vmatpush1.msra.mxu0 0.0
    %4487 = vmatprep.subr.mxu0 0.0
    %4488 = vmatpush1.msra.mxu0 0.0
    %4489 = vmatprep.subr.mxu0 0.0
    %4490 = vmatpush1.msra.mxu0 0.0
    %4491 = vmatprep.subr.mxu0 0.0
    %4492 = vmatpush1.msra.mxu0 0.0
    %4493 = vmatprep.subr.mxu0 0.0
    %4494 = vmatpush1.msra.mxu0 0.0
    %4495 = vmatprep.subr.mxu0 0.0
    %4496 = vmatpush1.msra.mxu0 0.0
    %4497 = vmatprep.subr.mxu0 0.0
    %4498 = vmatpush1.msra.mxu0 0.0
    %4499 = vmatprep.subr.mxu0 0.0
    %4500 = vmatpush1.msra.mxu0 0.0
    %4501 = vmatprep.subr.mxu0 0.0
    %4502 = vmatpush1.msra.mxu0 0.0
    %4503 = vmatprep.subr.mxu0 0.0
    %4504 = vmatpush1.msra.mxu0 0.0
    %4505 = vmatprep.subr.mxu0 0.0
    %4506 = vmatpush1.msra.mxu0 0.0
    %4507 = vmatprep.mubr.f32.mxu0 0.0
    %4508 = vmatmul.mubr.f32.gmra.mrb[0].mxu0 %v4432
    %v4509 = vpop.f32.mrb[0].mxu0
    %v4510 = vadd.f32 0.0, %v4509
    %v4511 = vpop.f32.mrb[0].mxu0
    %4512 = vmatprep.mubr.f32.mxu0 0.0
    %4513 = vmatmul.mubr.f32.gmra.mrb[0].mxu0 %v4435
    %v4514 = vpop.f32.mrb[0].mxu0
    %v4515 = vadd.f32 0.0, %v4514
    %v4516 = vpop.f32.mrb[0].mxu0
    %4517 = vmatprep.mubr.f32.mxu0 0.0
    %4518 = vmatmul.mubr.f32.gmra.mrb[0].mxu0 %v4438
    %v4519 = vpop.f32.mrb[0].mxu0
    %v4520 = vadd.f32 0.0, %v4519
    %v4521 = vpop.f32.mrb[0].mxu0
    %4522 = vmatprep.mubr.f32.mxu0 0.0
    %4523 = vmatmul.mubr.f32.gmra.mrb[0].mxu0 %v4441
    %v4524 = vpop.f32.mrb[0].mxu0
    %v4525 = vadd.f32 0.0, %v4524
    %v4526 = vpop.f32.mrb[0].mxu0
    %4527 = vdwg.mxu0
    %v4528 = vadd.f32 %v4418, %v4510
    %v4529 = vadd.f32 %v4419, %v4515
    %v4530 = vadd.f32 %v4420, %v4520
    %v4531 = vadd.f32 %v4421, %v4525
    %v4532 = vld [vmem:[%s6] sm:$0x1]
    %v4534 = vlaneseq
    %v4535 = vshrl.u32 %v4534, 7
    %v4536 = vsub.s32 0, %v4535
    %v4537 = vrot.slane %v4532, %v4536
    %v4539 = vadd.f32 %v4528, %v4537
    %v4540 = vadd.f32 %v4529, %v4537
    %v4541 = vadd.f32 %v4530, %v4537
    %v4542 = vadd.f32 %v4531, %v4537
    %vm4543 = vcmask 64512
    %v4544 = vsel %vm4543, %v4539, 0.0
    %v4545 = vsel %vm4543, %v4540, 0.0
    %v4546 = vadd.f32 %v4544, %v4545
    %v4547 = vrot.slane %v4546, 4
    %v4548 = vadd.f32 %v4546, %v4547
    %v4549 = vrot.slane %v4548, 2
    %v4550 = vadd.f32 %v4548, %v4549
    %v4551 = vrot.slane %v4550, 1
    %v4552 = vadd.f32 %v4550, %v4551
    %v4553 = vrcp.pop 16.0
    %v4554 = vmul.f32 %v4552, %v4553
    %v4555 = vsel %vm4543, %v4541, 0.0
    %v4556 = vsel %vm4543, %v4542, 0.0
    %v4557 = vadd.f32 %v4555, %v4556
    %v4558 = vrot.slane %v4557, 4
    %v4559 = vadd.f32 %v4557, %v4558
    %v4560 = vrot.slane %v4559, 2
    %v4561 = vadd.f32 %v4559, %v4560
    %v4562 = vrot.slane %v4561, 1
    %v4563 = vadd.f32 %v4561, %v4562
    %v4564 = vmul.f32 %v4563, %v4553
    %vm4565 = vcmask 1040384
    %v4566 = vsel %vm4565, %v4554, %v4564
    %vm4567 = vcmask 58368
    %4568 = vst.msk [vmem:[#allocation4] sm:$0x3] %vm4567, %v4566
    // Predicated region
    $region30: #{conv_model_forward.1} parent=1 // pred_check
      _
    $region31: #{conv_model_forward.1} parent=1 // pred_check_branch
      %4570 = sbr.rel (0) target = $region33
    $region32: #{conv_model_forward.1} parent=1 // pred_region
      %s4572 = ssub.s32 32, 32
      %4573 = vsyncadd [#allocation5], %s4572
      %s4575 = sshll.u32 [#allocation4], 4
      %s4576 = int_to_ptr.vmem [resolvable:$true] %s4575
      %4578 = dma.vmem_to_hbm [thread:$0]  %s4576, 32, %s7, [#allocation5]
    $region33: #{conv_model_forward.1} parent=1 // pred_fallthru
      _
    // Predicated region
    $region34: #{conv_model_forward.1} parent=1 // pred_check
      _
    $region35: #{conv_model_forward.1} parent=1 // pred_check_branch
      %4580 = sbr.rel (0) target = $region37
    $region36: #{conv_model_forward.1} parent=1 // pred_region
      %4581 = dma.done [#allocation5], 32
    $region37: #{conv_model_forward.1} parent=1 // pred_fallthru
      _
    %4582 = vsyncpa [#allocation5], 1

</llo_original>
